<compile_context>
chip_gen: v7x
topology: tpu7x:2x2x1
jax: 0.10.0
libtpu: 0.0.40
codegen_flags: <defaults>
</compile_context>

<pallas_src>
import functools

import jax
import jax.numpy as jnp
from jax.experimental import pallas as pl
from jax.experimental.pallas import tpu as pltpu

HIDDEN = 1024
OUT = 784  # 6*128 + 16 -> only the last vreg per row group needs a masked store


def _round_up(x, m):
    return (x + m - 1) // m * m


def fc_decoder_kernel(z_ref, w3_ref, b3_ref, w4_ref, b4_ref, o_ref, h3_ref, *,
                      act_dtype):
    # fc3: bf16 operands, f32 accumulate on the MXU; bias + ReLU in f32.
    h3 = jnp.dot(z_ref[...], w3_ref[...], preferred_element_type=jnp.float32)
    h3 = jnp.maximum(h3 + b3_ref[...], 0.0)
    # Intermediate staged in VMEM scratch as bf16 (it is the next matmul operand).
    h3_ref[...] = h3.astype(h3_ref.dtype)
    # fc4: bf16 operands, f32 accumulate.
    h4 = jnp.dot(h3_ref[...], w4_ref[...], preferred_element_type=jnp.float32)
    h4 = (h4 + b4_ref[...]).astype(act_dtype)
    # sigmoid(x) = 0.5 * (tanh(0.5 x) + 1): single EUP op per element.
    o_ref[...] = (0.5 * (jnp.tanh(0.5 * h4) + 1.0)).astype(o_ref.dtype)


def prepare_params(w3, b3, w4, b4):
    """One-time weight prep (hoist out of the per-call path): bf16 matmul operands,
    f32 biases. TODO(synk): on v7x, fp8(e4m3) weight storage with per-channel scales
    would halve weight DMA bytes again."""
    return (
        w3.astype(jnp.bfloat16),
        b3.astype(jnp.float32),
        w4.astype(jnp.bfloat16),
        b4.astype(jnp.float32),
    )


def _chip_defaults():
    """Pick epilogue dtype / tile size / core count from the attached TPU."""
    kind = jax.devices()[0].device_kind.lower()
    older = any(t in kind for t in ("v2", "v3", "v4", "v5"))  # no bf16 VPU/EUP
    act_dtype = jnp.float32 if older else jnp.bfloat16
    max_tb = 512 if older else 1024
    two_cores = "v7" in kind
    return act_dtype, max_tb, two_cores


def fc_decoder(z, w3_b, b3, w4_b, b4, *, out_dtype=jnp.bfloat16):
    """z: (B, E) f32; w3_b: (E, 1024) bf16; b3: (1, 1024) f32;
    w4_b: (1024, 784) bf16; b4: (1, 784) f32. Returns (B, 784) out_dtype."""
    B, E = z.shape
    act_dtype, max_tb, two_cores = _chip_defaults()

    # --- batch tiling: pad B to a multiple of 8, tile with TB rows ---
    b8 = _round_up(max(B, 1), 8)
    TB = min(max_tb, b8)
    B_pad = _round_up(b8, TB)
    # v7x has 2 TensorCores: make sure the "parallel" axis has >= 2 tiles.
    if two_cores and (B_pad // TB) < 2 and B_pad >= 16:
        TB = _round_up(B_pad // 2, 8)
        B_pad = _round_up(B_pad, TB)

    # Activations: bf16 matmul operand; pad batch rows only if needed.
    z_b = z.astype(jnp.bfloat16)
    if B_pad != B:
        z_b = jnp.zeros((B_pad, E), jnp.bfloat16).at[:B, :].set(z_b)

    grid = (B_pad // TB,)
    kernel = functools.partial(fc_decoder_kernel, act_dtype=act_dtype)

    out = pl.pallas_call(
        kernel,
        out_shape=jax.ShapeDtypeStruct((B_pad, OUT), out_dtype),
        grid_spec=pltpu.PrefetchScalarGridSpec(
            num_scalar_prefetch=0,
            grid=grid,
            in_specs=[
                # activations tile over the batch grid axis
                pl.BlockSpec((TB, E), lambda i: (i, 0)),
                # weights / biases: constant block index -> DMA'd once, VMEM-resident
                # (Mosaic recognizes the revisited block; pl.Buffered(1) would also
                #  guarantee single-buffering, but is not required for correctness.)
                pl.BlockSpec((E, HIDDEN), lambda i: (0, 0)),
                pl.BlockSpec((1, HIDDEN), lambda i: (0, 0)),
                pl.BlockSpec((HIDDEN, OUT), lambda i: (0, 0)),
                pl.BlockSpec((1, OUT), lambda i: (0, 0)),
            ],
            out_specs=pl.BlockSpec((TB, OUT), lambda i: (i, 0)),
            scratch_shapes=[pltpu.VMEM((TB, HIDDEN), jnp.bfloat16)],
        ),
        compiler_params=pltpu.CompilerParams(
            # batch tiles are independent -> shard across TensorCores on v7x
            dimension_semantics=("parallel",),
        ),
    )(z_b, w3_b, b3, w4_b, b4)

    if B_pad != B:
        out = out[:B]
    return out


def init_params(key, embedding_size):
    """Deterministic init mimicking PyTorch Linear's uniform(-1/sqrt(fan_in), +)."""
    k3w, k3b, k4w, k4b = jax.random.split(key, 4)
    lim3 = 1.0 / jnp.sqrt(embedding_size)
    lim4 = 1.0 / jnp.sqrt(HIDDEN)
    w3 = jax.random.uniform(k3w, (embedding_size, HIDDEN), jnp.float32, -lim3, lim3)
    b3 = jax.random.uniform(k3b, (1, HIDDEN), jnp.float32, -lim3, lim3)
    w4 = jax.random.uniform(k4w, (HIDDEN, OUT), jnp.float32, -lim4, lim4)
    b4 = jax.random.uniform(k4b, (1, OUT), jnp.float32, -lim4, lim4)
    return w3, b3, w4, b4


if __name__ == "__main__":
    embedding_size = 32
    batch = 8

    key = jax.random.PRNGKey(0)
    kz, kp = jax.random.split(key)
    z = jax.random.normal(kz, (batch, embedding_size), jnp.float32)
    w3, b3, w4, b4 = init_params(kp, embedding_size)

    # One-time weight prep (bf16 casts) -- hoisted out of the forward call.
    w3_b, b3_p, w4_b, b4_p = prepare_params(w3, b3, w4, b4)
    jax.block_until_ready((w3_b, w4_b))

    out = fc_decoder(z, w3_b, b3_p, w4_b, b4_p)
    jax.block_until_ready(out)

    # Reference check in plain JAX (f32, same math as the PyTorch forward).
    # Tolerance covers bf16 matmul operands, bf16 epilogue/output quantization.
    ref = jax.nn.sigmoid(jnp.maximum(z @ w3 + b3, 0.0) @ w4 + b4)
    assert out.shape == (batch, OUT)
    max_err = jnp.max(jnp.abs(out.astype(jnp.float32) - ref))
    assert max_err < 2e-2, float(max_err)

    print("KERNEL_OK")
</pallas_src>

<mosaic_0001>
module attributes {stable_mosaic.version = 11 : i64} {
  func.func @fc_decoder_kernel(%arg0: i32, %arg1: memref<8x32xbf16, #tpu.memory_space<vmem>>, %arg2: memref<32x1024xbf16, #tpu.memory_space<vmem>>, %arg3: memref<1x1024xf32, #tpu.memory_space<vmem>>, %arg4: memref<1024x784xbf16, #tpu.memory_space<vmem>>, %arg5: memref<1x784xf32, #tpu.memory_space<vmem>>, %arg6: memref<8x784xbf16, #tpu.memory_space<vmem>>, %arg7: memref<8x1024xbf16, #tpu.memory_space<vmem>>) attributes {dimension_semantics = [#tpu.dimension_semantics<parallel>], iteration_bounds = array<i64: 1>, scalar_prefetch = 0 : i64, scratch_operands = 1 : i64, tpu.core_type = #tpu.core_type<tc>, window_params = [{transform_indices = @transform_0, window_bounds = array<i64: 8, 32>}, {pipeline_mode = #tpu.pipeline_mode<synchronous>, transform_indices = @transform_1, window_bounds = array<i64: 32, 1024>}, {pipeline_mode = #tpu.pipeline_mode<synchronous>, transform_indices = @transform_2, window_bounds = array<i64: 1, 1024>}, {pipeline_mode = #tpu.pipeline_mode<synchronous>, transform_indices = @transform_3, window_bounds = array<i64: 1024, 784>}, {pipeline_mode = #tpu.pipeline_mode<synchronous>, transform_indices = @transform_4, window_bounds = array<i64: 1, 784>}, {transform_indices = @transform_5, window_bounds = array<i64: 8, 784>}]} {
    %c0 = arith.constant 0 : index
    %c0_0 = arith.constant 0 : index
    %0 = vector.load %arg1[%c0, %c0_0] : memref<8x32xbf16, #tpu.memory_space<vmem>>, vector<8x32xbf16>
    %c0_1 = arith.constant 0 : index
    %c0_2 = arith.constant 0 : index
    %1 = vector.load %arg2[%c0_1, %c0_2] : memref<32x1024xbf16, #tpu.memory_space<vmem>>, vector<32x1024xbf16>
    %cst = arith.constant dense<0.000000e+00> : vector<8x1024xf32>
    %2 = tpu.matmul %0, %1, %cst {dimension_numbers = #tpu.dot_dimension_numbers<[1], [0], [0], [1], [0, 0, 1, 1], [], []>} : vector<8x32xbf16>, vector<32x1024xbf16>, vector<8x1024xf32> -> vector<8x1024xf32>
    %c0_3 = arith.constant 0 : index
    %c0_4 = arith.constant 0 : index
    %3 = vector.load %arg3[%c0_3, %c0_4] : memref<1x1024xf32, #tpu.memory_space<vmem>>, vector<1x1024xf32>
    %4 = vector.broadcast %3 : vector<1x1024xf32> to vector<8x1024xf32>
    %5 = arith.addf %2, %4 : vector<8x1024xf32>
    %cst_5 = arith.constant 0.000000e+00 : f32
    %6 = vector.broadcast %cst_5 : f32 to vector<8x1024xf32>
    %7 = arith.maximumf %5, %6 : vector<8x1024xf32>
    %8 = arith.truncf %7 : vector<8x1024xf32> to vector<8x1024xbf16>
    %c0_6 = arith.constant 0 : index
    %c0_7 = arith.constant 0 : index
    %9 = vector.load %arg7[%c0_6, %c0_7] : memref<8x1024xbf16, #tpu.memory_space<vmem>>, vector<8x1024xbf16>
    tpu.vector_store %arg7[%c0_6, %c0_7], %8 {strides = array<i32>} : memref<8x1024xbf16, #tpu.memory_space<vmem>>, vector<8x1024xbf16>,
    %c0_8 = arith.constant 0 : index
    %c0_9 = arith.constant 0 : index
    %10 = vector.load %arg7[%c0_8, %c0_9] : memref<8x1024xbf16, #tpu.memory_space<vmem>>, vector<8x1024xbf16>
    %c0_10 = arith.constant 0 : index
    %c0_11 = arith.constant 0 : index
    %11 = vector.load %arg4[%c0_10, %c0_11] : memref<1024x784xbf16, #tpu.memory_space<vmem>>, vector<1024x784xbf16>
    %cst_12 = arith.constant dense<0.000000e+00> : vector<8x784xf32>
    %12 = tpu.matmul %10, %11, %cst_12 {dimension_numbers = #tpu.dot_dimension_numbers<[1], [0], [0], [1], [0, 0, 1, 1], [], []>} : vector<8x1024xbf16>, vector<1024x784xbf16>, vector<8x784xf32> -> vector<8x784xf32>
    %c0_13 = arith.constant 0 : index
    %c0_14 = arith.constant 0 : index
    %13 = vector.load %arg5[%c0_13, %c0_14] : memref<1x784xf32, #tpu.memory_space<vmem>>, vector<1x784xf32>
    %14 = vector.broadcast %13 : vector<1x784xf32> to vector<8x784xf32>
    %15 = arith.addf %12, %14 : vector<8x784xf32>
    %16 = arith.truncf %15 : vector<8x784xf32> to vector<8x784xbf16>
    %cst_15 = arith.constant 5.000000e-01 : bf16
    %17 = vector.broadcast %cst_15 : bf16 to vector<8x784xbf16>
    %18 = arith.mulf %17, %16 : vector<8x784xbf16>
    %19 = math.tanh %18 : vector<8x784xbf16>
    %cst_16 = arith.constant 1.000000e+00 : bf16
    %20 = vector.broadcast %cst_16 : bf16 to vector<8x784xbf16>
    %21 = arith.addf %19, %20 : vector<8x784xbf16>
    %cst_17 = arith.constant 5.000000e-01 : bf16
    %22 = vector.broadcast %cst_17 : bf16 to vector<8x784xbf16>
    %23 = arith.mulf %22, %21 : vector<8x784xbf16>
    %c0_18 = arith.constant 0 : index
    %c0_19 = arith.constant 0 : index
    %24 = vector.load %arg6[%c0_18, %c0_19] : memref<8x784xbf16, #tpu.memory_space<vmem>>, vector<8x784xbf16>
    tpu.vector_store %arg6[%c0_18, %c0_19], %23 {strides = array<i32>} : memref<8x784xbf16, #tpu.memory_space<vmem>>, vector<8x784xbf16>,
    return
  }
  func.func @transform_0(%arg0: i32) -> (i32, i32) {
    %c0_i32 = arith.constant 0 : i32
    %c0_i32_0 = arith.constant 0 : i32
    return %arg0, %c0_i32 : i32, i32
  }
  func.func @transform_1(%arg0: i32) -> (i32, i32) {
    %c0_i32 = arith.constant 0 : i32
    %c0_i32_0 = arith.constant 0 : i32
    %c0_i32_1 = arith.constant 0 : i32
    return %c0_i32, %c0_i32_0 : i32, i32
  }
  func.func @transform_2(%arg0: i32) -> (i32, i32) {
    %c0_i32 = arith.constant 0 : i32
    %c0_i32_0 = arith.constant 0 : i32
    %c0_i32_1 = arith.constant 0 : i32
    return %c0_i32, %c0_i32_0 : i32, i32
  }
  func.func @transform_3(%arg0: i32) -> (i32, i32) {
    %c0_i32 = arith.constant 0 : i32
    %c0_i32_0 = arith.constant 0 : i32
    %c0_i32_1 = arith.constant 0 : i32
    return %c0_i32, %c0_i32_0 : i32, i32
  }
  func.func @transform_4(%arg0: i32) -> (i32, i32) {
    %c0_i32 = arith.constant 0 : i32
    %c0_i32_0 = arith.constant 0 : i32
    %c0_i32_1 = arith.constant 0 : i32
    return %c0_i32, %c0_i32_0 : i32, i32
  }
  func.func @transform_5(%arg0: i32) -> (i32, i32) {
    %c0_i32 = arith.constant 0 : i32
    %c0_i32_0 = arith.constant 0 : i32
    return %arg0, %c0_i32 : i32, i32
  }
}

</mosaic_0001>

<llo_original>
// kernel: tpu_custom_call.1
$region0: #{tpu_custom_call.1}
  #allocation0 [shape = 'u32[]', space=smem, size = 0x4, offset = 0x4, fixed_abs, tag = 'smem constant byte address 0x4 - core index']
  #allocation1 [shape = 'u32[144,128]{1,0:T(1,128)}', space=vmem, size = 0x12000, scoped, tag = 'internal scratch']
  #allocation2 [shape = 'bf16[8,1024]{1,0:T(8,128)(2,1)}', space=vmem, size = 0x4000, scoped, tag = 'scratch operand']
  %s0 = inlined_call_operand.vmem [shape: bf16[8,32], index: 0, kind: input, shape index: {}]
  %s1 = inlined_call_operand.vmem [shape: bf16[32,1024], index: 1, kind: input, shape index: {}]
  %s2 = inlined_call_operand.vmem [shape: f32[1,1024], index: 2, kind: input, shape index: {}]
  %s3 = inlined_call_operand.vmem [shape: bf16[1024,784], index: 3, kind: input, shape index: {}]
  %s4 = inlined_call_operand.vmem [shape: f32[1,784], index: 4, kind: input, shape index: {}]
  %s5 = inlined_call_operand.hbm [shape: bf16[8,784], index: 5, kind: output, shape index: {}]
  %s6 = sld [smem:[#allocation0]]
  $region30: #{tpu_custom_call.1} parent=0
    _
  %s8 = ssub.s32 1, %s6
  %s9 = scalar_select 0, %s8, %s6
  $region1: #{tpu_custom_call.1} parent=0
    #allocation3 [shape = 'u8[14336]{0}', space=vmem, size = 0x3800, scoped, tag = 'output window, operand 0, single buffered']
    #allocation4 [shape = 's32[1]{0}', space=sflag, size = 0x4, scoped, tag = 'scoped memory for tpu_custom_call.1']
    %10 = vsyncpa [#allocation4], 0
    // Predicated region
    $region2: #{tpu_custom_call.1} parent=1 // pred_check
      _
    $region3: #{tpu_custom_call.1} parent=1 // pred_check_branch
      %12 = sbr.rel (0) target = $region5
    $region4: #{tpu_custom_call.1} parent=1 // pred_region
      _
    $region5: #{tpu_custom_call.1} parent=1 // pred_fallthru
      _
    // Predicated region
    $region6: #{tpu_custom_call.1} parent=1 // pred_check
      _
    $region7: #{tpu_custom_call.1} parent=1 // pred_check_branch
      %14 = sbr.rel (0) target = $region9
    $region8: #{tpu_custom_call.1} parent=1 // pred_region
      _
    $region9: #{tpu_custom_call.1} parent=1 // pred_fallthru
      _
    // Predicated region
    $region10: #{tpu_custom_call.1} parent=1 // pred_check
      _
    $region11: #{tpu_custom_call.1} parent=1 // pred_check_branch
      %16 = sbr.rel (0) target = $region13
    $region12: #{tpu_custom_call.1} parent=1 // pred_region
      _
    $region13: #{tpu_custom_call.1} parent=1 // pred_fallthru
      _
    // Predicated region
    $region14: #{tpu_custom_call.1} parent=1 // pred_check
      _
    $region15: #{tpu_custom_call.1} parent=1 // pred_check_branch
      %18 = sbr.rel (0) target = $region17
    $region16: #{tpu_custom_call.1} parent=1 // pred_region
      _
    $region17: #{tpu_custom_call.1} parent=1 // pred_fallthru
      _
    // Predicated region
    $region18: #{tpu_custom_call.1} parent=1 // pred_check
      _
    $region19: #{tpu_custom_call.1} parent=1 // pred_check_branch
      %20 = sbr.rel (0) target = $region21
    $region20: #{tpu_custom_call.1} parent=1 // pred_region
      _
    $region21: #{tpu_custom_call.1} parent=1 // pred_fallthru
      _
    %v24 = vld [vmem:[%s0] sm:$0xf]
    %v25 = vld [vmem:[%s1] sm:$0xff]
    %v26 = vld [vmem:[%s1 + $0x8] sm:$0xff]
    %v27 = vld [vmem:[%s1 + $0x10] sm:$0xff]
    %v28 = vld [vmem:[%s1 + $0x18] sm:$0xff]
    %v29 = vld [vmem:[%s1 + $0x20] sm:$0xff]
    %v30 = vld [vmem:[%s1 + $0x28] sm:$0xff]
    %v31 = vld [vmem:[%s1 + $0x30] sm:$0xff]
    %v32 = vld [vmem:[%s1 + $0x38] sm:$0xff]
    %v33 = vld [vmem:[%s1 + $0x40] sm:$0xff]
    %v34 = vld [vmem:[%s1 + $0x48] sm:$0xff]
    %v35 = vld [vmem:[%s1 + $0x50] sm:$0xff]
    %v36 = vld [vmem:[%s1 + $0x58] sm:$0xff]
    %v37 = vld [vmem:[%s1 + $0x60] sm:$0xff]
    %v38 = vld [vmem:[%s1 + $0x68] sm:$0xff]
    %v39 = vld [vmem:[%s1 + $0x70] sm:$0xff]
    %v40 = vld [vmem:[%s1 + $0x78] sm:$0xff]
    %v41 = vld [vmem:[%s2] sm:$0xff]
    %v43 = vlaneseq
    %v44 = vshrl.u32 %v43, 7
    %v45 = vsub.s32 0, %v44
    %v46 = vrot.slane %v41, %v45
    %v47 = vlaneseq
    %v48 = vshrl.u32 %v47, 7
    %v49 = vsub.s32 1, %v48
    %v50 = vrot.slane %v41, %v49
    %v51 = vlaneseq
    %v52 = vshrl.u32 %v51, 7
    %v53 = vsub.s32 2, %v52
    %v54 = vrot.slane %v41, %v53
    %v55 = vlaneseq
    %v56 = vshrl.u32 %v55, 7
    %v57 = vsub.s32 3, %v56
    %v58 = vrot.slane %v41, %v57
    %v59 = vlaneseq
    %v60 = vshrl.u32 %v59, 7
    %v61 = vsub.s32 4, %v60
    %v62 = vrot.slane %v41, %v61
    %v63 = vlaneseq
    %v64 = vshrl.u32 %v63, 7
    %v65 = vsub.s32 5, %v64
    %v66 = vrot.slane %v41, %v65
    %v67 = vlaneseq
    %v68 = vshrl.u32 %v67, 7
    %v69 = vsub.s32 6, %v68
    %v70 = vrot.slane %v41, %v69
    %v71 = vlaneseq
    %v72 = vshrl.u32 %v71, 7
    %v73 = vsub.s32 7, %v72
    %v74 = vrot.slane %v41, %v73
    %v99 = vunpack.c.l.b16 %v25
    %v100 = vunpack.c.h.b16 %v25
    %v101 = vunpack.c.l.b16 %v26
    %v102 = vunpack.c.h.b16 %v26
    %v103 = vunpack.c.l.b16 %v27
    %v104 = vunpack.c.h.b16 %v27
    %v105 = vunpack.c.l.b16 %v28
    %v106 = vunpack.c.h.b16 %v28
    %v107 = vunpack.c.l.b16 %v29
    %v108 = vunpack.c.h.b16 %v29
    %v109 = vunpack.c.l.b16 %v30
    %v110 = vunpack.c.h.b16 %v30
    %v111 = vunpack.c.l.b16 %v31
    %v112 = vunpack.c.h.b16 %v31
    %v113 = vunpack.c.l.b16 %v32
    %v114 = vunpack.c.h.b16 %v32
    %v115 = vunpack.c.l.b16 %v33
    %v116 = vunpack.c.h.b16 %v33
    %v117 = vunpack.c.l.b16 %v34
    %v118 = vunpack.c.h.b16 %v34
    %v119 = vunpack.c.l.b16 %v35
    %v120 = vunpack.c.h.b16 %v35
    %v121 = vunpack.c.l.b16 %v36
    %v122 = vunpack.c.h.b16 %v36
    %v123 = vunpack.c.l.b16 %v37
    %v124 = vunpack.c.h.b16 %v37
    %v125 = vunpack.c.l.b16 %v38
    %v126 = vunpack.c.h.b16 %v38
    %v127 = vunpack.c.l.b16 %v39
    %v128 = vunpack.c.h.b16 %v39
    %v129 = vunpack.c.l.b16 %v40
    %v130 = vunpack.c.h.b16 %v40
    %v131 = vpack.c.b16 %v107, %v99
    %v132 = vpack.c.b16 %v108, %v100
    %v133 = vpack.c.b16 %v109, %v101
    %v134 = vpack.c.b16 %v110, %v102
    %v135 = vpack.c.b16 %v111, %v103
    %v136 = vpack.c.b16 %v112, %v104
    %v137 = vpack.c.b16 %v113, %v105
    %v138 = vpack.c.b16 %v114, %v106
    %v139 = vpack.c.b16 %v123, %v115
    %v140 = vpack.c.b16 %v124, %v116
    %v141 = vpack.c.b16 %v125, %v117
    %v142 = vpack.c.b16 %v126, %v118
    %v143 = vpack.c.b16 %v127, %v119
    %v144 = vpack.c.b16 %v128, %v120
    %v145 = vpack.c.b16 %v129, %v121
    %v146 = vpack.c.b16 %v130, %v122
    %vm163 = vcmask 261120
    %v165 = vsel %vm163, %v24, 0
    %167 = vmatprep.subr.bf16.mxu0 %v132
    %168 = vmatpush1.bf16.msra.mxu0 %v131
    %169 = vmatprep.subr.bf16.mxu0 %v140
    %170 = vmatpush1.bf16.msra.mxu0 %v139
    %171 = vmatprep.subr.bf16.mxu0 0
    %172 = vmatpush1.bf16.msra.mxu0 0
    %173 = vmatprep.subr.bf16.mxu0 0
    %174 = vmatpush1.bf16.msra.mxu0 0
    %175 = vmatprep.subr.bf16.mxu0 0
    %176 = vmatpush1.bf16.msra.mxu0 0
    %177 = vmatprep.subr.bf16.mxu0 0
    %178 = vmatpush1.bf16.msra.mxu0 0
    %179 = vmatprep.subr.bf16.mxu0 0
    %180 = vmatpush1.bf16.msra.mxu0 0
    %181 = vmatprep.subr.bf16.mxu0 0
    %182 = vmatpush1.bf16.msra.mxu0 0
    %183 = vmatprep.subr.bf16.mxu0 0
    %184 = vmatpush1.bf16.msra.mxu0 0
    %185 = vmatprep.subr.bf16.mxu0 0
    %186 = vmatpush1.bf16.msra.mxu0 0
    %187 = vmatprep.subr.bf16.mxu0 0
    %188 = vmatpush1.bf16.msra.mxu0 0
    %189 = vmatprep.subr.bf16.mxu0 0
    %190 = vmatpush1.bf16.msra.mxu0 0
    %191 = vmatprep.subr.bf16.mxu0 0
    %192 = vmatpush1.bf16.msra.mxu0 0
    %193 = vmatprep.subr.bf16.mxu0 0
    %194 = vmatpush1.bf16.msra.mxu0 0
    %195 = vmatprep.subr.bf16.mxu0 0
    %196 = vmatpush1.bf16.msra.mxu0 0
    %197 = vmatprep.subr.bf16.mxu0 0
    %198 = vmatpush1.bf16.msra.mxu0 0
    %199 = vmatprep.mubr.bf16.mxu0 0
    %200 = vmatmul.mubr.bf16.gmra.mrb[0].mxu0 %v165
    %v201 = vpop.f32.mrb[0].mxu0
    %v202 = vadd.f32 %v46, %v201
    %v203 = vpop.f32.mrb[0].mxu0
    %v204 = vadd.f32 %v50, %v203
    %v205 = vpop.f32.mrb[0].mxu0
    %v206 = vpop.f32.mrb[0].mxu0
    %207 = vdwg.mxu0
    %208 = vmatprep.subr.bf16.mxu0 %v134
    %209 = vmatpush1.bf16.msra.mxu0 %v133
    %210 = vmatprep.subr.bf16.mxu0 %v142
    %211 = vmatpush1.bf16.msra.mxu0 %v141
    %212 = vmatprep.subr.bf16.mxu0 0
    %213 = vmatpush1.bf16.msra.mxu0 0
    %214 = vmatprep.subr.bf16.mxu0 0
    %215 = vmatpush1.bf16.msra.mxu0 0
    %216 = vmatprep.subr.bf16.mxu0 0
    %217 = vmatpush1.bf16.msra.mxu0 0
    %218 = vmatprep.subr.bf16.mxu0 0
    %219 = vmatpush1.bf16.msra.mxu0 0
    %220 = vmatprep.subr.bf16.mxu0 0
    %221 = vmatpush1.bf16.msra.mxu0 0
    %222 = vmatprep.subr.bf16.mxu0 0
    %223 = vmatpush1.bf16.msra.mxu0 0
    %224 = vmatprep.subr.bf16.mxu0 0
    %225 = vmatpush1.bf16.msra.mxu0 0
    %226 = vmatprep.subr.bf16.mxu0 0
    %227 = vmatpush1.bf16.msra.mxu0 0
    %228 = vmatprep.subr.bf16.mxu0 0
    %229 = vmatpush1.bf16.msra.mxu0 0
    %230 = vmatprep.subr.bf16.mxu0 0
    %231 = vmatpush1.bf16.msra.mxu0 0
    %232 = vmatprep.subr.bf16.mxu0 0
    %233 = vmatpush1.bf16.msra.mxu0 0
    %234 = vmatprep.subr.bf16.mxu0 0
    %235 = vmatpush1.bf16.msra.mxu0 0
    %236 = vmatprep.subr.bf16.mxu0 0
    %237 = vmatpush1.bf16.msra.mxu0 0
    %238 = vmatprep.subr.bf16.mxu0 0
    %239 = vmatpush1.bf16.msra.mxu0 0
    %240 = vmatprep.mubr.bf16.mxu0 0
    %241 = vmatmul.mubr.bf16.gmra.mrb[0].mxu0 %v165
    %v242 = vpop.f32.mrb[0].mxu0
    %v243 = vadd.f32 %v54, %v242
    %v244 = vpop.f32.mrb[0].mxu0
    %v245 = vadd.f32 %v58, %v244
    %v246 = vpop.f32.mrb[0].mxu0
    %v247 = vpop.f32.mrb[0].mxu0
    %248 = vdwg.mxu0
    %249 = vmatprep.subr.bf16.mxu0 %v136
    %250 = vmatpush1.bf16.msra.mxu0 %v135
    %251 = vmatprep.subr.bf16.mxu0 %v144
    %252 = vmatpush1.bf16.msra.mxu0 %v143
    %253 = vmatprep.subr.bf16.mxu0 0
    %254 = vmatpush1.bf16.msra.mxu0 0
    %255 = vmatprep.subr.bf16.mxu0 0
    %256 = vmatpush1.bf16.msra.mxu0 0
    %257 = vmatprep.subr.bf16.mxu0 0
    %258 = vmatpush1.bf16.msra.mxu0 0
    %259 = vmatprep.subr.bf16.mxu0 0
    %260 = vmatpush1.bf16.msra.mxu0 0
    %261 = vmatprep.subr.bf16.mxu0 0
    %262 = vmatpush1.bf16.msra.mxu0 0
    %263 = vmatprep.subr.bf16.mxu0 0
    %264 = vmatpush1.bf16.msra.mxu0 0
    %265 = vmatprep.subr.bf16.mxu0 0
    %266 = vmatpush1.bf16.msra.mxu0 0
    %267 = vmatprep.subr.bf16.mxu0 0
    %268 = vmatpush1.bf16.msra.mxu0 0
    %269 = vmatprep.subr.bf16.mxu0 0
    %270 = vmatpush1.bf16.msra.mxu0 0
    %271 = vmatprep.subr.bf16.mxu0 0
    %272 = vmatpush1.bf16.msra.mxu0 0
    %273 = vmatprep.subr.bf16.mxu0 0
    %274 = vmatpush1.bf16.msra.mxu0 0
    %275 = vmatprep.subr.bf16.mxu0 0
    %276 = vmatpush1.bf16.msra.mxu0 0
    %277 = vmatprep.subr.bf16.mxu0 0
    %278 = vmatpush1.bf16.msra.mxu0 0
    %279 = vmatprep.subr.bf16.mxu0 0
    %280 = vmatpush1.bf16.msra.mxu0 0
    %281 = vmatprep.mubr.bf16.mxu0 0
    %282 = vmatmul.mubr.bf16.gmra.mrb[0].mxu0 %v165
    %v283 = vpop.f32.mrb[0].mxu0
    %v284 = vadd.f32 %v62, %v283
    %v285 = vpop.f32.mrb[0].mxu0
    %v286 = vadd.f32 %v66, %v285
    %v287 = vpop.f32.mrb[0].mxu0
    %v288 = vpop.f32.mrb[0].mxu0
    %289 = vdwg.mxu0
    %290 = vmatprep.subr.bf16.mxu0 %v138
    %291 = vmatpush1.bf16.msra.mxu0 %v137
    %292 = vmatprep.subr.bf16.mxu0 %v146
    %293 = vmatpush1.bf16.msra.mxu0 %v145
    %294 = vmatprep.subr.bf16.mxu0 0
    %295 = vmatpush1.bf16.msra.mxu0 0
    %296 = vmatprep.subr.bf16.mxu0 0
    %297 = vmatpush1.bf16.msra.mxu0 0
    %298 = vmatprep.subr.bf16.mxu0 0
    %299 = vmatpush1.bf16.msra.mxu0 0
    %300 = vmatprep.subr.bf16.mxu0 0
    %301 = vmatpush1.bf16.msra.mxu0 0
    %302 = vmatprep.subr.bf16.mxu0 0
    %303 = vmatpush1.bf16.msra.mxu0 0
    %304 = vmatprep.subr.bf16.mxu0 0
    %305 = vmatpush1.bf16.msra.mxu0 0
    %306 = vmatprep.subr.bf16.mxu0 0
    %307 = vmatpush1.bf16.msra.mxu0 0
    %308 = vmatprep.subr.bf16.mxu0 0
    %309 = vmatpush1.bf16.msra.mxu0 0
    %310 = vmatprep.subr.bf16.mxu0 0
    %311 = vmatpush1.bf16.msra.mxu0 0
    %312 = vmatprep.subr.bf16.mxu0 0
    %313 = vmatpush1.bf16.msra.mxu0 0
    %314 = vmatprep.subr.bf16.mxu0 0
    %315 = vmatpush1.bf16.msra.mxu0 0
    %316 = vmatprep.subr.bf16.mxu0 0
    %317 = vmatpush1.bf16.msra.mxu0 0
    %318 = vmatprep.subr.bf16.mxu0 0
    %319 = vmatpush1.bf16.msra.mxu0 0
    %320 = vmatprep.subr.bf16.mxu0 0
    %321 = vmatpush1.bf16.msra.mxu0 0
    %322 = vmatprep.mubr.bf16.mxu0 0
    %323 = vmatmul.mubr.bf16.gmra.mrb[0].mxu0 %v165
    %v324 = vpop.f32.mrb[0].mxu0
    %v325 = vadd.f32 %v70, %v324
    %v326 = vpop.f32.mrb[0].mxu0
    %v327 = vadd.f32 %v74, %v326
    %v328 = vpop.f32.mrb[0].mxu0
    %v329 = vpop.f32.mrb[0].mxu0
    %330 = vdwg.mxu0
    %v331 = vmax.f32 %v202, 0.0
    %v332 = vmax.f32 %v204, 0.0
    %v333 = vmax.f32 %v243, 0.0
    %v334 = vmax.f32 %v245, 0.0
    %v335 = vmax.f32 %v284, 0.0
    %v336 = vmax.f32 %v286, 0.0
    %v337 = vmax.f32 %v325, 0.0
    %v338 = vmax.f32 %v327, 0.0
    %v339 = vpack.c.bf16 %v331, %v331
    %v340 = vpack.c.bf16 %v332, %v332
    %v341 = vpack.c.bf16 %v333, %v333
    %v342 = vpack.c.bf16 %v334, %v334
    %v343 = vpack.c.bf16 %v335, %v335
    %v344 = vpack.c.bf16 %v336, %v336
    %v345 = vpack.c.bf16 %v337, %v337
    %v346 = vpack.c.bf16 %v338, %v338
    %v355 = vunpack.c.l.b16 %v339
    %v356 = vunpack.c.l.b16 %v340
    %v357 = vunpack.c.l.b16 %v341
    %v358 = vunpack.c.l.b16 %v342
    %v359 = vunpack.c.l.b16 %v343
    %v360 = vunpack.c.l.b16 %v344
    %v361 = vunpack.c.l.b16 %v345
    %v362 = vunpack.c.l.b16 %v346
    %v363 = vpack.c.b16 %v356, %v355
    %v364 = vpack.c.b16 %v358, %v357
    %v365 = vpack.c.b16 %v360, %v359
    %v366 = vpack.c.b16 %v362, %v361
    %371 = vst [vmem:[#allocation2] sm:$0xff] %v363
    %372 = vst [vmem:[#allocation2 + $0x8] sm:$0xff] %v364
    %373 = vst [vmem:[#allocation2 + $0x10] sm:$0xff] %v365
    %374 = vst [vmem:[#allocation2 + $0x18] sm:$0xff] %v366
    %v375 = vld [vmem:[#allocation2] sm:$0xff]
    %v376 = vld [vmem:[#allocation2 + $0x8] sm:$0xff]
    %v377 = vld [vmem:[#allocation2 + $0x10] sm:$0xff]
    %v378 = vld [vmem:[#allocation2 + $0x18] sm:$0xff]
    %v379 = vld [vmem:[%s3] sm:$0xff]
    %v380 = vld [vmem:[%s3 + $0x8] sm:$0xff]
    %v381 = vld [vmem:[%s3 + $0x10] sm:$0xff]
    %v382 = vld [vmem:[%s3 + $0x18] sm:$0xf]
    %v383 = vld [vmem:[%s3 + $0x1c] sm:$0xff]
    %v384 = vld [vmem:[%s3 + $0x24] sm:$0xff]
    %v385 = vld [vmem:[%s3 + $0x2c] sm:$0xff]
    %v386 = vld [vmem:[%s3 + $0x34] sm:$0xf]
    %v387 = vld [vmem:[%s3 + $0x38] sm:$0xff]
    %v388 = vld [vmem:[%s3 + $0x40] sm:$0xff]
    %v389 = vld [vmem:[%s3 + $0x48] sm:$0xff]
    %v390 = vld [vmem:[%s3 + $0x50] sm:$0xf]
    %v391 = vld [vmem:[%s3 + $0x54] sm:$0xff]
    %v392 = vld [vmem:[%s3 + $0x5c] sm:$0xff]
    %v393 = vld [vmem:[%s3 + $0x64] sm:$0xff]
    %v394 = vld [vmem:[%s3 + $0x6c] sm:$0xf]
    %v395 = vld [vmem:[%s3 + $0x70] sm:$0xff]
    %v396 = vld [vmem:[%s3 + $0x78] sm:$0xff]
    %v397 = vld [vmem:[%s3 + $0x80] sm:$0xff]
    %v398 = vld [vmem:[%s3 + $0x88] sm:$0xf]
    %v399 = vld [vmem:[%s3 + $0x8c] sm:$0xff]
    %v400 = vld [vmem:[%s3 + $0x94] sm:$0xff]
    %v401 = vld [vmem:[%s3 + $0x9c] sm:$0xff]
    %v402 = vld [vmem:[%s3 + $0xa4] sm:$0xf]
    %v403 = vld [vmem:[%s3 + $0xa8] sm:$0xff]
    %v404 = vld [vmem:[%s3 + $0xb0] sm:$0xff]
    %v405 = vld [vmem:[%s3 + $0xb8] sm:$0xff]
    %v406 = vld [vmem:[%s3 + $0xc0] sm:$0xf]
    %v407 = vld [vmem:[%s3 + $0xc4] sm:$0xff]
    %v408 = vld [vmem:[%s3 + $0xcc] sm:$0xff]
    %v409 = vld [vmem:[%s3 + $0xd4] sm:$0xff]
    %v410 = vld [vmem:[%s3 + $0xdc] sm:$0xf]
    %v411 = vld [vmem:[%s3 + $0xe0] sm:$0xff]
    %v412 = vld [vmem:[%s3 + $0xe8] sm:$0xff]
    %v413 = vld [vmem:[%s3 + $0xf0] sm:$0xff]
    %v414 = vld [vmem:[%s3 + $0xf8] sm:$0xf]
    %v415 = vld [vmem:[%s3 + $0xfc] sm:$0xff]
    %v416 = vld [vmem:[%s3 + $0x104] sm:$0xff]
    %v417 = vld [vmem:[%s3 + $0x10c] sm:$0xff]
    %v418 = vld [vmem:[%s3 + $0x114] sm:$0xf]
    %v419 = vld [vmem:[%s3 + $0x118] sm:$0xff]
    %v420 = vld [vmem:[%s3 + $0x120] sm:$0xff]
    %v421 = vld [vmem:[%s3 + $0x128] sm:$0xff]
    %v422 = vld [vmem:[%s3 + $0x130] sm:$0xf]
    %v423 = vld [vmem:[%s3 + $0x134] sm:$0xff]
    %v424 = vld [vmem:[%s3 + $0x13c] sm:$0xff]
    %v425 = vld [vmem:[%s3 + $0x144] sm:$0xff]
    %v426 = vld [vmem:[%s3 + $0x14c] sm:$0xf]
    %v427 = vld [vmem:[%s3 + $0x150] sm:$0xff]
    %v428 = vld [vmem:[%s3 + $0x158] sm:$0xff]
    %v429 = vld [vmem:[%s3 + $0x160] sm:$0xff]
    %v430 = vld [vmem:[%s3 + $0x168] sm:$0xf]
    %v431 = vld [vmem:[%s3 + $0x16c] sm:$0xff]
    %v432 = vld [vmem:[%s3 + $0x174] sm:$0xff]
    %v433 = vld [vmem:[%s3 + $0x17c] sm:$0xff]
    %v434 = vld [vmem:[%s3 + $0x184] sm:$0xf]
    %v435 = vld [vmem:[%s3 + $0x188] sm:$0xff]
    %v436 = vld [vmem:[%s3 + $0x190] sm:$0xff]
    %v437 = vld [vmem:[%s3 + $0x198] sm:$0xff]
    %v438 = vld [vmem:[%s3 + $0x1a0] sm:$0xf]
    %v439 = vld [vmem:[%s3 + $0x1a4] sm:$0xff]
    %v440 = vld [vmem:[%s3 + $0x1ac] sm:$0xff]
    %v441 = vld [vmem:[%s3 + $0x1b4] sm:$0xff]
    %v442 = vld [vmem:[%s3 + $0x1bc] sm:$0xf]
    %v443 = vld [vmem:[%s3 + $0x1c0] sm:$0xff]
    %v444 = vld [vmem:[%s3 + $0x1c8] sm:$0xff]
    %v445 = vld [vmem:[%s3 + $0x1d0] sm:$0xff]
    %v446 = vld [vmem:[%s3 + $0x1d8] sm:$0xf]
    %v447 = vld [vmem:[%s3 + $0x1dc] sm:$0xff]
    %v448 = vld [vmem:[%s3 + $0x1e4] sm:$0xff]
    %v449 = vld [vmem:[%s3 + $0x1ec] sm:$0xff]
    %v450 = vld [vmem:[%s3 + $0x1f4] sm:$0xf]
    %v451 = vld [vmem:[%s3 + $0x1f8] sm:$0xff]
    %v452 = vld [vmem:[%s3 + $0x200] sm:$0xff]
    %v453 = vld [vmem:[%s3 + $0x208] sm:$0xff]
    %v454 = vld [vmem:[%s3 + $0x210] sm:$0xf]
    %v455 = vld [vmem:[%s3 + $0x214] sm:$0xff]
    %v456 = vld [vmem:[%s3 + $0x21c] sm:$0xff]
    %v457 = vld [vmem:[%s3 + $0x224] sm:$0xff]
    %v458 = vld [vmem:[%s3 + $0x22c] sm:$0xf]
    %v459 = vld [vmem:[%s3 + $0x230] sm:$0xff]
    %v460 = vld [vmem:[%s3 + $0x238] sm:$0xff]
    %v461 = vld [vmem:[%s3 + $0x240] sm:$0xff]
    %v462 = vld [vmem:[%s3 + $0x248] sm:$0xf]
    %v463 = vld [vmem:[%s3 + $0x24c] sm:$0xff]
    %v464 = vld [vmem:[%s3 + $0x254] sm:$0xff]
    %v465 = vld [vmem:[%s3 + $0x25c] sm:$0xff]
    %v466 = vld [vmem:[%s3 + $0x264] sm:$0xf]
    %v467 = vld [vmem:[%s3 + $0x268] sm:$0xff]
    %v468 = vld [vmem:[%s3 + $0x270] sm:$0xff]
    %v469 = vld [vmem:[%s3 + $0x278] sm:$0xff]
    %v470 = vld [vmem:[%s3 + $0x280] sm:$0xf]
    %v471 = vld [vmem:[%s3 + $0x284] sm:$0xff]
    %v472 = vld [vmem:[%s3 + $0x28c] sm:$0xff]
    %v473 = vld [vmem:[%s3 + $0x294] sm:$0xff]
    %v474 = vld [vmem:[%s3 + $0x29c] sm:$0xf]
    %v475 = vld [vmem:[%s3 + $0x2a0] sm:$0xff]
    %v476 = vld [vmem:[%s3 + $0x2a8] sm:$0xff]
    %v477 = vld [vmem:[%s3 + $0x2b0] sm:$0xff]
    %v478 = vld [vmem:[%s3 + $0x2b8] sm:$0xf]
    %v479 = vld [vmem:[%s3 + $0x2bc] sm:$0xff]
    %v480 = vld [vmem:[%s3 + $0x2c4] sm:$0xff]
    %v481 = vld [vmem:[%s3 + $0x2cc] sm:$0xff]
    %v482 = vld [vmem:[%s3 + $0x2d4] sm:$0xf]
    %v483 = vld [vmem:[%s3 + $0x2d8] sm:$0xff]
    %v484 = vld [vmem:[%s3 + $0x2e0] sm:$0xff]
    %v485 = vld [vmem:[%s3 + $0x2e8] sm:$0xff]
    %v486 = vld [vmem:[%s3 + $0x2f0] sm:$0xf]
    %v487 = vld [vmem:[%s3 + $0x2f4] sm:$0xff]
    %v488 = vld [vmem:[%s3 + $0x2fc] sm:$0xff]
    %v489 = vld [vmem:[%s3 + $0x304] sm:$0xff]
    %v490 = vld [vmem:[%s3 + $0x30c] sm:$0xf]
    %v491 = vld [vmem:[%s3 + $0x310] sm:$0xff]
    %v492 = vld [vmem:[%s3 + $0x318] sm:$0xff]
    %v493 = vld [vmem:[%s3 + $0x320] sm:$0xff]
    %v494 = vld [vmem:[%s3 + $0x328] sm:$0xf]
    %v495 = vld [vmem:[%s3 + $0x32c] sm:$0xff]
    %v496 = vld [vmem:[%s3 + $0x334] sm:$0xff]
    %v497 = vld [vmem:[%s3 + $0x33c] sm:$0xff]
    %v498 = vld [vmem:[%s3 + $0x344] sm:$0xf]
    %v499 = vld [vmem:[%s3 + $0x348] sm:$0xff]
    %v500 = vld [vmem:[%s3 + $0x350] sm:$0xff]
    %v501 = vld [vmem:[%s3 + $0x358] sm:$0xff]
    %v502 = vld [vmem:[%s3 + $0x360] sm:$0xf]
    %v503 = vld [vmem:[%s3 + $0x364] sm:$0xff]
    %v504 = vld [vmem:[%s3 + $0x36c] sm:$0xff]
    %v505 = vld [vmem:[%s3 + $0x374] sm:$0xff]
    %v506 = vld [vmem:[%s3 + $0x37c] sm:$0xf]
    %v507 = vld [vmem:[%s3 + $0x380] sm:$0xff]
    %v508 = vld [vmem:[%s3 + $0x388] sm:$0xff]
    %v509 = vld [vmem:[%s3 + $0x390] sm:$0xff]
    %v510 = vld [vmem:[%s3 + $0x398] sm:$0xf]
    %v511 = vld [vmem:[%s3 + $0x39c] sm:$0xff]
    %v512 = vld [vmem:[%s3 + $0x3a4] sm:$0xff]
    %v513 = vld [vmem:[%s3 + $0x3ac] sm:$0xff]
    %v514 = vld [vmem:[%s3 + $0x3b4] sm:$0xf]
    %v515 = vld [vmem:[%s3 + $0x3b8] sm:$0xff]
    %v516 = vld [vmem:[%s3 + $0x3c0] sm:$0xff]
    %v517 = vld [vmem:[%s3 + $0x3c8] sm:$0xff]
    %v518 = vld [vmem:[%s3 + $0x3d0] sm:$0xf]
    %v519 = vld [vmem:[%s3 + $0x3d4] sm:$0xff]
    %v520 = vld [vmem:[%s3 + $0x3dc] sm:$0xff]
    %v521 = vld [vmem:[%s3 + $0x3e4] sm:$0xff]
    %v522 = vld [vmem:[%s3 + $0x3ec] sm:$0xf]
    %v523 = vld [vmem:[%s3 + $0x3f0] sm:$0xff]
    %v524 = vld [vmem:[%s3 + $0x3f8] sm:$0xff]
    %v525 = vld [vmem:[%s3 + $0x400] sm:$0xff]
    %v526 = vld [vmem:[%s3 + $0x408] sm:$0xf]
    %v527 = vld [vmem:[%s3 + $0x40c] sm:$0xff]
    %v528 = vld [vmem:[%s3 + $0x414] sm:$0xff]
    %v529 = vld [vmem:[%s3 + $0x41c] sm:$0xff]
    %v530 = vld [vmem:[%s3 + $0x424] sm:$0xf]
    %v531 = vld [vmem:[%s3 + $0x428] sm:$0xff]
    %v532 = vld [vmem:[%s3 + $0x430] sm:$0xff]
    %v533 = vld [vmem:[%s3 + $0x438] sm:$0xff]
    %v534 = vld [vmem:[%s3 + $0x440] sm:$0xf]
    %v535 = vld [vmem:[%s3 + $0x444] sm:$0xff]
    %v536 = vld [vmem:[%s3 + $0x44c] sm:$0xff]
    %v537 = vld [vmem:[%s3 + $0x454] sm:$0xff]
    %v538 = vld [vmem:[%s3 + $0x45c] sm:$0xf]
    %v539 = vld [vmem:[%s3 + $0x460] sm:$0xff]
    %v540 = vld [vmem:[%s3 + $0x468] sm:$0xff]
    %v541 = vld [vmem:[%s3 + $0x470] sm:$0xff]
    %v542 = vld [vmem:[%s3 + $0x478] sm:$0xf]
    %v543 = vld [vmem:[%s3 + $0x47c] sm:$0xff]
    %v544 = vld [vmem:[%s3 + $0x484] sm:$0xff]
    %v545 = vld [vmem:[%s3 + $0x48c] sm:$0xff]
    %v546 = vld [vmem:[%s3 + $0x494] sm:$0xf]
    %v547 = vld [vmem:[%s3 + $0x498] sm:$0xff]
    %v548 = vld [vmem:[%s3 + $0x4a0] sm:$0xff]
    %v549 = vld [vmem:[%s3 + $0x4a8] sm:$0xff]
    %v550 = vld [vmem:[%s3 + $0x4b0] sm:$0xf]
    %v551 = vld [vmem:[%s3 + $0x4b4] sm:$0xff]
    %v552 = vld [vmem:[%s3 + $0x4bc] sm:$0xff]
    %v553 = vld [vmem:[%s3 + $0x4c4] sm:$0xff]
    %v554 = vld [vmem:[%s3 + $0x4cc] sm:$0xf]
    %v555 = vld [vmem:[%s3 + $0x4d0] sm:$0xff]
    %v556 = vld [vmem:[%s3 + $0x4d8] sm:$0xff]
    %v557 = vld [vmem:[%s3 + $0x4e0] sm:$0xff]
    %v558 = vld [vmem:[%s3 + $0x4e8] sm:$0xf]
    %v559 = vld [vmem:[%s3 + $0x4ec] sm:$0xff]
    %v560 = vld [vmem:[%s3 + $0x4f4] sm:$0xff]
    %v561 = vld [vmem:[%s3 + $0x4fc] sm:$0xff]
    %v562 = vld [vmem:[%s3 + $0x504] sm:$0xf]
    %v563 = vld [vmem:[%s3 + $0x508] sm:$0xff]
    %v564 = vld [vmem:[%s3 + $0x510] sm:$0xff]
    %v565 = vld [vmem:[%s3 + $0x518] sm:$0xff]
    %v566 = vld [vmem:[%s3 + $0x520] sm:$0xf]
    %v567 = vld [vmem:[%s3 + $0x524] sm:$0xff]
    %v568 = vld [vmem:[%s3 + $0x52c] sm:$0xff]
    %v569 = vld [vmem:[%s3 + $0x534] sm:$0xff]
    %v570 = vld [vmem:[%s3 + $0x53c] sm:$0xf]
    %v571 = vld [vmem:[%s3 + $0x540] sm:$0xff]
    %v572 = vld [vmem:[%s3 + $0x548] sm:$0xff]
    %v573 = vld [vmem:[%s3 + $0x550] sm:$0xff]
    %v574 = vld [vmem:[%s3 + $0x558] sm:$0xf]
    %v575 = vld [vmem:[%s3 + $0x55c] sm:$0xff]
    %v576 = vld [vmem:[%s3 + $0x564] sm:$0xff]
    %v577 = vld [vmem:[%s3 + $0x56c] sm:$0xff]
    %v578 = vld [vmem:[%s3 + $0x574] sm:$0xf]
    %v579 = vld [vmem:[%s3 + $0x578] sm:$0xff]
    %v580 = vld [vmem:[%s3 + $0x580] sm:$0xff]
    %v581 = vld [vmem:[%s3 + $0x588] sm:$0xff]
    %v582 = vld [vmem:[%s3 + $0x590] sm:$0xf]
    %v583 = vld [vmem:[%s3 + $0x594] sm:$0xff]
    %v584 = vld [vmem:[%s3 + $0x59c] sm:$0xff]
    %v585 = vld [vmem:[%s3 + $0x5a4] sm:$0xff]
    %v586 = vld [vmem:[%s3 + $0x5ac] sm:$0xf]
    %v587 = vld [vmem:[%s3 + $0x5b0] sm:$0xff]
    %v588 = vld [vmem:[%s3 + $0x5b8] sm:$0xff]
    %v589 = vld [vmem:[%s3 + $0x5c0] sm:$0xff]
    %v590 = vld [vmem:[%s3 + $0x5c8] sm:$0xf]
    %v591 = vld [vmem:[%s3 + $0x5cc] sm:$0xff]
    %v592 = vld [vmem:[%s3 + $0x5d4] sm:$0xff]
    %v593 = vld [vmem:[%s3 + $0x5dc] sm:$0xff]
    %v594 = vld [vmem:[%s3 + $0x5e4] sm:$0xf]
    %v595 = vld [vmem:[%s3 + $0x5e8] sm:$0xff]
    %v596 = vld [vmem:[%s3 + $0x5f0] sm:$0xff]
    %v597 = vld [vmem:[%s3 + $0x5f8] sm:$0xff]
    %v598 = vld [vmem:[%s3 + $0x600] sm:$0xf]
    %v599 = vld [vmem:[%s3 + $0x604] sm:$0xff]
    %v600 = vld [vmem:[%s3 + $0x60c] sm:$0xff]
    %v601 = vld [vmem:[%s3 + $0x614] sm:$0xff]
    %v602 = vld [vmem:[%s3 + $0x61c] sm:$0xf]
    %v603 = vld [vmem:[%s3 + $0x620] sm:$0xff]
    %v604 = vld [vmem:[%s3 + $0x628] sm:$0xff]
    %v605 = vld [vmem:[%s3 + $0x630] sm:$0xff]
    %v606 = vld [vmem:[%s3 + $0x638] sm:$0xf]
    %v607 = vld [vmem:[%s3 + $0x63c] sm:$0xff]
    %v608 = vld [vmem:[%s3 + $0x644] sm:$0xff]
    %v609 = vld [vmem:[%s3 + $0x64c] sm:$0xff]
    %v610 = vld [vmem:[%s3 + $0x654] sm:$0xf]
    %v611 = vld [vmem:[%s3 + $0x658] sm:$0xff]
    %v612 = vld [vmem:[%s3 + $0x660] sm:$0xff]
    %v613 = vld [vmem:[%s3 + $0x668] sm:$0xff]
    %v614 = vld [vmem:[%s3 + $0x670] sm:$0xf]
    %v615 = vld [vmem:[%s3 + $0x674] sm:$0xff]
    %v616 = vld [vmem:[%s3 + $0x67c] sm:$0xff]
    %v617 = vld [vmem:[%s3 + $0x684] sm:$0xff]
    %v618 = vld [vmem:[%s3 + $0x68c] sm:$0xf]
    %v619 = vld [vmem:[%s3 + $0x690] sm:$0xff]
    %v620 = vld [vmem:[%s3 + $0x698] sm:$0xff]
    %v621 = vld [vmem:[%s3 + $0x6a0] sm:$0xff]
    %v622 = vld [vmem:[%s3 + $0x6a8] sm:$0xf]
    %v623 = vld [vmem:[%s3 + $0x6ac] sm:$0xff]
    %v624 = vld [vmem:[%s3 + $0x6b4] sm:$0xff]
    %v625 = vld [vmem:[%s3 + $0x6bc] sm:$0xff]
    %v626 = vld [vmem:[%s3 + $0x6c4] sm:$0xf]
    %v627 = vld [vmem:[%s3 + $0x6c8] sm:$0xff]
    %v628 = vld [vmem:[%s3 + $0x6d0] sm:$0xff]
    %v629 = vld [vmem:[%s3 + $0x6d8] sm:$0xff]
    %v630 = vld [vmem:[%s3 + $0x6e0] sm:$0xf]
    %v631 = vld [vmem:[%s3 + $0x6e4] sm:$0xff]
    %v632 = vld [vmem:[%s3 + $0x6ec] sm:$0xff]
    %v633 = vld [vmem:[%s3 + $0x6f4] sm:$0xff]
    %v634 = vld [vmem:[%s3 + $0x6fc] sm:$0xf]
    %v635 = vld [vmem:[%s3 + $0x700] sm:$0xff]
    %v636 = vld [vmem:[%s3 + $0x708] sm:$0xff]
    %v637 = vld [vmem:[%s3 + $0x710] sm:$0xff]
    %v638 = vld [vmem:[%s3 + $0x718] sm:$0xf]
    %v639 = vld [vmem:[%s3 + $0x71c] sm:$0xff]
    %v640 = vld [vmem:[%s3 + $0x724] sm:$0xff]
    %v641 = vld [vmem:[%s3 + $0x72c] sm:$0xff]
    %v642 = vld [vmem:[%s3 + $0x734] sm:$0xf]
    %v643 = vld [vmem:[%s3 + $0x738] sm:$0xff]
    %v644 = vld [vmem:[%s3 + $0x740] sm:$0xff]
    %v645 = vld [vmem:[%s3 + $0x748] sm:$0xff]
    %v646 = vld [vmem:[%s3 + $0x750] sm:$0xf]
    %v647 = vld [vmem:[%s3 + $0x754] sm:$0xff]
    %v648 = vld [vmem:[%s3 + $0x75c] sm:$0xff]
    %v649 = vld [vmem:[%s3 + $0x764] sm:$0xff]
    %v650 = vld [vmem:[%s3 + $0x76c] sm:$0xf]
    %v651 = vld [vmem:[%s3 + $0x770] sm:$0xff]
    %v652 = vld [vmem:[%s3 + $0x778] sm:$0xff]
    %v653 = vld [vmem:[%s3 + $0x780] sm:$0xff]
    %v654 = vld [vmem:[%s3 + $0x788] sm:$0xf]
    %v655 = vld [vmem:[%s3 + $0x78c] sm:$0xff]
    %v656 = vld [vmem:[%s3 + $0x794] sm:$0xff]
    %v657 = vld [vmem:[%s3 + $0x79c] sm:$0xff]
    %v658 = vld [vmem:[%s3 + $0x7a4] sm:$0xf]
    %v659 = vld [vmem:[%s3 + $0x7a8] sm:$0xff]
    %v660 = vld [vmem:[%s3 + $0x7b0] sm:$0xff]
    %v661 = vld [vmem:[%s3 + $0x7b8] sm:$0xff]
    %v662 = vld [vmem:[%s3 + $0x7c0] sm:$0xf]
    %v663 = vld [vmem:[%s3 + $0x7c4] sm:$0xff]
    %v664 = vld [vmem:[%s3 + $0x7cc] sm:$0xff]
    %v665 = vld [vmem:[%s3 + $0x7d4] sm:$0xff]
    %v666 = vld [vmem:[%s3 + $0x7dc] sm:$0xf]
    %v667 = vld [vmem:[%s3 + $0x7e0] sm:$0xff]
    %v668 = vld [vmem:[%s3 + $0x7e8] sm:$0xff]
    %v669 = vld [vmem:[%s3 + $0x7f0] sm:$0xff]
    %v670 = vld [vmem:[%s3 + $0x7f8] sm:$0xf]
    %v671 = vld [vmem:[%s3 + $0x7fc] sm:$0xff]
    %v672 = vld [vmem:[%s3 + $0x804] sm:$0xff]
    %v673 = vld [vmem:[%s3 + $0x80c] sm:$0xff]
    %v674 = vld [vmem:[%s3 + $0x814] sm:$0xf]
    %v675 = vld [vmem:[%s3 + $0x818] sm:$0xff]
    %v676 = vld [vmem:[%s3 + $0x820] sm:$0xff]
    %v677 = vld [vmem:[%s3 + $0x828] sm:$0xff]
    %v678 = vld [vmem:[%s3 + $0x830] sm:$0xf]
    %v679 = vld [vmem:[%s3 + $0x834] sm:$0xff]
    %v680 = vld [vmem:[%s3 + $0x83c] sm:$0xff]
    %v681 = vld [vmem:[%s3 + $0x844] sm:$0xff]
    %v682 = vld [vmem:[%s3 + $0x84c] sm:$0xf]
    %v683 = vld [vmem:[%s3 + $0x850] sm:$0xff]
    %v684 = vld [vmem:[%s3 + $0x858] sm:$0xff]
    %v685 = vld [vmem:[%s3 + $0x860] sm:$0xff]
    %v686 = vld [vmem:[%s3 + $0x868] sm:$0xf]
    %v687 = vld [vmem:[%s3 + $0x86c] sm:$0xff]
    %v688 = vld [vmem:[%s3 + $0x874] sm:$0xff]
    %v689 = vld [vmem:[%s3 + $0x87c] sm:$0xff]
    %v690 = vld [vmem:[%s3 + $0x884] sm:$0xf]
    %v691 = vld [vmem:[%s3 + $0x888] sm:$0xff]
    %v692 = vld [vmem:[%s3 + $0x890] sm:$0xff]
    %v693 = vld [vmem:[%s3 + $0x898] sm:$0xff]
    %v694 = vld [vmem:[%s3 + $0x8a0] sm:$0xf]
    %v695 = vld [vmem:[%s3 + $0x8a4] sm:$0xff]
    %v696 = vld [vmem:[%s3 + $0x8ac] sm:$0xff]
    %v697 = vld [vmem:[%s3 + $0x8b4] sm:$0xff]
    %v698 = vld [vmem:[%s3 + $0x8bc] sm:$0xf]
    %v699 = vld [vmem:[%s3 + $0x8c0] sm:$0xff]
    %v700 = vld [vmem:[%s3 + $0x8c8] sm:$0xff]
    %v701 = vld [vmem:[%s3 + $0x8d0] sm:$0xff]
    %v702 = vld [vmem:[%s3 + $0x8d8] sm:$0xf]
    %v703 = vld [vmem:[%s3 + $0x8dc] sm:$0xff]
    %v704 = vld [vmem:[%s3 + $0x8e4] sm:$0xff]
    %v705 = vld [vmem:[%s3 + $0x8ec] sm:$0xff]
    %v706 = vld [vmem:[%s3 + $0x8f4] sm:$0xf]
    %v707 = vld [vmem:[%s3 + $0x8f8] sm:$0xff]
    %v708 = vld [vmem:[%s3 + $0x900] sm:$0xff]
    %v709 = vld [vmem:[%s3 + $0x908] sm:$0xff]
    %v710 = vld [vmem:[%s3 + $0x910] sm:$0xf]
    %v711 = vld [vmem:[%s3 + $0x914] sm:$0xff]
    %v712 = vld [vmem:[%s3 + $0x91c] sm:$0xff]
    %v713 = vld [vmem:[%s3 + $0x924] sm:$0xff]
    %v714 = vld [vmem:[%s3 + $0x92c] sm:$0xf]
    %v715 = vld [vmem:[%s3 + $0x930] sm:$0xff]
    %v716 = vld [vmem:[%s3 + $0x938] sm:$0xff]
    %v717 = vld [vmem:[%s3 + $0x940] sm:$0xff]
    %v718 = vld [vmem:[%s3 + $0x948] sm:$0xf]
    %v719 = vld [vmem:[%s3 + $0x94c] sm:$0xff]
    %v720 = vld [vmem:[%s3 + $0x954] sm:$0xff]
    %v721 = vld [vmem:[%s3 + $0x95c] sm:$0xff]
    %v722 = vld [vmem:[%s3 + $0x964] sm:$0xf]
    %v723 = vld [vmem:[%s3 + $0x968] sm:$0xff]
    %v724 = vld [vmem:[%s3 + $0x970] sm:$0xff]
    %v725 = vld [vmem:[%s3 + $0x978] sm:$0xff]
    %v726 = vld [vmem:[%s3 + $0x980] sm:$0xf]
    %v727 = vld [vmem:[%s3 + $0x984] sm:$0xff]
    %v728 = vld [vmem:[%s3 + $0x98c] sm:$0xff]
    %v729 = vld [vmem:[%s3 + $0x994] sm:$0xff]
    %v730 = vld [vmem:[%s3 + $0x99c] sm:$0xf]
    %v731 = vld [vmem:[%s3 + $0x9a0] sm:$0xff]
    %v732 = vld [vmem:[%s3 + $0x9a8] sm:$0xff]
    %v733 = vld [vmem:[%s3 + $0x9b0] sm:$0xff]
    %v734 = vld [vmem:[%s3 + $0x9b8] sm:$0xf]
    %v735 = vld [vmem:[%s3 + $0x9bc] sm:$0xff]
    %v736 = vld [vmem:[%s3 + $0x9c4] sm:$0xff]
    %v737 = vld [vmem:[%s3 + $0x9cc] sm:$0xff]
    %v738 = vld [vmem:[%s3 + $0x9d4] sm:$0xf]
    %v739 = vld [vmem:[%s3 + $0x9d8] sm:$0xff]
    %v740 = vld [vmem:[%s3 + $0x9e0] sm:$0xff]
    %v741 = vld [vmem:[%s3 + $0x9e8] sm:$0xff]
    %v742 = vld [vmem:[%s3 + $0x9f0] sm:$0xf]
    %v743 = vld [vmem:[%s3 + $0x9f4] sm:$0xff]
    %v744 = vld [vmem:[%s3 + $0x9fc] sm:$0xff]
    %v745 = vld [vmem:[%s3 + $0xa04] sm:$0xff]
    %v746 = vld [vmem:[%s3 + $0xa0c] sm:$0xf]
    %v747 = vld [vmem:[%s3 + $0xa10] sm:$0xff]
    %v748 = vld [vmem:[%s3 + $0xa18] sm:$0xff]
    %v749 = vld [vmem:[%s3 + $0xa20] sm:$0xff]
    %v750 = vld [vmem:[%s3 + $0xa28] sm:$0xf]
    %v751 = vld [vmem:[%s3 + $0xa2c] sm:$0xff]
    %v752 = vld [vmem:[%s3 + $0xa34] sm:$0xff]
    %v753 = vld [vmem:[%s3 + $0xa3c] sm:$0xff]
    %v754 = vld [vmem:[%s3 + $0xa44] sm:$0xf]
    %v755 = vld [vmem:[%s3 + $0xa48] sm:$0xff]
    %v756 = vld [vmem:[%s3 + $0xa50] sm:$0xff]
    %v757 = vld [vmem:[%s3 + $0xa58] sm:$0xff]
    %v758 = vld [vmem:[%s3 + $0xa60] sm:$0xf]
    %v759 = vld [vmem:[%s3 + $0xa64] sm:$0xff]
    %v760 = vld [vmem:[%s3 + $0xa6c] sm:$0xff]
    %v761 = vld [vmem:[%s3 + $0xa74] sm:$0xff]
    %v762 = vld [vmem:[%s3 + $0xa7c] sm:$0xf]
    %v763 = vld [vmem:[%s3 + $0xa80] sm:$0xff]
    %v764 = vld [vmem:[%s3 + $0xa88] sm:$0xff]
    %v765 = vld [vmem:[%s3 + $0xa90] sm:$0xff]
    %v766 = vld [vmem:[%s3 + $0xa98] sm:$0xf]
    %v767 = vld [vmem:[%s3 + $0xa9c] sm:$0xff]
    %v768 = vld [vmem:[%s3 + $0xaa4] sm:$0xff]
    %v769 = vld [vmem:[%s3 + $0xaac] sm:$0xff]
    %v770 = vld [vmem:[%s3 + $0xab4] sm:$0xf]
    %v771 = vld [vmem:[%s3 + $0xab8] sm:$0xff]
    %v772 = vld [vmem:[%s3 + $0xac0] sm:$0xff]
    %v773 = vld [vmem:[%s3 + $0xac8] sm:$0xff]
    %v774 = vld [vmem:[%s3 + $0xad0] sm:$0xf]
    %v775 = vld [vmem:[%s3 + $0xad4] sm:$0xff]
    %v776 = vld [vmem:[%s3 + $0xadc] sm:$0xff]
    %v777 = vld [vmem:[%s3 + $0xae4] sm:$0xff]
    %v778 = vld [vmem:[%s3 + $0xaec] sm:$0xf]
    %v779 = vld [vmem:[%s3 + $0xaf0] sm:$0xff]
    %v780 = vld [vmem:[%s3 + $0xaf8] sm:$0xff]
    %v781 = vld [vmem:[%s3 + $0xb00] sm:$0xff]
    %v782 = vld [vmem:[%s3 + $0xb08] sm:$0xf]
    %v783 = vld [vmem:[%s3 + $0xb0c] sm:$0xff]
    %v784 = vld [vmem:[%s3 + $0xb14] sm:$0xff]
    %v785 = vld [vmem:[%s3 + $0xb1c] sm:$0xff]
    %v786 = vld [vmem:[%s3 + $0xb24] sm:$0xf]
    %v787 = vld [vmem:[%s3 + $0xb28] sm:$0xff]
    %v788 = vld [vmem:[%s3 + $0xb30] sm:$0xff]
    %v789 = vld [vmem:[%s3 + $0xb38] sm:$0xff]
    %v790 = vld [vmem:[%s3 + $0xb40] sm:$0xf]
    %v791 = vld [vmem:[%s3 + $0xb44] sm:$0xff]
    %v792 = vld [vmem:[%s3 + $0xb4c] sm:$0xff]
    %v793 = vld [vmem:[%s3 + $0xb54] sm:$0xff]
    %v794 = vld [vmem:[%s3 + $0xb5c] sm:$0xf]
    %v795 = vld [vmem:[%s3 + $0xb60] sm:$0xff]
    %v796 = vld [vmem:[%s3 + $0xb68] sm:$0xff]
    %v797 = vld [vmem:[%s3 + $0xb70] sm:$0xff]
    %v798 = vld [vmem:[%s3 + $0xb78] sm:$0xf]
    %v799 = vld [vmem:[%s3 + $0xb7c] sm:$0xff]
    %v800 = vld [vmem:[%s3 + $0xb84] sm:$0xff]
    %v801 = vld [vmem:[%s3 + $0xb8c] sm:$0xff]
    %v802 = vld [vmem:[%s3 + $0xb94] sm:$0xf]
    %v803 = vld [vmem:[%s3 + $0xb98] sm:$0xff]
    %v804 = vld [vmem:[%s3 + $0xba0] sm:$0xff]
    %v805 = vld [vmem:[%s3 + $0xba8] sm:$0xff]
    %v806 = vld [vmem:[%s3 + $0xbb0] sm:$0xf]
    %v807 = vld [vmem:[%s3 + $0xbb4] sm:$0xff]
    %v808 = vld [vmem:[%s3 + $0xbbc] sm:$0xff]
    %v809 = vld [vmem:[%s3 + $0xbc4] sm:$0xff]
    %v810 = vld [vmem:[%s3 + $0xbcc] sm:$0xf]
    %v811 = vld [vmem:[%s3 + $0xbd0] sm:$0xff]
    %v812 = vld [vmem:[%s3 + $0xbd8] sm:$0xff]
    %v813 = vld [vmem:[%s3 + $0xbe0] sm:$0xff]
    %v814 = vld [vmem:[%s3 + $0xbe8] sm:$0xf]
    %v815 = vld [vmem:[%s3 + $0xbec] sm:$0xff]
    %v816 = vld [vmem:[%s3 + $0xbf4] sm:$0xff]
    %v817 = vld [vmem:[%s3 + $0xbfc] sm:$0xff]
    %v818 = vld [vmem:[%s3 + $0xc04] sm:$0xf]
    %v819 = vld [vmem:[%s3 + $0xc08] sm:$0xff]
    %v820 = vld [vmem:[%s3 + $0xc10] sm:$0xff]
    %v821 = vld [vmem:[%s3 + $0xc18] sm:$0xff]
    %v822 = vld [vmem:[%s3 + $0xc20] sm:$0xf]
    %v823 = vld [vmem:[%s3 + $0xc24] sm:$0xff]
    %v824 = vld [vmem:[%s3 + $0xc2c] sm:$0xff]
    %v825 = vld [vmem:[%s3 + $0xc34] sm:$0xff]
    %v826 = vld [vmem:[%s3 + $0xc3c] sm:$0xf]
    %v827 = vld [vmem:[%s3 + $0xc40] sm:$0xff]
    %v828 = vld [vmem:[%s3 + $0xc48] sm:$0xff]
    %v829 = vld [vmem:[%s3 + $0xc50] sm:$0xff]
    %v830 = vld [vmem:[%s3 + $0xc58] sm:$0xf]
    %v831 = vld [vmem:[%s3 + $0xc5c] sm:$0xff]
    %v832 = vld [vmem:[%s3 + $0xc64] sm:$0xff]
    %v833 = vld [vmem:[%s3 + $0xc6c] sm:$0xff]
    %v834 = vld [vmem:[%s3 + $0xc74] sm:$0xf]
    %v835 = vld [vmem:[%s3 + $0xc78] sm:$0xff]
    %v836 = vld [vmem:[%s3 + $0xc80] sm:$0xff]
    %v837 = vld [vmem:[%s3 + $0xc88] sm:$0xff]
    %v838 = vld [vmem:[%s3 + $0xc90] sm:$0xf]
    %v839 = vld [vmem:[%s3 + $0xc94] sm:$0xff]
    %v840 = vld [vmem:[%s3 + $0xc9c] sm:$0xff]
    %v841 = vld [vmem:[%s3 + $0xca4] sm:$0xff]
    %v842 = vld [vmem:[%s3 + $0xcac] sm:$0xf]
    %v843 = vld [vmem:[%s3 + $0xcb0] sm:$0xff]
    %v844 = vld [vmem:[%s3 + $0xcb8] sm:$0xff]
    %v845 = vld [vmem:[%s3 + $0xcc0] sm:$0xff]
    %v846 = vld [vmem:[%s3 + $0xcc8] sm:$0xf]
    %v847 = vld [vmem:[%s3 + $0xccc] sm:$0xff]
    %v848 = vld [vmem:[%s3 + $0xcd4] sm:$0xff]
    %v849 = vld [vmem:[%s3 + $0xcdc] sm:$0xff]
    %v850 = vld [vmem:[%s3 + $0xce4] sm:$0xf]
    %v851 = vld [vmem:[%s3 + $0xce8] sm:$0xff]
    %v852 = vld [vmem:[%s3 + $0xcf0] sm:$0xff]
    %v853 = vld [vmem:[%s3 + $0xcf8] sm:$0xff]
    %v854 = vld [vmem:[%s3 + $0xd00] sm:$0xf]
    %v855 = vld [vmem:[%s3 + $0xd04] sm:$0xff]
    %v856 = vld [vmem:[%s3 + $0xd0c] sm:$0xff]
    %v857 = vld [vmem:[%s3 + $0xd14] sm:$0xff]
    %v858 = vld [vmem:[%s3 + $0xd1c] sm:$0xf]
    %v859 = vld [vmem:[%s3 + $0xd20] sm:$0xff]
    %v860 = vld [vmem:[%s3 + $0xd28] sm:$0xff]
    %v861 = vld [vmem:[%s3 + $0xd30] sm:$0xff]
    %v862 = vld [vmem:[%s3 + $0xd38] sm:$0xf]
    %v863 = vld [vmem:[%s3 + $0xd3c] sm:$0xff]
    %v864 = vld [vmem:[%s3 + $0xd44] sm:$0xff]
    %v865 = vld [vmem:[%s3 + $0xd4c] sm:$0xff]
    %v866 = vld [vmem:[%s3 + $0xd54] sm:$0xf]
    %v867 = vld [vmem:[%s3 + $0xd58] sm:$0xff]
    %v868 = vld [vmem:[%s3 + $0xd60] sm:$0xff]
    %v869 = vld [vmem:[%s3 + $0xd68] sm:$0xff]
    %v870 = vld [vmem:[%s3 + $0xd70] sm:$0xf]
    %v871 = vld [vmem:[%s3 + $0xd74] sm:$0xff]
    %v872 = vld [vmem:[%s3 + $0xd7c] sm:$0xff]
    %v873 = vld [vmem:[%s3 + $0xd84] sm:$0xff]
    %v874 = vld [vmem:[%s3 + $0xd8c] sm:$0xf]
    %v875 = vld [vmem:[%s3 + $0xd90] sm:$0xff]
    %v876 = vld [vmem:[%s3 + $0xd98] sm:$0xff]
    %v877 = vld [vmem:[%s3 + $0xda0] sm:$0xff]
    %v878 = vld [vmem:[%s3 + $0xda8] sm:$0xf]
    %v879 = vld [vmem:[%s3 + $0xdac] sm:$0xff]
    %v880 = vld [vmem:[%s3 + $0xdb4] sm:$0xff]
    %v881 = vld [vmem:[%s3 + $0xdbc] sm:$0xff]
    %v882 = vld [vmem:[%s3 + $0xdc4] sm:$0xf]
    %v883 = vld [vmem:[%s3 + $0xdc8] sm:$0xff]
    %v884 = vld [vmem:[%s3 + $0xdd0] sm:$0xff]
    %v885 = vld [vmem:[%s3 + $0xdd8] sm:$0xff]
    %v886 = vld [vmem:[%s3 + $0xde0] sm:$0xf]
    %v887 = vld [vmem:[%s3 + $0xde4] sm:$0xff]
    %v888 = vld [vmem:[%s3 + $0xdec] sm:$0xff]
    %v889 = vld [vmem:[%s3 + $0xdf4] sm:$0xff]
    %v890 = vld [vmem:[%s3 + $0xdfc] sm:$0xf]
    %v891 = vld [vmem:[%s4] sm:$0x7f]
    %v893 = vlaneseq
    %v894 = vshrl.u32 %v893, 7
    %v895 = vsub.s32 0, %v894
    %v896 = vrot.slane %v891, %v895
    %v897 = vlaneseq
    %v898 = vshrl.u32 %v897, 7
    %v899 = vsub.s32 1, %v898
    %v900 = vrot.slane %v891, %v899
    %v901 = vlaneseq
    %v902 = vshrl.u32 %v901, 7
    %v903 = vsub.s32 2, %v902
    %v904 = vrot.slane %v891, %v903
    %v905 = vlaneseq
    %v906 = vshrl.u32 %v905, 7
    %v907 = vsub.s32 3, %v906
    %v908 = vrot.slane %v891, %v907
    %v909 = vlaneseq
    %v910 = vshrl.u32 %v909, 7
    %v911 = vsub.s32 4, %v910
    %v912 = vrot.slane %v891, %v911
    %v913 = vlaneseq
    %v914 = vshrl.u32 %v913, 7
    %v915 = vsub.s32 5, %v914
    %v916 = vrot.slane %v891, %v915
    %v917 = vlaneseq
    %v918 = vshrl.u32 %v917, 7
    %v919 = vsub.s32 6, %v918
    %v920 = vrot.slane %v891, %v919
    %v932 = vunpack.c.l.b16 %v375
    %v933 = vunpack.c.h.b16 %v375
    %v934 = vunpack.c.l.b16 %v376
    %v935 = vunpack.c.h.b16 %v376
    %v936 = vunpack.c.l.b16 %v377
    %v937 = vunpack.c.h.b16 %v377
    %v938 = vunpack.c.l.b16 %v378
    %v939 = vunpack.c.h.b16 %v378
    %v940 = vpack.c.b16 %v932, %v932
    %v941 = vpack.c.b16 %v933, %v933
    %v942 = vpack.c.b16 %v934, %v934
    %v943 = vpack.c.b16 %v935, %v935
    %v944 = vpack.c.b16 %v936, %v936
    %v945 = vpack.c.b16 %v937, %v937
    %v946 = vpack.c.b16 %v938, %v938
    %v947 = vpack.c.b16 %v939, %v939
    %v1468 = vunpack.c.l.b16 %v379
    %v1469 = vunpack.c.h.b16 %v379
    %v1470 = vunpack.c.l.b16 %v380
    %v1471 = vunpack.c.h.b16 %v380
    %v1472 = vunpack.c.l.b16 %v381
    %v1473 = vunpack.c.h.b16 %v381
    %v1474 = vunpack.c.l.b16 %v382
    %v1475 = vunpack.c.l.b16 %v383
    %v1476 = vunpack.c.h.b16 %v383
    %v1477 = vunpack.c.l.b16 %v384
    %v1478 = vunpack.c.h.b16 %v384
    %v1479 = vunpack.c.l.b16 %v385
    %v1480 = vunpack.c.h.b16 %v385
    %v1481 = vunpack.c.l.b16 %v386
    %v1482 = vunpack.c.l.b16 %v387
    %v1483 = vunpack.c.h.b16 %v387
    %v1484 = vunpack.c.l.b16 %v388
    %v1485 = vunpack.c.h.b16 %v388
    %v1486 = vunpack.c.l.b16 %v389
    %v1487 = vunpack.c.h.b16 %v389
    %v1488 = vunpack.c.l.b16 %v390
    %v1489 = vunpack.c.l.b16 %v391
    %v1490 = vunpack.c.h.b16 %v391
    %v1491 = vunpack.c.l.b16 %v392
    %v1492 = vunpack.c.h.b16 %v392
    %v1493 = vunpack.c.l.b16 %v393
    %v1494 = vunpack.c.h.b16 %v393
    %v1495 = vunpack.c.l.b16 %v394
    %v1496 = vunpack.c.l.b16 %v395
    %v1497 = vunpack.c.h.b16 %v395
    %v1498 = vunpack.c.l.b16 %v396
    %v1499 = vunpack.c.h.b16 %v396
    %v1500 = vunpack.c.l.b16 %v397
    %v1501 = vunpack.c.h.b16 %v397
    %v1502 = vunpack.c.l.b16 %v398
    %v1503 = vunpack.c.l.b16 %v399
    %v1504 = vunpack.c.h.b16 %v399
    %v1505 = vunpack.c.l.b16 %v400
    %v1506 = vunpack.c.h.b16 %v400
    %v1507 = vunpack.c.l.b16 %v401
    %v1508 = vunpack.c.h.b16 %v401
    %v1509 = vunpack.c.l.b16 %v402
    %v1510 = vunpack.c.l.b16 %v403
    %v1511 = vunpack.c.h.b16 %v403
    %v1512 = vunpack.c.l.b16 %v404
    %v1513 = vunpack.c.h.b16 %v404
    %v1514 = vunpack.c.l.b16 %v405
    %v1515 = vunpack.c.h.b16 %v405
    %v1516 = vunpack.c.l.b16 %v406
    %v1517 = vunpack.c.l.b16 %v407
    %v1518 = vunpack.c.h.b16 %v407
    %v1519 = vunpack.c.l.b16 %v408
    %v1520 = vunpack.c.h.b16 %v408
    %v1521 = vunpack.c.l.b16 %v409
    %v1522 = vunpack.c.h.b16 %v409
    %v1523 = vunpack.c.l.b16 %v410
    %v1524 = vunpack.c.l.b16 %v411
    %v1525 = vunpack.c.h.b16 %v411
    %v1526 = vunpack.c.l.b16 %v412
    %v1527 = vunpack.c.h.b16 %v412
    %v1528 = vunpack.c.l.b16 %v413
    %v1529 = vunpack.c.h.b16 %v413
    %v1530 = vunpack.c.l.b16 %v414
    %v1531 = vunpack.c.l.b16 %v415
    %v1532 = vunpack.c.h.b16 %v415
    %v1533 = vunpack.c.l.b16 %v416
    %v1534 = vunpack.c.h.b16 %v416
    %v1535 = vunpack.c.l.b16 %v417
    %v1536 = vunpack.c.h.b16 %v417
    %v1537 = vunpack.c.l.b16 %v418
    %v1538 = vunpack.c.l.b16 %v419
    %v1539 = vunpack.c.h.b16 %v419
    %v1540 = vunpack.c.l.b16 %v420
    %v1541 = vunpack.c.h.b16 %v420
    %v1542 = vunpack.c.l.b16 %v421
    %v1543 = vunpack.c.h.b16 %v421
    %v1544 = vunpack.c.l.b16 %v422
    %v1545 = vunpack.c.l.b16 %v423
    %v1546 = vunpack.c.h.b16 %v423
    %v1547 = vunpack.c.l.b16 %v424
    %v1548 = vunpack.c.h.b16 %v424
    %v1549 = vunpack.c.l.b16 %v425
    %v1550 = vunpack.c.h.b16 %v425
    %v1551 = vunpack.c.l.b16 %v426
    %v1552 = vunpack.c.l.b16 %v427
    %v1553 = vunpack.c.h.b16 %v427
    %v1554 = vunpack.c.l.b16 %v428
    %v1555 = vunpack.c.h.b16 %v428
    %v1556 = vunpack.c.l.b16 %v429
    %v1557 = vunpack.c.h.b16 %v429
    %v1558 = vunpack.c.l.b16 %v430
    %v1559 = vunpack.c.l.b16 %v431
    %v1560 = vunpack.c.h.b16 %v431
    %v1561 = vunpack.c.l.b16 %v432
    %v1562 = vunpack.c.h.b16 %v432
    %v1563 = vunpack.c.l.b16 %v433
    %v1564 = vunpack.c.h.b16 %v433
    %v1565 = vunpack.c.l.b16 %v434
    %v1566 = vunpack.c.l.b16 %v435
    %v1567 = vunpack.c.h.b16 %v435
    %v1568 = vunpack.c.l.b16 %v436
    %v1569 = vunpack.c.h.b16 %v436
    %v1570 = vunpack.c.l.b16 %v437
    %v1571 = vunpack.c.h.b16 %v437
    %v1572 = vunpack.c.l.b16 %v438
    %v1573 = vunpack.c.l.b16 %v439
    %v1574 = vunpack.c.h.b16 %v439
    %v1575 = vunpack.c.l.b16 %v440
    %v1576 = vunpack.c.h.b16 %v440
    %v1577 = vunpack.c.l.b16 %v441
    %v1578 = vunpack.c.h.b16 %v441
    %v1579 = vunpack.c.l.b16 %v442
    %v1580 = vunpack.c.l.b16 %v443
    %v1581 = vunpack.c.h.b16 %v443
    %v1582 = vunpack.c.l.b16 %v444
    %v1583 = vunpack.c.h.b16 %v444
    %v1584 = vunpack.c.l.b16 %v445
    %v1585 = vunpack.c.h.b16 %v445
    %v1586 = vunpack.c.l.b16 %v446
    %v1587 = vunpack.c.l.b16 %v447
    %v1588 = vunpack.c.h.b16 %v447
    %v1589 = vunpack.c.l.b16 %v448
    %v1590 = vunpack.c.h.b16 %v448
    %v1591 = vunpack.c.l.b16 %v449
    %v1592 = vunpack.c.h.b16 %v449
    %v1593 = vunpack.c.l.b16 %v450
    %v1594 = vunpack.c.l.b16 %v451
    %v1595 = vunpack.c.h.b16 %v451
    %v1596 = vunpack.c.l.b16 %v452
    %v1597 = vunpack.c.h.b16 %v452
    %v1598 = vunpack.c.l.b16 %v453
    %v1599 = vunpack.c.h.b16 %v453
    %v1600 = vunpack.c.l.b16 %v454
    %v1601 = vunpack.c.l.b16 %v455
    %v1602 = vunpack.c.h.b16 %v455
    %v1603 = vunpack.c.l.b16 %v456
    %v1604 = vunpack.c.h.b16 %v456
    %v1605 = vunpack.c.l.b16 %v457
    %v1606 = vunpack.c.h.b16 %v457
    %v1607 = vunpack.c.l.b16 %v458
    %v1608 = vunpack.c.l.b16 %v459
    %v1609 = vunpack.c.h.b16 %v459
    %v1610 = vunpack.c.l.b16 %v460
    %v1611 = vunpack.c.h.b16 %v460
    %v1612 = vunpack.c.l.b16 %v461
    %v1613 = vunpack.c.h.b16 %v461
    %v1614 = vunpack.c.l.b16 %v462
    %v1615 = vunpack.c.l.b16 %v463
    %v1616 = vunpack.c.h.b16 %v463
    %v1617 = vunpack.c.l.b16 %v464
    %v1618 = vunpack.c.h.b16 %v464
    %v1619 = vunpack.c.l.b16 %v465
    %v1620 = vunpack.c.h.b16 %v465
    %v1621 = vunpack.c.l.b16 %v466
    %v1622 = vunpack.c.l.b16 %v467
    %v1623 = vunpack.c.h.b16 %v467
    %v1624 = vunpack.c.l.b16 %v468
    %v1625 = vunpack.c.h.b16 %v468
    %v1626 = vunpack.c.l.b16 %v469
    %v1627 = vunpack.c.h.b16 %v469
    %v1628 = vunpack.c.l.b16 %v470
    %v1629 = vunpack.c.l.b16 %v471
    %v1630 = vunpack.c.h.b16 %v471
    %v1631 = vunpack.c.l.b16 %v472
    %v1632 = vunpack.c.h.b16 %v472
    %v1633 = vunpack.c.l.b16 %v473
    %v1634 = vunpack.c.h.b16 %v473
    %v1635 = vunpack.c.l.b16 %v474
    %v1636 = vunpack.c.l.b16 %v475
    %v1637 = vunpack.c.h.b16 %v475
    %v1638 = vunpack.c.l.b16 %v476
    %v1639 = vunpack.c.h.b16 %v476
    %v1640 = vunpack.c.l.b16 %v477
    %v1641 = vunpack.c.h.b16 %v477
    %v1642 = vunpack.c.l.b16 %v478
    %v1643 = vunpack.c.l.b16 %v479
    %v1644 = vunpack.c.h.b16 %v479
    %v1645 = vunpack.c.l.b16 %v480
    %v1646 = vunpack.c.h.b16 %v480
    %v1647 = vunpack.c.l.b16 %v481
    %v1648 = vunpack.c.h.b16 %v481
    %v1649 = vunpack.c.l.b16 %v482
    %v1650 = vunpack.c.l.b16 %v483
    %v1651 = vunpack.c.h.b16 %v483
    %v1652 = vunpack.c.l.b16 %v484
    %v1653 = vunpack.c.h.b16 %v484
    %v1654 = vunpack.c.l.b16 %v485
    %v1655 = vunpack.c.h.b16 %v485
    %v1656 = vunpack.c.l.b16 %v486
    %v1657 = vunpack.c.l.b16 %v487
    %v1658 = vunpack.c.h.b16 %v487
    %v1659 = vunpack.c.l.b16 %v488
    %v1660 = vunpack.c.h.b16 %v488
    %v1661 = vunpack.c.l.b16 %v489
    %v1662 = vunpack.c.h.b16 %v489
    %v1663 = vunpack.c.l.b16 %v490
    %v1664 = vunpack.c.l.b16 %v491
    %v1665 = vunpack.c.h.b16 %v491
    %v1666 = vunpack.c.l.b16 %v492
    %v1667 = vunpack.c.h.b16 %v492
    %v1668 = vunpack.c.l.b16 %v493
    %v1669 = vunpack.c.h.b16 %v493
    %v1670 = vunpack.c.l.b16 %v494
    %v1671 = vunpack.c.l.b16 %v495
    %v1672 = vunpack.c.h.b16 %v495
    %v1673 = vunpack.c.l.b16 %v496
    %v1674 = vunpack.c.h.b16 %v496
    %v1675 = vunpack.c.l.b16 %v497
    %v1676 = vunpack.c.h.b16 %v497
    %v1677 = vunpack.c.l.b16 %v498
    %v1678 = vunpack.c.l.b16 %v499
    %v1679 = vunpack.c.h.b16 %v499
    %v1680 = vunpack.c.l.b16 %v500
    %v1681 = vunpack.c.h.b16 %v500
    %v1682 = vunpack.c.l.b16 %v501
    %v1683 = vunpack.c.h.b16 %v501
    %v1684 = vunpack.c.l.b16 %v502
    %v1685 = vunpack.c.l.b16 %v503
    %v1686 = vunpack.c.h.b16 %v503
    %v1687 = vunpack.c.l.b16 %v504
    %v1688 = vunpack.c.h.b16 %v504
    %v1689 = vunpack.c.l.b16 %v505
    %v1690 = vunpack.c.h.b16 %v505
    %v1691 = vunpack.c.l.b16 %v506
    %v1692 = vunpack.c.l.b16 %v507
    %v1693 = vunpack.c.h.b16 %v507
    %v1694 = vunpack.c.l.b16 %v508
    %v1695 = vunpack.c.h.b16 %v508
    %v1696 = vunpack.c.l.b16 %v509
    %v1697 = vunpack.c.h.b16 %v509
    %v1698 = vunpack.c.l.b16 %v510
    %v1699 = vunpack.c.l.b16 %v511
    %v1700 = vunpack.c.h.b16 %v511
    %v1701 = vunpack.c.l.b16 %v512
    %v1702 = vunpack.c.h.b16 %v512
    %v1703 = vunpack.c.l.b16 %v513
    %v1704 = vunpack.c.h.b16 %v513
    %v1705 = vunpack.c.l.b16 %v514
    %v1706 = vunpack.c.l.b16 %v515
    %v1707 = vunpack.c.h.b16 %v515
    %v1708 = vunpack.c.l.b16 %v516
    %v1709 = vunpack.c.h.b16 %v516
    %v1710 = vunpack.c.l.b16 %v517
    %v1711 = vunpack.c.h.b16 %v517
    %v1712 = vunpack.c.l.b16 %v518
    %v1713 = vunpack.c.l.b16 %v519
    %v1714 = vunpack.c.h.b16 %v519
    %v1715 = vunpack.c.l.b16 %v520
    %v1716 = vunpack.c.h.b16 %v520
    %v1717 = vunpack.c.l.b16 %v521
    %v1718 = vunpack.c.h.b16 %v521
    %v1719 = vunpack.c.l.b16 %v522
    %v1720 = vunpack.c.l.b16 %v523
    %v1721 = vunpack.c.h.b16 %v523
    %v1722 = vunpack.c.l.b16 %v524
    %v1723 = vunpack.c.h.b16 %v524
    %v1724 = vunpack.c.l.b16 %v525
    %v1725 = vunpack.c.h.b16 %v525
    %v1726 = vunpack.c.l.b16 %v526
    %v1727 = vunpack.c.l.b16 %v527
    %v1728 = vunpack.c.h.b16 %v527
    %v1729 = vunpack.c.l.b16 %v528
    %v1730 = vunpack.c.h.b16 %v528
    %v1731 = vunpack.c.l.b16 %v529
    %v1732 = vunpack.c.h.b16 %v529
    %v1733 = vunpack.c.l.b16 %v530
    %v1734 = vunpack.c.l.b16 %v531
    %v1735 = vunpack.c.h.b16 %v531
    %v1736 = vunpack.c.l.b16 %v532
    %v1737 = vunpack.c.h.b16 %v532
    %v1738 = vunpack.c.l.b16 %v533
    %v1739 = vunpack.c.h.b16 %v533
    %v1740 = vunpack.c.l.b16 %v534
    %v1741 = vunpack.c.l.b16 %v535
    %v1742 = vunpack.c.h.b16 %v535
    %v1743 = vunpack.c.l.b16 %v536
    %v1744 = vunpack.c.h.b16 %v536
    %v1745 = vunpack.c.l.b16 %v537
    %v1746 = vunpack.c.h.b16 %v537
    %v1747 = vunpack.c.l.b16 %v538
    %v1748 = vunpack.c.l.b16 %v539
    %v1749 = vunpack.c.h.b16 %v539
    %v1750 = vunpack.c.l.b16 %v540
    %v1751 = vunpack.c.h.b16 %v540
    %v1752 = vunpack.c.l.b16 %v541
    %v1753 = vunpack.c.h.b16 %v541
    %v1754 = vunpack.c.l.b16 %v542
    %v1755 = vunpack.c.l.b16 %v543
    %v1756 = vunpack.c.h.b16 %v543
    %v1757 = vunpack.c.l.b16 %v544
    %v1758 = vunpack.c.h.b16 %v544
    %v1759 = vunpack.c.l.b16 %v545
    %v1760 = vunpack.c.h.b16 %v545
    %v1761 = vunpack.c.l.b16 %v546
    %v1762 = vunpack.c.l.b16 %v547
    %v1763 = vunpack.c.h.b16 %v547
    %v1764 = vunpack.c.l.b16 %v548
    %v1765 = vunpack.c.h.b16 %v548
    %v1766 = vunpack.c.l.b16 %v549
    %v1767 = vunpack.c.h.b16 %v549
    %v1768 = vunpack.c.l.b16 %v550
    %v1769 = vunpack.c.l.b16 %v551
    %v1770 = vunpack.c.h.b16 %v551
    %v1771 = vunpack.c.l.b16 %v552
    %v1772 = vunpack.c.h.b16 %v552
    %v1773 = vunpack.c.l.b16 %v553
    %v1774 = vunpack.c.h.b16 %v553
    %v1775 = vunpack.c.l.b16 %v554
    %v1776 = vunpack.c.l.b16 %v555
    %v1777 = vunpack.c.h.b16 %v555
    %v1778 = vunpack.c.l.b16 %v556
    %v1779 = vunpack.c.h.b16 %v556
    %v1780 = vunpack.c.l.b16 %v557
    %v1781 = vunpack.c.h.b16 %v557
    %v1782 = vunpack.c.l.b16 %v558
    %v1783 = vunpack.c.l.b16 %v559
    %v1784 = vunpack.c.h.b16 %v559
    %v1785 = vunpack.c.l.b16 %v560
    %v1786 = vunpack.c.h.b16 %v560
    %v1787 = vunpack.c.l.b16 %v561
    %v1788 = vunpack.c.h.b16 %v561
    %v1789 = vunpack.c.l.b16 %v562
    %v1790 = vunpack.c.l.b16 %v563
    %v1791 = vunpack.c.h.b16 %v563
    %v1792 = vunpack.c.l.b16 %v564
    %v1793 = vunpack.c.h.b16 %v564
    %v1794 = vunpack.c.l.b16 %v565
    %v1795 = vunpack.c.h.b16 %v565
    %v1796 = vunpack.c.l.b16 %v566
    %v1797 = vunpack.c.l.b16 %v567
    %v1798 = vunpack.c.h.b16 %v567
    %v1799 = vunpack.c.l.b16 %v568
    %v1800 = vunpack.c.h.b16 %v568
    %v1801 = vunpack.c.l.b16 %v569
    %v1802 = vunpack.c.h.b16 %v569
    %v1803 = vunpack.c.l.b16 %v570
    %v1804 = vunpack.c.l.b16 %v571
    %v1805 = vunpack.c.h.b16 %v571
    %v1806 = vunpack.c.l.b16 %v572
    %v1807 = vunpack.c.h.b16 %v572
    %v1808 = vunpack.c.l.b16 %v573
    %v1809 = vunpack.c.h.b16 %v573
    %v1810 = vunpack.c.l.b16 %v574
    %v1811 = vunpack.c.l.b16 %v575
    %v1812 = vunpack.c.h.b16 %v575
    %v1813 = vunpack.c.l.b16 %v576
    %v1814 = vunpack.c.h.b16 %v576
    %v1815 = vunpack.c.l.b16 %v577
    %v1816 = vunpack.c.h.b16 %v577
    %v1817 = vunpack.c.l.b16 %v578
    %v1818 = vunpack.c.l.b16 %v579
    %v1819 = vunpack.c.h.b16 %v579
    %v1820 = vunpack.c.l.b16 %v580
    %v1821 = vunpack.c.h.b16 %v580
    %v1822 = vunpack.c.l.b16 %v581
    %v1823 = vunpack.c.h.b16 %v581
    %v1824 = vunpack.c.l.b16 %v582
    %v1825 = vunpack.c.l.b16 %v583
    %v1826 = vunpack.c.h.b16 %v583
    %v1827 = vunpack.c.l.b16 %v584
    %v1828 = vunpack.c.h.b16 %v584
    %v1829 = vunpack.c.l.b16 %v585
    %v1830 = vunpack.c.h.b16 %v585
    %v1831 = vunpack.c.l.b16 %v586
    %v1832 = vunpack.c.l.b16 %v587
    %v1833 = vunpack.c.h.b16 %v587
    %v1834 = vunpack.c.l.b16 %v588
    %v1835 = vunpack.c.h.b16 %v588
    %v1836 = vunpack.c.l.b16 %v589
    %v1837 = vunpack.c.h.b16 %v589
    %v1838 = vunpack.c.l.b16 %v590
    %v1839 = vunpack.c.l.b16 %v591
    %v1840 = vunpack.c.h.b16 %v591
    %v1841 = vunpack.c.l.b16 %v592
    %v1842 = vunpack.c.h.b16 %v592
    %v1843 = vunpack.c.l.b16 %v593
    %v1844 = vunpack.c.h.b16 %v593
    %v1845 = vunpack.c.l.b16 %v594
    %v1846 = vunpack.c.l.b16 %v595
    %v1847 = vunpack.c.h.b16 %v595
    %v1848 = vunpack.c.l.b16 %v596
    %v1849 = vunpack.c.h.b16 %v596
    %v1850 = vunpack.c.l.b16 %v597
    %v1851 = vunpack.c.h.b16 %v597
    %v1852 = vunpack.c.l.b16 %v598
    %v1853 = vunpack.c.l.b16 %v599
    %v1854 = vunpack.c.h.b16 %v599
    %v1855 = vunpack.c.l.b16 %v600
    %v1856 = vunpack.c.h.b16 %v600
    %v1857 = vunpack.c.l.b16 %v601
    %v1858 = vunpack.c.h.b16 %v601
    %v1859 = vunpack.c.l.b16 %v602
    %v1860 = vunpack.c.l.b16 %v603
    %v1861 = vunpack.c.h.b16 %v603
    %v1862 = vunpack.c.l.b16 %v604
    %v1863 = vunpack.c.h.b16 %v604
    %v1864 = vunpack.c.l.b16 %v605
    %v1865 = vunpack.c.h.b16 %v605
    %v1866 = vunpack.c.l.b16 %v606
    %v1867 = vunpack.c.l.b16 %v607
    %v1868 = vunpack.c.h.b16 %v607
    %v1869 = vunpack.c.l.b16 %v608
    %v1870 = vunpack.c.h.b16 %v608
    %v1871 = vunpack.c.l.b16 %v609
    %v1872 = vunpack.c.h.b16 %v609
    %v1873 = vunpack.c.l.b16 %v610
    %v1874 = vunpack.c.l.b16 %v611
    %v1875 = vunpack.c.h.b16 %v611
    %v1876 = vunpack.c.l.b16 %v612
    %v1877 = vunpack.c.h.b16 %v612
    %v1878 = vunpack.c.l.b16 %v613
    %v1879 = vunpack.c.h.b16 %v613
    %v1880 = vunpack.c.l.b16 %v614
    %v1881 = vunpack.c.l.b16 %v615
    %v1882 = vunpack.c.h.b16 %v615
    %v1883 = vunpack.c.l.b16 %v616
    %v1884 = vunpack.c.h.b16 %v616
    %v1885 = vunpack.c.l.b16 %v617
    %v1886 = vunpack.c.h.b16 %v617
    %v1887 = vunpack.c.l.b16 %v618
    %v1888 = vunpack.c.l.b16 %v619
    %v1889 = vunpack.c.h.b16 %v619
    %v1890 = vunpack.c.l.b16 %v620
    %v1891 = vunpack.c.h.b16 %v620
    %v1892 = vunpack.c.l.b16 %v621
    %v1893 = vunpack.c.h.b16 %v621
    %v1894 = vunpack.c.l.b16 %v622
    %v1895 = vunpack.c.l.b16 %v623
    %v1896 = vunpack.c.h.b16 %v623
    %v1897 = vunpack.c.l.b16 %v624
    %v1898 = vunpack.c.h.b16 %v624
    %v1899 = vunpack.c.l.b16 %v625
    %v1900 = vunpack.c.h.b16 %v625
    %v1901 = vunpack.c.l.b16 %v626
    %v1902 = vunpack.c.l.b16 %v627
    %v1903 = vunpack.c.h.b16 %v627
    %v1904 = vunpack.c.l.b16 %v628
    %v1905 = vunpack.c.h.b16 %v628
    %v1906 = vunpack.c.l.b16 %v629
    %v1907 = vunpack.c.h.b16 %v629
    %v1908 = vunpack.c.l.b16 %v630
    %v1909 = vunpack.c.l.b16 %v631
    %v1910 = vunpack.c.h.b16 %v631
    %v1911 = vunpack.c.l.b16 %v632
    %v1912 = vunpack.c.h.b16 %v632
    %v1913 = vunpack.c.l.b16 %v633
    %v1914 = vunpack.c.h.b16 %v633
    %v1915 = vunpack.c.l.b16 %v634
    %v1916 = vunpack.c.l.b16 %v635
    %v1917 = vunpack.c.h.b16 %v635
    %v1918 = vunpack.c.l.b16 %v636
    %v1919 = vunpack.c.h.b16 %v636
    %v1920 = vunpack.c.l.b16 %v637
    %v1921 = vunpack.c.h.b16 %v637
    %v1922 = vunpack.c.l.b16 %v638
    %v1923 = vunpack.c.l.b16 %v639
    %v1924 = vunpack.c.h.b16 %v639
    %v1925 = vunpack.c.l.b16 %v640
    %v1926 = vunpack.c.h.b16 %v640
    %v1927 = vunpack.c.l.b16 %v641
    %v1928 = vunpack.c.h.b16 %v641
    %v1929 = vunpack.c.l.b16 %v642
    %v1930 = vunpack.c.l.b16 %v643
    %v1931 = vunpack.c.h.b16 %v643
    %v1932 = vunpack.c.l.b16 %v644
    %v1933 = vunpack.c.h.b16 %v644
    %v1934 = vunpack.c.l.b16 %v645
    %v1935 = vunpack.c.h.b16 %v645
    %v1936 = vunpack.c.l.b16 %v646
    %v1937 = vunpack.c.l.b16 %v647
    %v1938 = vunpack.c.h.b16 %v647
    %v1939 = vunpack.c.l.b16 %v648
    %v1940 = vunpack.c.h.b16 %v648
    %v1941 = vunpack.c.l.b16 %v649
    %v1942 = vunpack.c.h.b16 %v649
    %v1943 = vunpack.c.l.b16 %v650
    %v1944 = vunpack.c.l.b16 %v651
    %v1945 = vunpack.c.h.b16 %v651
    %v1946 = vunpack.c.l.b16 %v652
    %v1947 = vunpack.c.h.b16 %v652
    %v1948 = vunpack.c.l.b16 %v653
    %v1949 = vunpack.c.h.b16 %v653
    %v1950 = vunpack.c.l.b16 %v654
    %v1951 = vunpack.c.l.b16 %v655
    %v1952 = vunpack.c.h.b16 %v655
    %v1953 = vunpack.c.l.b16 %v656
    %v1954 = vunpack.c.h.b16 %v656
    %v1955 = vunpack.c.l.b16 %v657
    %v1956 = vunpack.c.h.b16 %v657
    %v1957 = vunpack.c.l.b16 %v658
    %v1958 = vunpack.c.l.b16 %v659
    %v1959 = vunpack.c.h.b16 %v659
    %v1960 = vunpack.c.l.b16 %v660
    %v1961 = vunpack.c.h.b16 %v660
    %v1962 = vunpack.c.l.b16 %v661
    %v1963 = vunpack.c.h.b16 %v661
    %v1964 = vunpack.c.l.b16 %v662
    %v1965 = vunpack.c.l.b16 %v663
    %v1966 = vunpack.c.h.b16 %v663
    %v1967 = vunpack.c.l.b16 %v664
    %v1968 = vunpack.c.h.b16 %v664
    %v1969 = vunpack.c.l.b16 %v665
    %v1970 = vunpack.c.h.b16 %v665
    %v1971 = vunpack.c.l.b16 %v666
    %v1972 = vunpack.c.l.b16 %v667
    %v1973 = vunpack.c.h.b16 %v667
    %v1974 = vunpack.c.l.b16 %v668
    %v1975 = vunpack.c.h.b16 %v668
    %v1976 = vunpack.c.l.b16 %v669
    %v1977 = vunpack.c.h.b16 %v669
    %v1978 = vunpack.c.l.b16 %v670
    %v1979 = vunpack.c.l.b16 %v671
    %v1980 = vunpack.c.h.b16 %v671
    %v1981 = vunpack.c.l.b16 %v672
    %v1982 = vunpack.c.h.b16 %v672
    %v1983 = vunpack.c.l.b16 %v673
    %v1984 = vunpack.c.h.b16 %v673
    %v1985 = vunpack.c.l.b16 %v674
    %v1986 = vunpack.c.l.b16 %v675
    %v1987 = vunpack.c.h.b16 %v675
    %v1988 = vunpack.c.l.b16 %v676
    %v1989 = vunpack.c.h.b16 %v676
    %v1990 = vunpack.c.l.b16 %v677
    %v1991 = vunpack.c.h.b16 %v677
    %v1992 = vunpack.c.l.b16 %v678
    %v1993 = vunpack.c.l.b16 %v679
    %v1994 = vunpack.c.h.b16 %v679
    %v1995 = vunpack.c.l.b16 %v680
    %v1996 = vunpack.c.h.b16 %v680
    %v1997 = vunpack.c.l.b16 %v681
    %v1998 = vunpack.c.h.b16 %v681
    %v1999 = vunpack.c.l.b16 %v682
    %v2000 = vunpack.c.l.b16 %v683
    %v2001 = vunpack.c.h.b16 %v683
    %v2002 = vunpack.c.l.b16 %v684
    %v2003 = vunpack.c.h.b16 %v684
    %v2004 = vunpack.c.l.b16 %v685
    %v2005 = vunpack.c.h.b16 %v685
    %v2006 = vunpack.c.l.b16 %v686
    %v2007 = vunpack.c.l.b16 %v687
    %v2008 = vunpack.c.h.b16 %v687
    %v2009 = vunpack.c.l.b16 %v688
    %v2010 = vunpack.c.h.b16 %v688
    %v2011 = vunpack.c.l.b16 %v689
    %v2012 = vunpack.c.h.b16 %v689
    %v2013 = vunpack.c.l.b16 %v690
    %v2014 = vunpack.c.l.b16 %v691
    %v2015 = vunpack.c.h.b16 %v691
    %v2016 = vunpack.c.l.b16 %v692
    %v2017 = vunpack.c.h.b16 %v692
    %v2018 = vunpack.c.l.b16 %v693
    %v2019 = vunpack.c.h.b16 %v693
    %v2020 = vunpack.c.l.b16 %v694
    %v2021 = vunpack.c.l.b16 %v695
    %v2022 = vunpack.c.h.b16 %v695
    %v2023 = vunpack.c.l.b16 %v696
    %v2024 = vunpack.c.h.b16 %v696
    %v2025 = vunpack.c.l.b16 %v697
    %v2026 = vunpack.c.h.b16 %v697
    %v2027 = vunpack.c.l.b16 %v698
    %v2028 = vunpack.c.l.b16 %v699
    %v2029 = vunpack.c.h.b16 %v699
    %v2030 = vunpack.c.l.b16 %v700
    %v2031 = vunpack.c.h.b16 %v700
    %v2032 = vunpack.c.l.b16 %v701
    %v2033 = vunpack.c.h.b16 %v701
    %v2034 = vunpack.c.l.b16 %v702
    %v2035 = vunpack.c.l.b16 %v703
    %v2036 = vunpack.c.h.b16 %v703
    %v2037 = vunpack.c.l.b16 %v704
    %v2038 = vunpack.c.h.b16 %v704
    %v2039 = vunpack.c.l.b16 %v705
    %v2040 = vunpack.c.h.b16 %v705
    %v2041 = vunpack.c.l.b16 %v706
    %v2042 = vunpack.c.l.b16 %v707
    %v2043 = vunpack.c.h.b16 %v707
    %v2044 = vunpack.c.l.b16 %v708
    %v2045 = vunpack.c.h.b16 %v708
    %v2046 = vunpack.c.l.b16 %v709
    %v2047 = vunpack.c.h.b16 %v709
    %v2048 = vunpack.c.l.b16 %v710
    %v2049 = vunpack.c.l.b16 %v711
    %v2050 = vunpack.c.h.b16 %v711
    %v2051 = vunpack.c.l.b16 %v712
    %v2052 = vunpack.c.h.b16 %v712
    %v2053 = vunpack.c.l.b16 %v713
    %v2054 = vunpack.c.h.b16 %v713
    %v2055 = vunpack.c.l.b16 %v714
    %v2056 = vunpack.c.l.b16 %v715
    %v2057 = vunpack.c.h.b16 %v715
    %v2058 = vunpack.c.l.b16 %v716
    %v2059 = vunpack.c.h.b16 %v716
    %v2060 = vunpack.c.l.b16 %v717
    %v2061 = vunpack.c.h.b16 %v717
    %v2062 = vunpack.c.l.b16 %v718
    %v2063 = vunpack.c.l.b16 %v719
    %v2064 = vunpack.c.h.b16 %v719
    %v2065 = vunpack.c.l.b16 %v720
    %v2066 = vunpack.c.h.b16 %v720
    %v2067 = vunpack.c.l.b16 %v721
    %v2068 = vunpack.c.h.b16 %v721
    %v2069 = vunpack.c.l.b16 %v722
    %v2070 = vunpack.c.l.b16 %v723
    %v2071 = vunpack.c.h.b16 %v723
    %v2072 = vunpack.c.l.b16 %v724
    %v2073 = vunpack.c.h.b16 %v724
    %v2074 = vunpack.c.l.b16 %v725
    %v2075 = vunpack.c.h.b16 %v725
    %v2076 = vunpack.c.l.b16 %v726
    %v2077 = vunpack.c.l.b16 %v727
    %v2078 = vunpack.c.h.b16 %v727
    %v2079 = vunpack.c.l.b16 %v728
    %v2080 = vunpack.c.h.b16 %v728
    %v2081 = vunpack.c.l.b16 %v729
    %v2082 = vunpack.c.h.b16 %v729
    %v2083 = vunpack.c.l.b16 %v730
    %v2084 = vunpack.c.l.b16 %v731
    %v2085 = vunpack.c.h.b16 %v731
    %v2086 = vunpack.c.l.b16 %v732
    %v2087 = vunpack.c.h.b16 %v732
    %v2088 = vunpack.c.l.b16 %v733
    %v2089 = vunpack.c.h.b16 %v733
    %v2090 = vunpack.c.l.b16 %v734
    %v2091 = vunpack.c.l.b16 %v735
    %v2092 = vunpack.c.h.b16 %v735
    %v2093 = vunpack.c.l.b16 %v736
    %v2094 = vunpack.c.h.b16 %v736
    %v2095 = vunpack.c.l.b16 %v737
    %v2096 = vunpack.c.h.b16 %v737
    %v2097 = vunpack.c.l.b16 %v738
    %v2098 = vunpack.c.l.b16 %v739
    %v2099 = vunpack.c.h.b16 %v739
    %v2100 = vunpack.c.l.b16 %v740
    %v2101 = vunpack.c.h.b16 %v740
    %v2102 = vunpack.c.l.b16 %v741
    %v2103 = vunpack.c.h.b16 %v741
    %v2104 = vunpack.c.l.b16 %v742
    %v2105 = vunpack.c.l.b16 %v743
    %v2106 = vunpack.c.h.b16 %v743
    %v2107 = vunpack.c.l.b16 %v744
    %v2108 = vunpack.c.h.b16 %v744
    %v2109 = vunpack.c.l.b16 %v745
    %v2110 = vunpack.c.h.b16 %v745
    %v2111 = vunpack.c.l.b16 %v746
    %v2112 = vunpack.c.l.b16 %v747
    %v2113 = vunpack.c.h.b16 %v747
    %v2114 = vunpack.c.l.b16 %v748
    %v2115 = vunpack.c.h.b16 %v748
    %v2116 = vunpack.c.l.b16 %v749
    %v2117 = vunpack.c.h.b16 %v749
    %v2118 = vunpack.c.l.b16 %v750
    %v2119 = vunpack.c.l.b16 %v751
    %v2120 = vunpack.c.h.b16 %v751
    %v2121 = vunpack.c.l.b16 %v752
    %v2122 = vunpack.c.h.b16 %v752
    %v2123 = vunpack.c.l.b16 %v753
    %v2124 = vunpack.c.h.b16 %v753
    %v2125 = vunpack.c.l.b16 %v754
    %v2126 = vunpack.c.l.b16 %v755
    %v2127 = vunpack.c.h.b16 %v755
    %v2128 = vunpack.c.l.b16 %v756
    %v2129 = vunpack.c.h.b16 %v756
    %v2130 = vunpack.c.l.b16 %v757
    %v2131 = vunpack.c.h.b16 %v757
    %v2132 = vunpack.c.l.b16 %v758
    %v2133 = vunpack.c.l.b16 %v759
    %v2134 = vunpack.c.h.b16 %v759
    %v2135 = vunpack.c.l.b16 %v760
    %v2136 = vunpack.c.h.b16 %v760
    %v2137 = vunpack.c.l.b16 %v761
    %v2138 = vunpack.c.h.b16 %v761
    %v2139 = vunpack.c.l.b16 %v762
    %v2140 = vunpack.c.l.b16 %v763
    %v2141 = vunpack.c.h.b16 %v763
    %v2142 = vunpack.c.l.b16 %v764
    %v2143 = vunpack.c.h.b16 %v764
    %v2144 = vunpack.c.l.b16 %v765
    %v2145 = vunpack.c.h.b16 %v765
    %v2146 = vunpack.c.l.b16 %v766
    %v2147 = vunpack.c.l.b16 %v767
    %v2148 = vunpack.c.h.b16 %v767
    %v2149 = vunpack.c.l.b16 %v768
    %v2150 = vunpack.c.h.b16 %v768
    %v2151 = vunpack.c.l.b16 %v769
    %v2152 = vunpack.c.h.b16 %v769
    %v2153 = vunpack.c.l.b16 %v770
    %v2154 = vunpack.c.l.b16 %v771
    %v2155 = vunpack.c.h.b16 %v771
    %v2156 = vunpack.c.l.b16 %v772
    %v2157 = vunpack.c.h.b16 %v772
    %v2158 = vunpack.c.l.b16 %v773
    %v2159 = vunpack.c.h.b16 %v773
    %v2160 = vunpack.c.l.b16 %v774
    %v2161 = vunpack.c.l.b16 %v775
    %v2162 = vunpack.c.h.b16 %v775
    %v2163 = vunpack.c.l.b16 %v776
    %v2164 = vunpack.c.h.b16 %v776
    %v2165 = vunpack.c.l.b16 %v777
    %v2166 = vunpack.c.h.b16 %v777
    %v2167 = vunpack.c.l.b16 %v778
    %v2168 = vunpack.c.l.b16 %v779
    %v2169 = vunpack.c.h.b16 %v779
    %v2170 = vunpack.c.l.b16 %v780
    %v2171 = vunpack.c.h.b16 %v780
    %v2172 = vunpack.c.l.b16 %v781
    %v2173 = vunpack.c.h.b16 %v781
    %v2174 = vunpack.c.l.b16 %v782
    %v2175 = vunpack.c.l.b16 %v783
    %v2176 = vunpack.c.h.b16 %v783
    %v2177 = vunpack.c.l.b16 %v784
    %v2178 = vunpack.c.h.b16 %v784
    %v2179 = vunpack.c.l.b16 %v785
    %v2180 = vunpack.c.h.b16 %v785
    %v2181 = vunpack.c.l.b16 %v786
    %v2182 = vunpack.c.l.b16 %v787
    %v2183 = vunpack.c.h.b16 %v787
    %v2184 = vunpack.c.l.b16 %v788
    %v2185 = vunpack.c.h.b16 %v788
    %v2186 = vunpack.c.l.b16 %v789
    %v2187 = vunpack.c.h.b16 %v789
    %v2188 = vunpack.c.l.b16 %v790
    %v2189 = vunpack.c.l.b16 %v791
    %v2190 = vunpack.c.h.b16 %v791
    %v2191 = vunpack.c.l.b16 %v792
    %v2192 = vunpack.c.h.b16 %v792
    %v2193 = vunpack.c.l.b16 %v793
    %v2194 = vunpack.c.h.b16 %v793
    %v2195 = vunpack.c.l.b16 %v794
    %v2196 = vunpack.c.l.b16 %v795
    %v2197 = vunpack.c.h.b16 %v795
    %v2198 = vunpack.c.l.b16 %v796
    %v2199 = vunpack.c.h.b16 %v796
    %v2200 = vunpack.c.l.b16 %v797
    %v2201 = vunpack.c.h.b16 %v797
    %v2202 = vunpack.c.l.b16 %v798
    %v2203 = vunpack.c.l.b16 %v799
    %v2204 = vunpack.c.h.b16 %v799
    %v2205 = vunpack.c.l.b16 %v800
    %v2206 = vunpack.c.h.b16 %v800
    %v2207 = vunpack.c.l.b16 %v801
    %v2208 = vunpack.c.h.b16 %v801
    %v2209 = vunpack.c.l.b16 %v802
    %v2210 = vunpack.c.l.b16 %v803
    %v2211 = vunpack.c.h.b16 %v803
    %v2212 = vunpack.c.l.b16 %v804
    %v2213 = vunpack.c.h.b16 %v804
    %v2214 = vunpack.c.l.b16 %v805
    %v2215 = vunpack.c.h.b16 %v805
    %v2216 = vunpack.c.l.b16 %v806
    %v2217 = vunpack.c.l.b16 %v807
    %v2218 = vunpack.c.h.b16 %v807
    %v2219 = vunpack.c.l.b16 %v808
    %v2220 = vunpack.c.h.b16 %v808
    %v2221 = vunpack.c.l.b16 %v809
    %v2222 = vunpack.c.h.b16 %v809
    %v2223 = vunpack.c.l.b16 %v810
    %v2224 = vunpack.c.l.b16 %v811
    %v2225 = vunpack.c.h.b16 %v811
    %v2226 = vunpack.c.l.b16 %v812
    %v2227 = vunpack.c.h.b16 %v812
    %v2228 = vunpack.c.l.b16 %v813
    %v2229 = vunpack.c.h.b16 %v813
    %v2230 = vunpack.c.l.b16 %v814
    %v2231 = vunpack.c.l.b16 %v815
    %v2232 = vunpack.c.h.b16 %v815
    %v2233 = vunpack.c.l.b16 %v816
    %v2234 = vunpack.c.h.b16 %v816
    %v2235 = vunpack.c.l.b16 %v817
    %v2236 = vunpack.c.h.b16 %v817
    %v2237 = vunpack.c.l.b16 %v818
    %v2238 = vunpack.c.l.b16 %v819
    %v2239 = vunpack.c.h.b16 %v819
    %v2240 = vunpack.c.l.b16 %v820
    %v2241 = vunpack.c.h.b16 %v820
    %v2242 = vunpack.c.l.b16 %v821
    %v2243 = vunpack.c.h.b16 %v821
    %v2244 = vunpack.c.l.b16 %v822
    %v2245 = vunpack.c.l.b16 %v823
    %v2246 = vunpack.c.h.b16 %v823
    %v2247 = vunpack.c.l.b16 %v824
    %v2248 = vunpack.c.h.b16 %v824
    %v2249 = vunpack.c.l.b16 %v825
    %v2250 = vunpack.c.h.b16 %v825
    %v2251 = vunpack.c.l.b16 %v826
    %v2252 = vunpack.c.l.b16 %v827
    %v2253 = vunpack.c.h.b16 %v827
    %v2254 = vunpack.c.l.b16 %v828
    %v2255 = vunpack.c.h.b16 %v828
    %v2256 = vunpack.c.l.b16 %v829
    %v2257 = vunpack.c.h.b16 %v829
    %v2258 = vunpack.c.l.b16 %v830
    %v2259 = vunpack.c.l.b16 %v831
    %v2260 = vunpack.c.h.b16 %v831
    %v2261 = vunpack.c.l.b16 %v832
    %v2262 = vunpack.c.h.b16 %v832
    %v2263 = vunpack.c.l.b16 %v833
    %v2264 = vunpack.c.h.b16 %v833
    %v2265 = vunpack.c.l.b16 %v834
    %v2266 = vunpack.c.l.b16 %v835
    %v2267 = vunpack.c.h.b16 %v835
    %v2268 = vunpack.c.l.b16 %v836
    %v2269 = vunpack.c.h.b16 %v836
    %v2270 = vunpack.c.l.b16 %v837
    %v2271 = vunpack.c.h.b16 %v837
    %v2272 = vunpack.c.l.b16 %v838
    %v2273 = vunpack.c.l.b16 %v839
    %v2274 = vunpack.c.h.b16 %v839
    %v2275 = vunpack.c.l.b16 %v840
    %v2276 = vunpack.c.h.b16 %v840
    %v2277 = vunpack.c.l.b16 %v841
    %v2278 = vunpack.c.h.b16 %v841
    %v2279 = vunpack.c.l.b16 %v842
    %v2280 = vunpack.c.l.b16 %v843
    %v2281 = vunpack.c.h.b16 %v843
    %v2282 = vunpack.c.l.b16 %v844
    %v2283 = vunpack.c.h.b16 %v844
    %v2284 = vunpack.c.l.b16 %v845
    %v2285 = vunpack.c.h.b16 %v845
    %v2286 = vunpack.c.l.b16 %v846
    %v2287 = vunpack.c.l.b16 %v847
    %v2288 = vunpack.c.h.b16 %v847
    %v2289 = vunpack.c.l.b16 %v848
    %v2290 = vunpack.c.h.b16 %v848
    %v2291 = vunpack.c.l.b16 %v849
    %v2292 = vunpack.c.h.b16 %v849
    %v2293 = vunpack.c.l.b16 %v850
    %v2294 = vunpack.c.l.b16 %v851
    %v2295 = vunpack.c.h.b16 %v851
    %v2296 = vunpack.c.l.b16 %v852
    %v2297 = vunpack.c.h.b16 %v852
    %v2298 = vunpack.c.l.b16 %v853
    %v2299 = vunpack.c.h.b16 %v853
    %v2300 = vunpack.c.l.b16 %v854
    %v2301 = vunpack.c.l.b16 %v855
    %v2302 = vunpack.c.h.b16 %v855
    %v2303 = vunpack.c.l.b16 %v856
    %v2304 = vunpack.c.h.b16 %v856
    %v2305 = vunpack.c.l.b16 %v857
    %v2306 = vunpack.c.h.b16 %v857
    %v2307 = vunpack.c.l.b16 %v858
    %v2308 = vunpack.c.l.b16 %v859
    %v2309 = vunpack.c.h.b16 %v859
    %v2310 = vunpack.c.l.b16 %v860
    %v2311 = vunpack.c.h.b16 %v860
    %v2312 = vunpack.c.l.b16 %v861
    %v2313 = vunpack.c.h.b16 %v861
    %v2314 = vunpack.c.l.b16 %v862
    %v2315 = vunpack.c.l.b16 %v863
    %v2316 = vunpack.c.h.b16 %v863
    %v2317 = vunpack.c.l.b16 %v864
    %v2318 = vunpack.c.h.b16 %v864
    %v2319 = vunpack.c.l.b16 %v865
    %v2320 = vunpack.c.h.b16 %v865
    %v2321 = vunpack.c.l.b16 %v866
    %v2322 = vunpack.c.l.b16 %v867
    %v2323 = vunpack.c.h.b16 %v867
    %v2324 = vunpack.c.l.b16 %v868
    %v2325 = vunpack.c.h.b16 %v868
    %v2326 = vunpack.c.l.b16 %v869
    %v2327 = vunpack.c.h.b16 %v869
    %v2328 = vunpack.c.l.b16 %v870
    %v2329 = vunpack.c.l.b16 %v871
    %v2330 = vunpack.c.h.b16 %v871
    %v2331 = vunpack.c.l.b16 %v872
    %v2332 = vunpack.c.h.b16 %v872
    %v2333 = vunpack.c.l.b16 %v873
    %v2334 = vunpack.c.h.b16 %v873
    %v2335 = vunpack.c.l.b16 %v874
    %v2336 = vunpack.c.l.b16 %v875
    %v2337 = vunpack.c.h.b16 %v875
    %v2338 = vunpack.c.l.b16 %v876
    %v2339 = vunpack.c.h.b16 %v876
    %v2340 = vunpack.c.l.b16 %v877
    %v2341 = vunpack.c.h.b16 %v877
    %v2342 = vunpack.c.l.b16 %v878
    %v2343 = vunpack.c.l.b16 %v879
    %v2344 = vunpack.c.h.b16 %v879
    %v2345 = vunpack.c.l.b16 %v880
    %v2346 = vunpack.c.h.b16 %v880
    %v2347 = vunpack.c.l.b16 %v881
    %v2348 = vunpack.c.h.b16 %v881
    %v2349 = vunpack.c.l.b16 %v882
    %v2350 = vunpack.c.l.b16 %v883
    %v2351 = vunpack.c.h.b16 %v883
    %v2352 = vunpack.c.l.b16 %v884
    %v2353 = vunpack.c.h.b16 %v884
    %v2354 = vunpack.c.l.b16 %v885
    %v2355 = vunpack.c.h.b16 %v885
    %v2356 = vunpack.c.l.b16 %v886
    %v2357 = vunpack.c.l.b16 %v887
    %v2358 = vunpack.c.h.b16 %v887
    %v2359 = vunpack.c.l.b16 %v888
    %v2360 = vunpack.c.h.b16 %v888
    %v2361 = vunpack.c.l.b16 %v889
    %v2362 = vunpack.c.h.b16 %v889
    %v2363 = vunpack.c.l.b16 %v890
    %v2364 = vpack.c.b16 %v1475, %v1468
    %v2365 = vpack.c.b16 %v1476, %v1469
    %v2366 = vpack.c.b16 %v1477, %v1470
    %v2367 = vpack.c.b16 %v1478, %v1471
    %v2368 = vpack.c.b16 %v1479, %v1472
    %v2369 = vpack.c.b16 %v1480, %v1473
    %v2370 = vpack.c.b16 %v1481, %v1474
    %v2371 = vpack.c.b16 %v1489, %v1482
    %v2372 = vpack.c.b16 %v1490, %v1483
    %v2373 = vpack.c.b16 %v1491, %v1484
    %v2374 = vpack.c.b16 %v1492, %v1485
    %v2375 = vpack.c.b16 %v1493, %v1486
    %v2376 = vpack.c.b16 %v1494, %v1487
    %v2377 = vpack.c.b16 %v1495, %v1488
    %v2378 = vpack.c.b16 %v1503, %v1496
    %v2379 = vpack.c.b16 %v1504, %v1497
    %v2380 = vpack.c.b16 %v1505, %v1498
    %v2381 = vpack.c.b16 %v1506, %v1499
    %v2382 = vpack.c.b16 %v1507, %v1500
    %v2383 = vpack.c.b16 %v1508, %v1501
    %v2384 = vpack.c.b16 %v1509, %v1502
    %v2385 = vpack.c.b16 %v1517, %v1510
    %v2386 = vpack.c.b16 %v1518, %v1511
    %v2387 = vpack.c.b16 %v1519, %v1512
    %v2388 = vpack.c.b16 %v1520, %v1513
    %v2389 = vpack.c.b16 %v1521, %v1514
    %v2390 = vpack.c.b16 %v1522, %v1515
    %v2391 = vpack.c.b16 %v1523, %v1516
    %v2392 = vpack.c.b16 %v1531, %v1524
    %v2393 = vpack.c.b16 %v1532, %v1525
    %v2394 = vpack.c.b16 %v1533, %v1526
    %v2395 = vpack.c.b16 %v1534, %v1527
    %v2396 = vpack.c.b16 %v1535, %v1528
    %v2397 = vpack.c.b16 %v1536, %v1529
    %v2398 = vpack.c.b16 %v1537, %v1530
    %v2399 = vpack.c.b16 %v1545, %v1538
    %v2400 = vpack.c.b16 %v1546, %v1539
    %v2401 = vpack.c.b16 %v1547, %v1540
    %v2402 = vpack.c.b16 %v1548, %v1541
    %v2403 = vpack.c.b16 %v1549, %v1542
    %v2404 = vpack.c.b16 %v1550, %v1543
    %v2405 = vpack.c.b16 %v1551, %v1544
    %v2406 = vpack.c.b16 %v1559, %v1552
    %v2407 = vpack.c.b16 %v1560, %v1553
    %v2408 = vpack.c.b16 %v1561, %v1554
    %v2409 = vpack.c.b16 %v1562, %v1555
    %v2410 = vpack.c.b16 %v1563, %v1556
    %v2411 = vpack.c.b16 %v1564, %v1557
    %v2412 = vpack.c.b16 %v1565, %v1558
    %v2413 = vpack.c.b16 %v1573, %v1566
    %v2414 = vpack.c.b16 %v1574, %v1567
    %v2415 = vpack.c.b16 %v1575, %v1568
    %v2416 = vpack.c.b16 %v1576, %v1569
    %v2417 = vpack.c.b16 %v1577, %v1570
    %v2418 = vpack.c.b16 %v1578, %v1571
    %v2419 = vpack.c.b16 %v1579, %v1572
    %v2420 = vpack.c.b16 %v1587, %v1580
    %v2421 = vpack.c.b16 %v1588, %v1581
    %v2422 = vpack.c.b16 %v1589, %v1582
    %v2423 = vpack.c.b16 %v1590, %v1583
    %v2424 = vpack.c.b16 %v1591, %v1584
    %v2425 = vpack.c.b16 %v1592, %v1585
    %v2426 = vpack.c.b16 %v1593, %v1586
    %v2427 = vpack.c.b16 %v1601, %v1594
    %v2428 = vpack.c.b16 %v1602, %v1595
    %v2429 = vpack.c.b16 %v1603, %v1596
    %v2430 = vpack.c.b16 %v1604, %v1597
    %v2431 = vpack.c.b16 %v1605, %v1598
    %v2432 = vpack.c.b16 %v1606, %v1599
    %v2433 = vpack.c.b16 %v1607, %v1600
    %v2434 = vpack.c.b16 %v1615, %v1608
    %v2435 = vpack.c.b16 %v1616, %v1609
    %v2436 = vpack.c.b16 %v1617, %v1610
    %v2437 = vpack.c.b16 %v1618, %v1611
    %v2438 = vpack.c.b16 %v1619, %v1612
    %v2439 = vpack.c.b16 %v1620, %v1613
    %v2440 = vpack.c.b16 %v1621, %v1614
    %v2441 = vpack.c.b16 %v1629, %v1622
    %v2442 = vpack.c.b16 %v1630, %v1623
    %v2443 = vpack.c.b16 %v1631, %v1624
    %v2444 = vpack.c.b16 %v1632, %v1625
    %v2445 = vpack.c.b16 %v1633, %v1626
    %v2446 = vpack.c.b16 %v1634, %v1627
    %v2447 = vpack.c.b16 %v1635, %v1628
    %v2448 = vpack.c.b16 %v1643, %v1636
    %v2449 = vpack.c.b16 %v1644, %v1637
    %v2450 = vpack.c.b16 %v1645, %v1638
    %v2451 = vpack.c.b16 %v1646, %v1639
    %v2452 = vpack.c.b16 %v1647, %v1640
    %v2453 = vpack.c.b16 %v1648, %v1641
    %v2454 = vpack.c.b16 %v1649, %v1642
    %v2455 = vpack.c.b16 %v1657, %v1650
    %v2456 = vpack.c.b16 %v1658, %v1651
    %v2457 = vpack.c.b16 %v1659, %v1652
    %v2458 = vpack.c.b16 %v1660, %v1653
    %v2459 = vpack.c.b16 %v1661, %v1654
    %v2460 = vpack.c.b16 %v1662, %v1655
    %v2461 = vpack.c.b16 %v1663, %v1656
    %v2462 = vpack.c.b16 %v1671, %v1664
    %v2463 = vpack.c.b16 %v1672, %v1665
    %v2464 = vpack.c.b16 %v1673, %v1666
    %v2465 = vpack.c.b16 %v1674, %v1667
    %v2466 = vpack.c.b16 %v1675, %v1668
    %v2467 = vpack.c.b16 %v1676, %v1669
    %v2468 = vpack.c.b16 %v1677, %v1670
    %v2469 = vpack.c.b16 %v1685, %v1678
    %v2470 = vpack.c.b16 %v1686, %v1679
    %v2471 = vpack.c.b16 %v1687, %v1680
    %v2472 = vpack.c.b16 %v1688, %v1681
    %v2473 = vpack.c.b16 %v1689, %v1682
    %v2474 = vpack.c.b16 %v1690, %v1683
    %v2475 = vpack.c.b16 %v1691, %v1684
    %v2476 = vpack.c.b16 %v1699, %v1692
    %v2477 = vpack.c.b16 %v1700, %v1693
    %v2478 = vpack.c.b16 %v1701, %v1694
    %v2479 = vpack.c.b16 %v1702, %v1695
    %v2480 = vpack.c.b16 %v1703, %v1696
    %v2481 = vpack.c.b16 %v1704, %v1697
    %v2482 = vpack.c.b16 %v1705, %v1698
    %v2483 = vpack.c.b16 %v1713, %v1706
    %v2484 = vpack.c.b16 %v1714, %v1707
    %v2485 = vpack.c.b16 %v1715, %v1708
    %v2486 = vpack.c.b16 %v1716, %v1709
    %v2487 = vpack.c.b16 %v1717, %v1710
    %v2488 = vpack.c.b16 %v1718, %v1711
    %v2489 = vpack.c.b16 %v1719, %v1712
    %v2490 = vpack.c.b16 %v1727, %v1720
    %v2491 = vpack.c.b16 %v1728, %v1721
    %v2492 = vpack.c.b16 %v1729, %v1722
    %v2493 = vpack.c.b16 %v1730, %v1723
    %v2494 = vpack.c.b16 %v1731, %v1724
    %v2495 = vpack.c.b16 %v1732, %v1725
    %v2496 = vpack.c.b16 %v1733, %v1726
    %v2497 = vpack.c.b16 %v1741, %v1734
    %v2498 = vpack.c.b16 %v1742, %v1735
    %v2499 = vpack.c.b16 %v1743, %v1736
    %v2500 = vpack.c.b16 %v1744, %v1737
    %v2501 = vpack.c.b16 %v1745, %v1738
    %v2502 = vpack.c.b16 %v1746, %v1739
    %v2503 = vpack.c.b16 %v1747, %v1740
    %v2504 = vpack.c.b16 %v1755, %v1748
    %v2505 = vpack.c.b16 %v1756, %v1749
    %v2506 = vpack.c.b16 %v1757, %v1750
    %v2507 = vpack.c.b16 %v1758, %v1751
    %v2508 = vpack.c.b16 %v1759, %v1752
    %v2509 = vpack.c.b16 %v1760, %v1753
    %v2510 = vpack.c.b16 %v1761, %v1754
    %v2511 = vpack.c.b16 %v1769, %v1762
    %v2512 = vpack.c.b16 %v1770, %v1763
    %v2513 = vpack.c.b16 %v1771, %v1764
    %v2514 = vpack.c.b16 %v1772, %v1765
    %v2515 = vpack.c.b16 %v1773, %v1766
    %v2516 = vpack.c.b16 %v1774, %v1767
    %v2517 = vpack.c.b16 %v1775, %v1768
    %v2518 = vpack.c.b16 %v1783, %v1776
    %v2519 = vpack.c.b16 %v1784, %v1777
    %v2520 = vpack.c.b16 %v1785, %v1778
    %v2521 = vpack.c.b16 %v1786, %v1779
    %v2522 = vpack.c.b16 %v1787, %v1780
    %v2523 = vpack.c.b16 %v1788, %v1781
    %v2524 = vpack.c.b16 %v1789, %v1782
    %v2525 = vpack.c.b16 %v1797, %v1790
    %v2526 = vpack.c.b16 %v1798, %v1791
    %v2527 = vpack.c.b16 %v1799, %v1792
    %v2528 = vpack.c.b16 %v1800, %v1793
    %v2529 = vpack.c.b16 %v1801, %v1794
    %v2530 = vpack.c.b16 %v1802, %v1795
    %v2531 = vpack.c.b16 %v1803, %v1796
    %v2532 = vpack.c.b16 %v1811, %v1804
    %v2533 = vpack.c.b16 %v1812, %v1805
    %v2534 = vpack.c.b16 %v1813, %v1806
    %v2535 = vpack.c.b16 %v1814, %v1807
    %v2536 = vpack.c.b16 %v1815, %v1808
    %v2537 = vpack.c.b16 %v1816, %v1809
    %v2538 = vpack.c.b16 %v1817, %v1810
    %v2539 = vpack.c.b16 %v1825, %v1818
    %v2540 = vpack.c.b16 %v1826, %v1819
    %v2541 = vpack.c.b16 %v1827, %v1820
    %v2542 = vpack.c.b16 %v1828, %v1821
    %v2543 = vpack.c.b16 %v1829, %v1822
    %v2544 = vpack.c.b16 %v1830, %v1823
    %v2545 = vpack.c.b16 %v1831, %v1824
    %v2546 = vpack.c.b16 %v1839, %v1832
    %v2547 = vpack.c.b16 %v1840, %v1833
    %v2548 = vpack.c.b16 %v1841, %v1834
    %v2549 = vpack.c.b16 %v1842, %v1835
    %v2550 = vpack.c.b16 %v1843, %v1836
    %v2551 = vpack.c.b16 %v1844, %v1837
    %v2552 = vpack.c.b16 %v1845, %v1838
    %v2553 = vpack.c.b16 %v1853, %v1846
    %v2554 = vpack.c.b16 %v1854, %v1847
    %v2555 = vpack.c.b16 %v1855, %v1848
    %v2556 = vpack.c.b16 %v1856, %v1849
    %v2557 = vpack.c.b16 %v1857, %v1850
    %v2558 = vpack.c.b16 %v1858, %v1851
    %v2559 = vpack.c.b16 %v1859, %v1852
    %v2560 = vpack.c.b16 %v1867, %v1860
    %v2561 = vpack.c.b16 %v1868, %v1861
    %v2562 = vpack.c.b16 %v1869, %v1862
    %v2563 = vpack.c.b16 %v1870, %v1863
    %v2564 = vpack.c.b16 %v1871, %v1864
    %v2565 = vpack.c.b16 %v1872, %v1865
    %v2566 = vpack.c.b16 %v1873, %v1866
    %v2567 = vpack.c.b16 %v1881, %v1874
    %v2568 = vpack.c.b16 %v1882, %v1875
    %v2569 = vpack.c.b16 %v1883, %v1876
    %v2570 = vpack.c.b16 %v1884, %v1877
    %v2571 = vpack.c.b16 %v1885, %v1878
    %v2572 = vpack.c.b16 %v1886, %v1879
    %v2573 = vpack.c.b16 %v1887, %v1880
    %v2574 = vpack.c.b16 %v1895, %v1888
    %v2575 = vpack.c.b16 %v1896, %v1889
    %v2576 = vpack.c.b16 %v1897, %v1890
    %v2577 = vpack.c.b16 %v1898, %v1891
    %v2578 = vpack.c.b16 %v1899, %v1892
    %v2579 = vpack.c.b16 %v1900, %v1893
    %v2580 = vpack.c.b16 %v1901, %v1894
    %v2581 = vpack.c.b16 %v1909, %v1902
    %v2582 = vpack.c.b16 %v1910, %v1903
    %v2583 = vpack.c.b16 %v1911, %v1904
    %v2584 = vpack.c.b16 %v1912, %v1905
    %v2585 = vpack.c.b16 %v1913, %v1906
    %v2586 = vpack.c.b16 %v1914, %v1907
    %v2587 = vpack.c.b16 %v1915, %v1908
    %v2588 = vpack.c.b16 %v1923, %v1916
    %v2589 = vpack.c.b16 %v1924, %v1917
    %v2590 = vpack.c.b16 %v1925, %v1918
    %v2591 = vpack.c.b16 %v1926, %v1919
    %v2592 = vpack.c.b16 %v1927, %v1920
    %v2593 = vpack.c.b16 %v1928, %v1921
    %v2594 = vpack.c.b16 %v1929, %v1922
    %v2595 = vpack.c.b16 %v1937, %v1930
    %v2596 = vpack.c.b16 %v1938, %v1931
    %v2597 = vpack.c.b16 %v1939, %v1932
    %v2598 = vpack.c.b16 %v1940, %v1933
    %v2599 = vpack.c.b16 %v1941, %v1934
    %v2600 = vpack.c.b16 %v1942, %v1935
    %v2601 = vpack.c.b16 %v1943, %v1936
    %v2602 = vpack.c.b16 %v1951, %v1944
    %v2603 = vpack.c.b16 %v1952, %v1945
    %v2604 = vpack.c.b16 %v1953, %v1946
    %v2605 = vpack.c.b16 %v1954, %v1947
    %v2606 = vpack.c.b16 %v1955, %v1948
    %v2607 = vpack.c.b16 %v1956, %v1949
    %v2608 = vpack.c.b16 %v1957, %v1950
    %v2609 = vpack.c.b16 %v1965, %v1958
    %v2610 = vpack.c.b16 %v1966, %v1959
    %v2611 = vpack.c.b16 %v1967, %v1960
    %v2612 = vpack.c.b16 %v1968, %v1961
    %v2613 = vpack.c.b16 %v1969, %v1962
    %v2614 = vpack.c.b16 %v1970, %v1963
    %v2615 = vpack.c.b16 %v1971, %v1964
    %v2616 = vpack.c.b16 %v1979, %v1972
    %v2617 = vpack.c.b16 %v1980, %v1973
    %v2618 = vpack.c.b16 %v1981, %v1974
    %v2619 = vpack.c.b16 %v1982, %v1975
    %v2620 = vpack.c.b16 %v1983, %v1976
    %v2621 = vpack.c.b16 %v1984, %v1977
    %v2622 = vpack.c.b16 %v1985, %v1978
    %v2623 = vpack.c.b16 %v1993, %v1986
    %v2624 = vpack.c.b16 %v1994, %v1987
    %v2625 = vpack.c.b16 %v1995, %v1988
    %v2626 = vpack.c.b16 %v1996, %v1989
    %v2627 = vpack.c.b16 %v1997, %v1990
    %v2628 = vpack.c.b16 %v1998, %v1991
    %v2629 = vpack.c.b16 %v1999, %v1992
    %v2630 = vpack.c.b16 %v2007, %v2000
    %v2631 = vpack.c.b16 %v2008, %v2001
    %v2632 = vpack.c.b16 %v2009, %v2002
    %v2633 = vpack.c.b16 %v2010, %v2003
    %v2634 = vpack.c.b16 %v2011, %v2004
    %v2635 = vpack.c.b16 %v2012, %v2005
    %v2636 = vpack.c.b16 %v2013, %v2006
    %v2637 = vpack.c.b16 %v2021, %v2014
    %v2638 = vpack.c.b16 %v2022, %v2015
    %v2639 = vpack.c.b16 %v2023, %v2016
    %v2640 = vpack.c.b16 %v2024, %v2017
    %v2641 = vpack.c.b16 %v2025, %v2018
    %v2642 = vpack.c.b16 %v2026, %v2019
    %v2643 = vpack.c.b16 %v2027, %v2020
    %v2644 = vpack.c.b16 %v2035, %v2028
    %v2645 = vpack.c.b16 %v2036, %v2029
    %v2646 = vpack.c.b16 %v2037, %v2030
    %v2647 = vpack.c.b16 %v2038, %v2031
    %v2648 = vpack.c.b16 %v2039, %v2032
    %v2649 = vpack.c.b16 %v2040, %v2033
    %v2650 = vpack.c.b16 %v2041, %v2034
    %v2651 = vpack.c.b16 %v2049, %v2042
    %v2652 = vpack.c.b16 %v2050, %v2043
    %v2653 = vpack.c.b16 %v2051, %v2044
    %v2654 = vpack.c.b16 %v2052, %v2045
    %v2655 = vpack.c.b16 %v2053, %v2046
    %v2656 = vpack.c.b16 %v2054, %v2047
    %v2657 = vpack.c.b16 %v2055, %v2048
    %v2658 = vpack.c.b16 %v2063, %v2056
    %v2659 = vpack.c.b16 %v2064, %v2057
    %v2660 = vpack.c.b16 %v2065, %v2058
    %v2661 = vpack.c.b16 %v2066, %v2059
    %v2662 = vpack.c.b16 %v2067, %v2060
    %v2663 = vpack.c.b16 %v2068, %v2061
    %v2664 = vpack.c.b16 %v2069, %v2062
    %v2665 = vpack.c.b16 %v2077, %v2070
    %v2666 = vpack.c.b16 %v2078, %v2071
    %v2667 = vpack.c.b16 %v2079, %v2072
    %v2668 = vpack.c.b16 %v2080, %v2073
    %v2669 = vpack.c.b16 %v2081, %v2074
    %v2670 = vpack.c.b16 %v2082, %v2075
    %v2671 = vpack.c.b16 %v2083, %v2076
    %v2672 = vpack.c.b16 %v2091, %v2084
    %v2673 = vpack.c.b16 %v2092, %v2085
    %v2674 = vpack.c.b16 %v2093, %v2086
    %v2675 = vpack.c.b16 %v2094, %v2087
    %v2676 = vpack.c.b16 %v2095, %v2088
    %v2677 = vpack.c.b16 %v2096, %v2089
    %v2678 = vpack.c.b16 %v2097, %v2090
    %v2679 = vpack.c.b16 %v2105, %v2098
    %v2680 = vpack.c.b16 %v2106, %v2099
    %v2681 = vpack.c.b16 %v2107, %v2100
    %v2682 = vpack.c.b16 %v2108, %v2101
    %v2683 = vpack.c.b16 %v2109, %v2102
    %v2684 = vpack.c.b16 %v2110, %v2103
    %v2685 = vpack.c.b16 %v2111, %v2104
    %v2686 = vpack.c.b16 %v2119, %v2112
    %v2687 = vpack.c.b16 %v2120, %v2113
    %v2688 = vpack.c.b16 %v2121, %v2114
    %v2689 = vpack.c.b16 %v2122, %v2115
    %v2690 = vpack.c.b16 %v2123, %v2116
    %v2691 = vpack.c.b16 %v2124, %v2117
    %v2692 = vpack.c.b16 %v2125, %v2118
    %v2693 = vpack.c.b16 %v2133, %v2126
    %v2694 = vpack.c.b16 %v2134, %v2127
    %v2695 = vpack.c.b16 %v2135, %v2128
    %v2696 = vpack.c.b16 %v2136, %v2129
    %v2697 = vpack.c.b16 %v2137, %v2130
    %v2698 = vpack.c.b16 %v2138, %v2131
    %v2699 = vpack.c.b16 %v2139, %v2132
    %v2700 = vpack.c.b16 %v2147, %v2140
    %v2701 = vpack.c.b16 %v2148, %v2141
    %v2702 = vpack.c.b16 %v2149, %v2142
    %v2703 = vpack.c.b16 %v2150, %v2143
    %v2704 = vpack.c.b16 %v2151, %v2144
    %v2705 = vpack.c.b16 %v2152, %v2145
    %v2706 = vpack.c.b16 %v2153, %v2146
    %v2707 = vpack.c.b16 %v2161, %v2154
    %v2708 = vpack.c.b16 %v2162, %v2155
    %v2709 = vpack.c.b16 %v2163, %v2156
    %v2710 = vpack.c.b16 %v2164, %v2157
    %v2711 = vpack.c.b16 %v2165, %v2158
    %v2712 = vpack.c.b16 %v2166, %v2159
    %v2713 = vpack.c.b16 %v2167, %v2160
    %v2714 = vpack.c.b16 %v2175, %v2168
    %v2715 = vpack.c.b16 %v2176, %v2169
    %v2716 = vpack.c.b16 %v2177, %v2170
    %v2717 = vpack.c.b16 %v2178, %v2171
    %v2718 = vpack.c.b16 %v2179, %v2172
    %v2719 = vpack.c.b16 %v2180, %v2173
    %v2720 = vpack.c.b16 %v2181, %v2174
    %v2721 = vpack.c.b16 %v2189, %v2182
    %v2722 = vpack.c.b16 %v2190, %v2183
    %v2723 = vpack.c.b16 %v2191, %v2184
    %v2724 = vpack.c.b16 %v2192, %v2185
    %v2725 = vpack.c.b16 %v2193, %v2186
    %v2726 = vpack.c.b16 %v2194, %v2187
    %v2727 = vpack.c.b16 %v2195, %v2188
    %v2728 = vpack.c.b16 %v2203, %v2196
    %v2729 = vpack.c.b16 %v2204, %v2197
    %v2730 = vpack.c.b16 %v2205, %v2198
    %v2731 = vpack.c.b16 %v2206, %v2199
    %v2732 = vpack.c.b16 %v2207, %v2200
    %v2733 = vpack.c.b16 %v2208, %v2201
    %v2734 = vpack.c.b16 %v2209, %v2202
    %v2735 = vpack.c.b16 %v2217, %v2210
    %v2736 = vpack.c.b16 %v2218, %v2211
    %v2737 = vpack.c.b16 %v2219, %v2212
    %v2738 = vpack.c.b16 %v2220, %v2213
    %v2739 = vpack.c.b16 %v2221, %v2214
    %v2740 = vpack.c.b16 %v2222, %v2215
    %v2741 = vpack.c.b16 %v2223, %v2216
    %v2742 = vpack.c.b16 %v2231, %v2224
    %v2743 = vpack.c.b16 %v2232, %v2225
    %v2744 = vpack.c.b16 %v2233, %v2226
    %v2745 = vpack.c.b16 %v2234, %v2227
    %v2746 = vpack.c.b16 %v2235, %v2228
    %v2747 = vpack.c.b16 %v2236, %v2229
    %v2748 = vpack.c.b16 %v2237, %v2230
    %v2749 = vpack.c.b16 %v2245, %v2238
    %v2750 = vpack.c.b16 %v2246, %v2239
    %v2751 = vpack.c.b16 %v2247, %v2240
    %v2752 = vpack.c.b16 %v2248, %v2241
    %v2753 = vpack.c.b16 %v2249, %v2242
    %v2754 = vpack.c.b16 %v2250, %v2243
    %v2755 = vpack.c.b16 %v2251, %v2244
    %v2756 = vpack.c.b16 %v2259, %v2252
    %v2757 = vpack.c.b16 %v2260, %v2253
    %v2758 = vpack.c.b16 %v2261, %v2254
    %v2759 = vpack.c.b16 %v2262, %v2255
    %v2760 = vpack.c.b16 %v2263, %v2256
    %v2761 = vpack.c.b16 %v2264, %v2257
    %v2762 = vpack.c.b16 %v2265, %v2258
    %v2763 = vpack.c.b16 %v2273, %v2266
    %v2764 = vpack.c.b16 %v2274, %v2267
    %v2765 = vpack.c.b16 %v2275, %v2268
    %v2766 = vpack.c.b16 %v2276, %v2269
    %v2767 = vpack.c.b16 %v2277, %v2270
    %v2768 = vpack.c.b16 %v2278, %v2271
    %v2769 = vpack.c.b16 %v2279, %v2272
    %v2770 = vpack.c.b16 %v2287, %v2280
    %v2771 = vpack.c.b16 %v2288, %v2281
    %v2772 = vpack.c.b16 %v2289, %v2282
    %v2773 = vpack.c.b16 %v2290, %v2283
    %v2774 = vpack.c.b16 %v2291, %v2284
    %v2775 = vpack.c.b16 %v2292, %v2285
    %v2776 = vpack.c.b16 %v2293, %v2286
    %v2777 = vpack.c.b16 %v2301, %v2294
    %v2778 = vpack.c.b16 %v2302, %v2295
    %v2779 = vpack.c.b16 %v2303, %v2296
    %v2780 = vpack.c.b16 %v2304, %v2297
    %v2781 = vpack.c.b16 %v2305, %v2298
    %v2782 = vpack.c.b16 %v2306, %v2299
    %v2783 = vpack.c.b16 %v2307, %v2300
    %v2784 = vpack.c.b16 %v2315, %v2308
    %v2785 = vpack.c.b16 %v2316, %v2309
    %v2786 = vpack.c.b16 %v2317, %v2310
    %v2787 = vpack.c.b16 %v2318, %v2311
    %v2788 = vpack.c.b16 %v2319, %v2312
    %v2789 = vpack.c.b16 %v2320, %v2313
    %v2790 = vpack.c.b16 %v2321, %v2314
    %v2791 = vpack.c.b16 %v2329, %v2322
    %v2792 = vpack.c.b16 %v2330, %v2323
    %v2793 = vpack.c.b16 %v2331, %v2324
    %v2794 = vpack.c.b16 %v2332, %v2325
    %v2795 = vpack.c.b16 %v2333, %v2326
    %v2796 = vpack.c.b16 %v2334, %v2327
    %v2797 = vpack.c.b16 %v2335, %v2328
    %v2798 = vpack.c.b16 %v2343, %v2336
    %v2799 = vpack.c.b16 %v2344, %v2337
    %v2800 = vpack.c.b16 %v2345, %v2338
    %v2801 = vpack.c.b16 %v2346, %v2339
    %v2802 = vpack.c.b16 %v2347, %v2340
    %v2803 = vpack.c.b16 %v2348, %v2341
    %v2804 = vpack.c.b16 %v2349, %v2342
    %v2805 = vpack.c.b16 %v2357, %v2350
    %v2806 = vpack.c.b16 %v2358, %v2351
    %v2807 = vpack.c.b16 %v2359, %v2352
    %v2808 = vpack.c.b16 %v2360, %v2353
    %v2809 = vpack.c.b16 %v2361, %v2354
    %v2810 = vpack.c.b16 %v2362, %v2355
    %v2811 = vpack.c.b16 %v2363, %v2356
    %3260 = vmatprep.subr.bf16.mxu0 %v2365
    %3261 = vmatpush1.bf16.msra.mxu0 %v2364
    %3262 = vmatprep.subr.bf16.mxu0 %v2372
    %3263 = vmatpush1.bf16.msra.mxu0 %v2371
    %3264 = vmatprep.subr.bf16.mxu0 %v2379
    %3265 = vmatpush1.bf16.msra.mxu0 %v2378
    %3266 = vmatprep.subr.bf16.mxu0 %v2386
    %3267 = vmatpush1.bf16.msra.mxu0 %v2385
    %3268 = vmatprep.subr.bf16.mxu0 %v2393
    %3269 = vmatpush1.bf16.msra.mxu0 %v2392
    %3270 = vmatprep.subr.bf16.mxu0 %v2400
    %3271 = vmatpush1.bf16.msra.mxu0 %v2399
    %3272 = vmatprep.subr.bf16.mxu0 %v2407
    %3273 = vmatpush1.bf16.msra.mxu0 %v2406
    %3274 = vmatprep.subr.bf16.mxu0 %v2414
    %3275 = vmatpush1.bf16.msra.mxu0 %v2413
    %3276 = vmatprep.subr.bf16.mxu0 %v2421
    %3277 = vmatpush1.bf16.msra.mxu0 %v2420
    %3278 = vmatprep.subr.bf16.mxu0 %v2428
    %3279 = vmatpush1.bf16.msra.mxu0 %v2427
    %3280 = vmatprep.subr.bf16.mxu0 %v2435
    %3281 = vmatpush1.bf16.msra.mxu0 %v2434
    %3282 = vmatprep.subr.bf16.mxu0 %v2442
    %3283 = vmatpush1.bf16.msra.mxu0 %v2441
    %3284 = vmatprep.subr.bf16.mxu0 %v2449
    %3285 = vmatpush1.bf16.msra.mxu0 %v2448
    %3286 = vmatprep.subr.bf16.mxu0 %v2456
    %3287 = vmatpush1.bf16.msra.mxu0 %v2455
    %3288 = vmatprep.subr.bf16.mxu0 %v2463
    %3289 = vmatpush1.bf16.msra.mxu0 %v2462
    %3290 = vmatprep.subr.bf16.mxu0 %v2470
    %3291 = vmatpush1.bf16.msra.mxu0 %v2469
    %3292 = vmatprep.mubr.bf16.mxu0 %v941
    %3293 = vmatmul.mubr.bf16.gmra.mrb[0].mxu0 %v940
    %v3294 = vpop.f32.mrb[0].mxu0
    %v3295 = vadd.f32 %v896, %v3294
    %v3296 = vpop.f32.mrb[0].mxu0
    %v3297 = vadd.f32 %v900, %v3296
    %v3298 = vpop.f32.mrb[0].mxu0
    %v3299 = vpop.f32.mrb[0].mxu0
    %3300 = vdwg.mxu0
    %3301 = vmatprep.subr.bf16.mxu0 %v2477
    %3302 = vmatpush1.bf16.msra.mxu0 %v2476
    %3303 = vmatprep.subr.bf16.mxu0 %v2484
    %3304 = vmatpush1.bf16.msra.mxu0 %v2483
    %3305 = vmatprep.subr.bf16.mxu0 %v2491
    %3306 = vmatpush1.bf16.msra.mxu0 %v2490
    %3307 = vmatprep.subr.bf16.mxu0 %v2498
    %3308 = vmatpush1.bf16.msra.mxu0 %v2497
    %3309 = vmatprep.subr.bf16.mxu0 %v2505
    %3310 = vmatpush1.bf16.msra.mxu0 %v2504
    %3311 = vmatprep.subr.bf16.mxu0 %v2512
    %3312 = vmatpush1.bf16.msra.mxu0 %v2511
    %3313 = vmatprep.subr.bf16.mxu0 %v2519
    %3314 = vmatpush1.bf16.msra.mxu0 %v2518
    %3315 = vmatprep.subr.bf16.mxu0 %v2526
    %3316 = vmatpush1.bf16.msra.mxu0 %v2525
    %3317 = vmatprep.subr.bf16.mxu0 %v2533
    %3318 = vmatpush1.bf16.msra.mxu0 %v2532
    %3319 = vmatprep.subr.bf16.mxu0 %v2540
    %3320 = vmatpush1.bf16.msra.mxu0 %v2539
    %3321 = vmatprep.subr.bf16.mxu0 %v2547
    %3322 = vmatpush1.bf16.msra.mxu0 %v2546
    %3323 = vmatprep.subr.bf16.mxu0 %v2554
    %3324 = vmatpush1.bf16.msra.mxu0 %v2553
    %3325 = vmatprep.subr.bf16.mxu0 %v2561
    %3326 = vmatpush1.bf16.msra.mxu0 %v2560
    %3327 = vmatprep.subr.bf16.mxu0 %v2568
    %3328 = vmatpush1.bf16.msra.mxu0 %v2567
    %3329 = vmatprep.subr.bf16.mxu0 %v2575
    %3330 = vmatpush1.bf16.msra.mxu0 %v2574
    %3331 = vmatprep.subr.bf16.mxu0 %v2582
    %3332 = vmatpush1.bf16.msra.mxu0 %v2581
    %3333 = vmatprep.mubr.bf16.mxu0 %v943
    %3334 = vmatmul.mubr.bf16.gmra.mrb[0].mxu0 %v942
    %v3335 = vpop.f32.mrb[0].mxu0
    %v3336 = vadd.f32 %v3295, %v3335
    %v3337 = vpop.f32.mrb[0].mxu0
    %v3338 = vadd.f32 %v3297, %v3337
    %v3339 = vpop.f32.mrb[0].mxu0
    %v3340 = vpop.f32.mrb[0].mxu0
    %3341 = vdwg.mxu0
    %3342 = vmatprep.subr.bf16.mxu0 %v2589
    %3343 = vmatpush1.bf16.msra.mxu0 %v2588
    %3344 = vmatprep.subr.bf16.mxu0 %v2596
    %3345 = vmatpush1.bf16.msra.mxu0 %v2595
    %3346 = vmatprep.subr.bf16.mxu0 %v2603
    %3347 = vmatpush1.bf16.msra.mxu0 %v2602
    %3348 = vmatprep.subr.bf16.mxu0 %v2610
    %3349 = vmatpush1.bf16.msra.mxu0 %v2609
    %3350 = vmatprep.subr.bf16.mxu0 %v2617
    %3351 = vmatpush1.bf16.msra.mxu0 %v2616
    %3352 = vmatprep.subr.bf16.mxu0 %v2624
    %3353 = vmatpush1.bf16.msra.mxu0 %v2623
    %3354 = vmatprep.subr.bf16.mxu0 %v2631
    %3355 = vmatpush1.bf16.msra.mxu0 %v2630
    %3356 = vmatprep.subr.bf16.mxu0 %v2638
    %3357 = vmatpush1.bf16.msra.mxu0 %v2637
    %3358 = vmatprep.subr.bf16.mxu0 %v2645
    %3359 = vmatpush1.bf16.msra.mxu0 %v2644
    %3360 = vmatprep.subr.bf16.mxu0 %v2652
    %3361 = vmatpush1.bf16.msra.mxu0 %v2651
    %3362 = vmatprep.subr.bf16.mxu0 %v2659
    %3363 = vmatpush1.bf16.msra.mxu0 %v2658
    %3364 = vmatprep.subr.bf16.mxu0 %v2666
    %3365 = vmatpush1.bf16.msra.mxu0 %v2665
    %3366 = vmatprep.subr.bf16.mxu0 %v2673
    %3367 = vmatpush1.bf16.msra.mxu0 %v2672
    %3368 = vmatprep.subr.bf16.mxu0 %v2680
    %3369 = vmatpush1.bf16.msra.mxu0 %v2679
    %3370 = vmatprep.subr.bf16.mxu0 %v2687
    %3371 = vmatpush1.bf16.msra.mxu0 %v2686
    %3372 = vmatprep.subr.bf16.mxu0 %v2694
    %3373 = vmatpush1.bf16.msra.mxu0 %v2693
    %3374 = vmatprep.mubr.bf16.mxu0 %v945
    %3375 = vmatmul.mubr.bf16.gmra.mrb[0].mxu0 %v944
    %v3376 = vpop.f32.mrb[0].mxu0
    %v3377 = vadd.f32 %v3336, %v3376
    %v3378 = vpop.f32.mrb[0].mxu0
    %v3379 = vadd.f32 %v3338, %v3378
    %v3380 = vpop.f32.mrb[0].mxu0
    %v3381 = vpop.f32.mrb[0].mxu0
    %3382 = vdwg.mxu0
    %3383 = vmatprep.subr.bf16.mxu0 %v2701
    %3384 = vmatpush1.bf16.msra.mxu0 %v2700
    %3385 = vmatprep.subr.bf16.mxu0 %v2708
    %3386 = vmatpush1.bf16.msra.mxu0 %v2707
    %3387 = vmatprep.subr.bf16.mxu0 %v2715
    %3388 = vmatpush1.bf16.msra.mxu0 %v2714
    %3389 = vmatprep.subr.bf16.mxu0 %v2722
    %3390 = vmatpush1.bf16.msra.mxu0 %v2721
    %3391 = vmatprep.subr.bf16.mxu0 %v2729
    %3392 = vmatpush1.bf16.msra.mxu0 %v2728
    %3393 = vmatprep.subr.bf16.mxu0 %v2736
    %3394 = vmatpush1.bf16.msra.mxu0 %v2735
    %3395 = vmatprep.subr.bf16.mxu0 %v2743
    %3396 = vmatpush1.bf16.msra.mxu0 %v2742
    %3397 = vmatprep.subr.bf16.mxu0 %v2750
    %3398 = vmatpush1.bf16.msra.mxu0 %v2749
    %3399 = vmatprep.subr.bf16.mxu0 %v2757
    %3400 = vmatpush1.bf16.msra.mxu0 %v2756
    %3401 = vmatprep.subr.bf16.mxu0 %v2764
    %3402 = vmatpush1.bf16.msra.mxu0 %v2763
    %3403 = vmatprep.subr.bf16.mxu0 %v2771
    %3404 = vmatpush1.bf16.msra.mxu0 %v2770
    %3405 = vmatprep.subr.bf16.mxu0 %v2778
    %3406 = vmatpush1.bf16.msra.mxu0 %v2777
    %3407 = vmatprep.subr.bf16.mxu0 %v2785
    %3408 = vmatpush1.bf16.msra.mxu0 %v2784
    %3409 = vmatprep.subr.bf16.mxu0 %v2792
    %3410 = vmatpush1.bf16.msra.mxu0 %v2791
    %3411 = vmatprep.subr.bf16.mxu0 %v2799
    %3412 = vmatpush1.bf16.msra.mxu0 %v2798
    %3413 = vmatprep.subr.bf16.mxu0 %v2806
    %3414 = vmatpush1.bf16.msra.mxu0 %v2805
    %3415 = vmatprep.mubr.bf16.mxu0 %v947
    %3416 = vmatmul.mubr.bf16.gmra.mrb[0].mxu0 %v946
    %v3417 = vpop.f32.mrb[0].mxu0
    %v3418 = vadd.f32 %v3377, %v3417
    %v3419 = vpop.f32.mrb[0].mxu0
    %v3420 = vadd.f32 %v3379, %v3419
    %v3421 = vpop.f32.mrb[0].mxu0
    %v3422 = vpop.f32.mrb[0].mxu0
    %3423 = vdwg.mxu0
    %3424 = vmatprep.subr.bf16.mxu0 %v2367
    %3425 = vmatpush1.bf16.msra.mxu0 %v2366
    %3426 = vmatprep.subr.bf16.mxu0 %v2374
    %3427 = vmatpush1.bf16.msra.mxu0 %v2373
    %3428 = vmatprep.subr.bf16.mxu0 %v2381
    %3429 = vmatpush1.bf16.msra.mxu0 %v2380
    %3430 = vmatprep.subr.bf16.mxu0 %v2388
    %3431 = vmatpush1.bf16.msra.mxu0 %v2387
    %3432 = vmatprep.subr.bf16.mxu0 %v2395
    %3433 = vmatpush1.bf16.msra.mxu0 %v2394
    %3434 = vmatprep.subr.bf16.mxu0 %v2402
    %3435 = vmatpush1.bf16.msra.mxu0 %v2401
    %3436 = vmatprep.subr.bf16.mxu0 %v2409
    %3437 = vmatpush1.bf16.msra.mxu0 %v2408
    %3438 = vmatprep.subr.bf16.mxu0 %v2416
    %3439 = vmatpush1.bf16.msra.mxu0 %v2415
    %3440 = vmatprep.subr.bf16.mxu0 %v2423
    %3441 = vmatpush1.bf16.msra.mxu0 %v2422
    %3442 = vmatprep.subr.bf16.mxu0 %v2430
    %3443 = vmatpush1.bf16.msra.mxu0 %v2429
    %3444 = vmatprep.subr.bf16.mxu0 %v2437
    %3445 = vmatpush1.bf16.msra.mxu0 %v2436
    %3446 = vmatprep.subr.bf16.mxu0 %v2444
    %3447 = vmatpush1.bf16.msra.mxu0 %v2443
    %3448 = vmatprep.subr.bf16.mxu0 %v2451
    %3449 = vmatpush1.bf16.msra.mxu0 %v2450
    %3450 = vmatprep.subr.bf16.mxu0 %v2458
    %3451 = vmatpush1.bf16.msra.mxu0 %v2457
    %3452 = vmatprep.subr.bf16.mxu0 %v2465
    %3453 = vmatpush1.bf16.msra.mxu0 %v2464
    %3454 = vmatprep.subr.bf16.mxu0 %v2472
    %3455 = vmatpush1.bf16.msra.mxu0 %v2471
    %3456 = vmatprep.mubr.bf16.mxu0 %v941
    %3457 = vmatmul.mubr.bf16.gmra.mrb[0].mxu0 %v940
    %v3458 = vpop.f32.mrb[0].mxu0
    %v3459 = vadd.f32 %v904, %v3458
    %v3460 = vpop.f32.mrb[0].mxu0
    %v3461 = vadd.f32 %v908, %v3460
    %v3462 = vpop.f32.mrb[0].mxu0
    %v3463 = vpop.f32.mrb[0].mxu0
    %3464 = vdwg.mxu0
    %3465 = vmatprep.subr.bf16.mxu0 %v2479
    %3466 = vmatpush1.bf16.msra.mxu0 %v2478
    %3467 = vmatprep.subr.bf16.mxu0 %v2486
    %3468 = vmatpush1.bf16.msra.mxu0 %v2485
    %3469 = vmatprep.subr.bf16.mxu0 %v2493
    %3470 = vmatpush1.bf16.msra.mxu0 %v2492
    %3471 = vmatprep.subr.bf16.mxu0 %v2500
    %3472 = vmatpush1.bf16.msra.mxu0 %v2499
    %3473 = vmatprep.subr.bf16.mxu0 %v2507
    %3474 = vmatpush1.bf16.msra.mxu0 %v2506
    %3475 = vmatprep.subr.bf16.mxu0 %v2514
    %3476 = vmatpush1.bf16.msra.mxu0 %v2513
    %3477 = vmatprep.subr.bf16.mxu0 %v2521
    %3478 = vmatpush1.bf16.msra.mxu0 %v2520
    %3479 = vmatprep.subr.bf16.mxu0 %v2528
    %3480 = vmatpush1.bf16.msra.mxu0 %v2527
    %3481 = vmatprep.subr.bf16.mxu0 %v2535
    %3482 = vmatpush1.bf16.msra.mxu0 %v2534
    %3483 = vmatprep.subr.bf16.mxu0 %v2542
    %3484 = vmatpush1.bf16.msra.mxu0 %v2541
    %3485 = vmatprep.subr.bf16.mxu0 %v2549
    %3486 = vmatpush1.bf16.msra.mxu0 %v2548
    %3487 = vmatprep.subr.bf16.mxu0 %v2556
    %3488 = vmatpush1.bf16.msra.mxu0 %v2555
    %3489 = vmatprep.subr.bf16.mxu0 %v2563
    %3490 = vmatpush1.bf16.msra.mxu0 %v2562
    %3491 = vmatprep.subr.bf16.mxu0 %v2570
    %3492 = vmatpush1.bf16.msra.mxu0 %v2569
    %3493 = vmatprep.subr.bf16.mxu0 %v2577
    %3494 = vmatpush1.bf16.msra.mxu0 %v2576
    %3495 = vmatprep.subr.bf16.mxu0 %v2584
    %3496 = vmatpush1.bf16.msra.mxu0 %v2583
    %3497 = vmatprep.mubr.bf16.mxu0 %v943
    %3498 = vmatmul.mubr.bf16.gmra.mrb[0].mxu0 %v942
    %v3499 = vpop.f32.mrb[0].mxu0
    %v3500 = vadd.f32 %v3459, %v3499
    %v3501 = vpop.f32.mrb[0].mxu0
    %v3502 = vadd.f32 %v3461, %v3501
    %v3503 = vpop.f32.mrb[0].mxu0
    %v3504 = vpop.f32.mrb[0].mxu0
    %3505 = vdwg.mxu0
    %3506 = vmatprep.subr.bf16.mxu0 %v2591
    %3507 = vmatpush1.bf16.msra.mxu0 %v2590
    %3508 = vmatprep.subr.bf16.mxu0 %v2598
    %3509 = vmatpush1.bf16.msra.mxu0 %v2597
    %3510 = vmatprep.subr.bf16.mxu0 %v2605
    %3511 = vmatpush1.bf16.msra.mxu0 %v2604
    %3512 = vmatprep.subr.bf16.mxu0 %v2612
    %3513 = vmatpush1.bf16.msra.mxu0 %v2611
    %3514 = vmatprep.subr.bf16.mxu0 %v2619
    %3515 = vmatpush1.bf16.msra.mxu0 %v2618
    %3516 = vmatprep.subr.bf16.mxu0 %v2626
    %3517 = vmatpush1.bf16.msra.mxu0 %v2625
    %3518 = vmatprep.subr.bf16.mxu0 %v2633
    %3519 = vmatpush1.bf16.msra.mxu0 %v2632
    %3520 = vmatprep.subr.bf16.mxu0 %v2640
    %3521 = vmatpush1.bf16.msra.mxu0 %v2639
    %3522 = vmatprep.subr.bf16.mxu0 %v2647
    %3523 = vmatpush1.bf16.msra.mxu0 %v2646
    %3524 = vmatprep.subr.bf16.mxu0 %v2654
    %3525 = vmatpush1.bf16.msra.mxu0 %v2653
    %3526 = vmatprep.subr.bf16.mxu0 %v2661
    %3527 = vmatpush1.bf16.msra.mxu0 %v2660
    %3528 = vmatprep.subr.bf16.mxu0 %v2668
    %3529 = vmatpush1.bf16.msra.mxu0 %v2667
    %3530 = vmatprep.subr.bf16.mxu0 %v2675
    %3531 = vmatpush1.bf16.msra.mxu0 %v2674
    %3532 = vmatprep.subr.bf16.mxu0 %v2682
    %3533 = vmatpush1.bf16.msra.mxu0 %v2681
    %3534 = vmatprep.subr.bf16.mxu0 %v2689
    %3535 = vmatpush1.bf16.msra.mxu0 %v2688
    %3536 = vmatprep.subr.bf16.mxu0 %v2696
    %3537 = vmatpush1.bf16.msra.mxu0 %v2695
    %3538 = vmatprep.mubr.bf16.mxu0 %v945
    %3539 = vmatmul.mubr.bf16.gmra.mrb[0].mxu0 %v944
    %v3540 = vpop.f32.mrb[0].mxu0
    %v3541 = vadd.f32 %v3500, %v3540
    %v3542 = vpop.f32.mrb[0].mxu0
    %v3543 = vadd.f32 %v3502, %v3542
    %v3544 = vpop.f32.mrb[0].mxu0
    %v3545 = vpop.f32.mrb[0].mxu0
    %3546 = vdwg.mxu0
    %3547 = vmatprep.subr.bf16.mxu0 %v2703
    %3548 = vmatpush1.bf16.msra.mxu0 %v2702
    %3549 = vmatprep.subr.bf16.mxu0 %v2710
    %3550 = vmatpush1.bf16.msra.mxu0 %v2709
    %3551 = vmatprep.subr.bf16.mxu0 %v2717
    %3552 = vmatpush1.bf16.msra.mxu0 %v2716
    %3553 = vmatprep.subr.bf16.mxu0 %v2724
    %3554 = vmatpush1.bf16.msra.mxu0 %v2723
    %3555 = vmatprep.subr.bf16.mxu0 %v2731
    %3556 = vmatpush1.bf16.msra.mxu0 %v2730
    %3557 = vmatprep.subr.bf16.mxu0 %v2738
    %3558 = vmatpush1.bf16.msra.mxu0 %v2737
    %3559 = vmatprep.subr.bf16.mxu0 %v2745
    %3560 = vmatpush1.bf16.msra.mxu0 %v2744
    %3561 = vmatprep.subr.bf16.mxu0 %v2752
    %3562 = vmatpush1.bf16.msra.mxu0 %v2751
    %3563 = vmatprep.subr.bf16.mxu0 %v2759
    %3564 = vmatpush1.bf16.msra.mxu0 %v2758
    %3565 = vmatprep.subr.bf16.mxu0 %v2766
    %3566 = vmatpush1.bf16.msra.mxu0 %v2765
    %3567 = vmatprep.subr.bf16.mxu0 %v2773
    %3568 = vmatpush1.bf16.msra.mxu0 %v2772
    %3569 = vmatprep.subr.bf16.mxu0 %v2780
    %3570 = vmatpush1.bf16.msra.mxu0 %v2779
    %3571 = vmatprep.subr.bf16.mxu0 %v2787
    %3572 = vmatpush1.bf16.msra.mxu0 %v2786
    %3573 = vmatprep.subr.bf16.mxu0 %v2794
    %3574 = vmatpush1.bf16.msra.mxu0 %v2793
    %3575 = vmatprep.subr.bf16.mxu0 %v2801
    %3576 = vmatpush1.bf16.msra.mxu0 %v2800
    %3577 = vmatprep.subr.bf16.mxu0 %v2808
    %3578 = vmatpush1.bf16.msra.mxu0 %v2807
    %3579 = vmatprep.mubr.bf16.mxu0 %v947
    %3580 = vmatmul.mubr.bf16.gmra.mrb[0].mxu0 %v946
    %v3581 = vpop.f32.mrb[0].mxu0
    %v3582 = vadd.f32 %v3541, %v3581
    %v3583 = vpop.f32.mrb[0].mxu0
    %v3584 = vadd.f32 %v3543, %v3583
    %v3585 = vpop.f32.mrb[0].mxu0
    %v3586 = vpop.f32.mrb[0].mxu0
    %3587 = vdwg.mxu0
    %3588 = vmatprep.subr.bf16.mxu0 %v2369
    %3589 = vmatpush1.bf16.msra.mxu0 %v2368
    %3590 = vmatprep.subr.bf16.mxu0 %v2376
    %3591 = vmatpush1.bf16.msra.mxu0 %v2375
    %3592 = vmatprep.subr.bf16.mxu0 %v2383
    %3593 = vmatpush1.bf16.msra.mxu0 %v2382
    %3594 = vmatprep.subr.bf16.mxu0 %v2390
    %3595 = vmatpush1.bf16.msra.mxu0 %v2389
    %3596 = vmatprep.subr.bf16.mxu0 %v2397
    %3597 = vmatpush1.bf16.msra.mxu0 %v2396
    %3598 = vmatprep.subr.bf16.mxu0 %v2404
    %3599 = vmatpush1.bf16.msra.mxu0 %v2403
    %3600 = vmatprep.subr.bf16.mxu0 %v2411
    %3601 = vmatpush1.bf16.msra.mxu0 %v2410
    %3602 = vmatprep.subr.bf16.mxu0 %v2418
    %3603 = vmatpush1.bf16.msra.mxu0 %v2417
    %3604 = vmatprep.subr.bf16.mxu0 %v2425
    %3605 = vmatpush1.bf16.msra.mxu0 %v2424
    %3606 = vmatprep.subr.bf16.mxu0 %v2432
    %3607 = vmatpush1.bf16.msra.mxu0 %v2431
    %3608 = vmatprep.subr.bf16.mxu0 %v2439
    %3609 = vmatpush1.bf16.msra.mxu0 %v2438
    %3610 = vmatprep.subr.bf16.mxu0 %v2446
    %3611 = vmatpush1.bf16.msra.mxu0 %v2445
    %3612 = vmatprep.subr.bf16.mxu0 %v2453
    %3613 = vmatpush1.bf16.msra.mxu0 %v2452
    %3614 = vmatprep.subr.bf16.mxu0 %v2460
    %3615 = vmatpush1.bf16.msra.mxu0 %v2459
    %3616 = vmatprep.subr.bf16.mxu0 %v2467
    %3617 = vmatpush1.bf16.msra.mxu0 %v2466
    %3618 = vmatprep.subr.bf16.mxu0 %v2474
    %3619 = vmatpush1.bf16.msra.mxu0 %v2473
    %3620 = vmatprep.mubr.bf16.mxu0 %v941
    %3621 = vmatmul.mubr.bf16.gmra.mrb[0].mxu0 %v940
    %v3622 = vpop.f32.mrb[0].mxu0
    %v3623 = vadd.f32 %v912, %v3622
    %v3624 = vpop.f32.mrb[0].mxu0
    %v3625 = vadd.f32 %v916, %v3624
    %v3626 = vpop.f32.mrb[0].mxu0
    %v3627 = vpop.f32.mrb[0].mxu0
    %3628 = vdwg.mxu0
    %3629 = vmatprep.subr.bf16.mxu0 %v2481
    %3630 = vmatpush1.bf16.msra.mxu0 %v2480
    %3631 = vmatprep.subr.bf16.mxu0 %v2488
    %3632 = vmatpush1.bf16.msra.mxu0 %v2487
    %3633 = vmatprep.subr.bf16.mxu0 %v2495
    %3634 = vmatpush1.bf16.msra.mxu0 %v2494
    %3635 = vmatprep.subr.bf16.mxu0 %v2502
    %3636 = vmatpush1.bf16.msra.mxu0 %v2501
    %3637 = vmatprep.subr.bf16.mxu0 %v2509
    %3638 = vmatpush1.bf16.msra.mxu0 %v2508
    %3639 = vmatprep.subr.bf16.mxu0 %v2516
    %3640 = vmatpush1.bf16.msra.mxu0 %v2515
    %3641 = vmatprep.subr.bf16.mxu0 %v2523
    %3642 = vmatpush1.bf16.msra.mxu0 %v2522
    %3643 = vmatprep.subr.bf16.mxu0 %v2530
    %3644 = vmatpush1.bf16.msra.mxu0 %v2529
    %3645 = vmatprep.subr.bf16.mxu0 %v2537
    %3646 = vmatpush1.bf16.msra.mxu0 %v2536
    %3647 = vmatprep.subr.bf16.mxu0 %v2544
    %3648 = vmatpush1.bf16.msra.mxu0 %v2543
    %3649 = vmatprep.subr.bf16.mxu0 %v2551
    %3650 = vmatpush1.bf16.msra.mxu0 %v2550
    %3651 = vmatprep.subr.bf16.mxu0 %v2558
    %3652 = vmatpush1.bf16.msra.mxu0 %v2557
    %3653 = vmatprep.subr.bf16.mxu0 %v2565
    %3654 = vmatpush1.bf16.msra.mxu0 %v2564
    %3655 = vmatprep.subr.bf16.mxu0 %v2572
    %3656 = vmatpush1.bf16.msra.mxu0 %v2571
    %3657 = vmatprep.subr.bf16.mxu0 %v2579
    %3658 = vmatpush1.bf16.msra.mxu0 %v2578
    %3659 = vmatprep.subr.bf16.mxu0 %v2586
    %3660 = vmatpush1.bf16.msra.mxu0 %v2585
    %3661 = vmatprep.mubr.bf16.mxu0 %v943
    %3662 = vmatmul.mubr.bf16.gmra.mrb[0].mxu0 %v942
    %v3663 = vpop.f32.mrb[0].mxu0
    %v3664 = vadd.f32 %v3623, %v3663
    %v3665 = vpop.f32.mrb[0].mxu0
    %v3666 = vadd.f32 %v3625, %v3665
    %v3667 = vpop.f32.mrb[0].mxu0
    %v3668 = vpop.f32.mrb[0].mxu0
    %3669 = vdwg.mxu0
    %3670 = vmatprep.subr.bf16.mxu0 %v2593
    %3671 = vmatpush1.bf16.msra.mxu0 %v2592
    %3672 = vmatprep.subr.bf16.mxu0 %v2600
    %3673 = vmatpush1.bf16.msra.mxu0 %v2599
    %3674 = vmatprep.subr.bf16.mxu0 %v2607
    %3675 = vmatpush1.bf16.msra.mxu0 %v2606
    %3676 = vmatprep.subr.bf16.mxu0 %v2614
    %3677 = vmatpush1.bf16.msra.mxu0 %v2613
    %3678 = vmatprep.subr.bf16.mxu0 %v2621
    %3679 = vmatpush1.bf16.msra.mxu0 %v2620
    %3680 = vmatprep.subr.bf16.mxu0 %v2628
    %3681 = vmatpush1.bf16.msra.mxu0 %v2627
    %3682 = vmatprep.subr.bf16.mxu0 %v2635
    %3683 = vmatpush1.bf16.msra.mxu0 %v2634
    %3684 = vmatprep.subr.bf16.mxu0 %v2642
    %3685 = vmatpush1.bf16.msra.mxu0 %v2641
    %3686 = vmatprep.subr.bf16.mxu0 %v2649
    %3687 = vmatpush1.bf16.msra.mxu0 %v2648
    %3688 = vmatprep.subr.bf16.mxu0 %v2656
    %3689 = vmatpush1.bf16.msra.mxu0 %v2655
    %3690 = vmatprep.subr.bf16.mxu0 %v2663
    %3691 = vmatpush1.bf16.msra.mxu0 %v2662
    %3692 = vmatprep.subr.bf16.mxu0 %v2670
    %3693 = vmatpush1.bf16.msra.mxu0 %v2669
    %3694 = vmatprep.subr.bf16.mxu0 %v2677
    %3695 = vmatpush1.bf16.msra.mxu0 %v2676
    %3696 = vmatprep.subr.bf16.mxu0 %v2684
    %3697 = vmatpush1.bf16.msra.mxu0 %v2683
    %3698 = vmatprep.subr.bf16.mxu0 %v2691
    %3699 = vmatpush1.bf16.msra.mxu0 %v2690
    %3700 = vmatprep.subr.bf16.mxu0 %v2698
    %3701 = vmatpush1.bf16.msra.mxu0 %v2697
    %3702 = vmatprep.mubr.bf16.mxu0 %v945
    %3703 = vmatmul.mubr.bf16.gmra.mrb[0].mxu0 %v944
    %v3704 = vpop.f32.mrb[0].mxu0
    %v3705 = vadd.f32 %v3664, %v3704
    %v3706 = vpop.f32.mrb[0].mxu0
    %v3707 = vadd.f32 %v3666, %v3706
    %v3708 = vpop.f32.mrb[0].mxu0
    %v3709 = vpop.f32.mrb[0].mxu0
    %3710 = vdwg.mxu0
    %3711 = vmatprep.subr.bf16.mxu0 %v2705
    %3712 = vmatpush1.bf16.msra.mxu0 %v2704
    %3713 = vmatprep.subr.bf16.mxu0 %v2712
    %3714 = vmatpush1.bf16.msra.mxu0 %v2711
    %3715 = vmatprep.subr.bf16.mxu0 %v2719
    %3716 = vmatpush1.bf16.msra.mxu0 %v2718
    %3717 = vmatprep.subr.bf16.mxu0 %v2726
    %3718 = vmatpush1.bf16.msra.mxu0 %v2725
    %3719 = vmatprep.subr.bf16.mxu0 %v2733
    %3720 = vmatpush1.bf16.msra.mxu0 %v2732
    %3721 = vmatprep.subr.bf16.mxu0 %v2740
    %3722 = vmatpush1.bf16.msra.mxu0 %v2739
    %3723 = vmatprep.subr.bf16.mxu0 %v2747
    %3724 = vmatpush1.bf16.msra.mxu0 %v2746
    %3725 = vmatprep.subr.bf16.mxu0 %v2754
    %3726 = vmatpush1.bf16.msra.mxu0 %v2753
    %3727 = vmatprep.subr.bf16.mxu0 %v2761
    %3728 = vmatpush1.bf16.msra.mxu0 %v2760
    %3729 = vmatprep.subr.bf16.mxu0 %v2768
    %3730 = vmatpush1.bf16.msra.mxu0 %v2767
    %3731 = vmatprep.subr.bf16.mxu0 %v2775
    %3732 = vmatpush1.bf16.msra.mxu0 %v2774
    %3733 = vmatprep.subr.bf16.mxu0 %v2782
    %3734 = vmatpush1.bf16.msra.mxu0 %v2781
    %3735 = vmatprep.subr.bf16.mxu0 %v2789
    %3736 = vmatpush1.bf16.msra.mxu0 %v2788
    %3737 = vmatprep.subr.bf16.mxu0 %v2796
    %3738 = vmatpush1.bf16.msra.mxu0 %v2795
    %3739 = vmatprep.subr.bf16.mxu0 %v2803
    %3740 = vmatpush1.bf16.msra.mxu0 %v2802
    %3741 = vmatprep.subr.bf16.mxu0 %v2810
    %3742 = vmatpush1.bf16.msra.mxu0 %v2809
    %3743 = vmatprep.mubr.bf16.mxu0 %v947
    %3744 = vmatmul.mubr.bf16.gmra.mrb[0].mxu0 %v946
    %v3745 = vpop.f32.mrb[0].mxu0
    %v3746 = vadd.f32 %v3705, %v3745
    %v3747 = vpop.f32.mrb[0].mxu0
    %v3748 = vadd.f32 %v3707, %v3747
    %v3749 = vpop.f32.mrb[0].mxu0
    %v3750 = vpop.f32.mrb[0].mxu0
    %3751 = vdwg.mxu0
    %3752 = vmatprep.subr.bf16.mxu0 0
    %3753 = vmatpush1.bf16.msra.mxu0 %v2370
    %3754 = vmatprep.subr.bf16.mxu0 0
    %3755 = vmatpush1.bf16.msra.mxu0 %v2377
    %3756 = vmatprep.subr.bf16.mxu0 0
    %3757 = vmatpush1.bf16.msra.mxu0 %v2384
    %3758 = vmatprep.subr.bf16.mxu0 0
    %3759 = vmatpush1.bf16.msra.mxu0 %v2391
    %3760 = vmatprep.subr.bf16.mxu0 0
    %3761 = vmatpush1.bf16.msra.mxu0 %v2398
    %3762 = vmatprep.subr.bf16.mxu0 0
    %3763 = vmatpush1.bf16.msra.mxu0 %v2405
    %3764 = vmatprep.subr.bf16.mxu0 0
    %3765 = vmatpush1.bf16.msra.mxu0 %v2412
    %3766 = vmatprep.subr.bf16.mxu0 0
    %3767 = vmatpush1.bf16.msra.mxu0 %v2419
    %3768 = vmatprep.subr.bf16.mxu0 0
    %3769 = vmatpush1.bf16.msra.mxu0 %v2426
    %3770 = vmatprep.subr.bf16.mxu0 0
    %3771 = vmatpush1.bf16.msra.mxu0 %v2433
    %3772 = vmatprep.subr.bf16.mxu0 0
    %3773 = vmatpush1.bf16.msra.mxu0 %v2440
    %3774 = vmatprep.subr.bf16.mxu0 0
    %3775 = vmatpush1.bf16.msra.mxu0 %v2447
    %3776 = vmatprep.subr.bf16.mxu0 0
    %3777 = vmatpush1.bf16.msra.mxu0 %v2454
    %3778 = vmatprep.subr.bf16.mxu0 0
    %3779 = vmatpush1.bf16.msra.mxu0 %v2461
    %3780 = vmatprep.subr.bf16.mxu0 0
    %3781 = vmatpush1.bf16.msra.mxu0 %v2468
    %3782 = vmatprep.subr.bf16.mxu0 0
    %3783 = vmatpush1.bf16.msra.mxu0 %v2475
    %3784 = vmatprep.mubr.bf16.mxu0 %v941
    %3785 = vmatmul.mubr.bf16.gmra.mrb[0].mxu0 %v940
    %v3786 = vpop.f32.mrb[0].mxu0
    %v3787 = vadd.f32 %v920, %v3786
    %v3788 = vpop.f32.mrb[0].mxu0
    %v3789 = vpop.f32.mrb[0].mxu0
    %v3790 = vpop.f32.mrb[0].mxu0
    %3791 = vdwg.mxu0
    %3792 = vmatprep.subr.bf16.mxu0 0
    %3793 = vmatpush1.bf16.msra.mxu0 %v2482
    %3794 = vmatprep.subr.bf16.mxu0 0
    %3795 = vmatpush1.bf16.msra.mxu0 %v2489
    %3796 = vmatprep.subr.bf16.mxu0 0
    %3797 = vmatpush1.bf16.msra.mxu0 %v2496
    %3798 = vmatprep.subr.bf16.mxu0 0
    %3799 = vmatpush1.bf16.msra.mxu0 %v2503
    %3800 = vmatprep.subr.bf16.mxu0 0
    %3801 = vmatpush1.bf16.msra.mxu0 %v2510
    %3802 = vmatprep.subr.bf16.mxu0 0
    %3803 = vmatpush1.bf16.msra.mxu0 %v2517
    %3804 = vmatprep.subr.bf16.mxu0 0
    %3805 = vmatpush1.bf16.msra.mxu0 %v2524
    %3806 = vmatprep.subr.bf16.mxu0 0
    %3807 = vmatpush1.bf16.msra.mxu0 %v2531
    %3808 = vmatprep.subr.bf16.mxu0 0
    %3809 = vmatpush1.bf16.msra.mxu0 %v2538
    %3810 = vmatprep.subr.bf16.mxu0 0
    %3811 = vmatpush1.bf16.msra.mxu0 %v2545
    %3812 = vmatprep.subr.bf16.mxu0 0
    %3813 = vmatpush1.bf16.msra.mxu0 %v2552
    %3814 = vmatprep.subr.bf16.mxu0 0
    %3815 = vmatpush1.bf16.msra.mxu0 %v2559
    %3816 = vmatprep.subr.bf16.mxu0 0
    %3817 = vmatpush1.bf16.msra.mxu0 %v2566
    %3818 = vmatprep.subr.bf16.mxu0 0
    %3819 = vmatpush1.bf16.msra.mxu0 %v2573
    %3820 = vmatprep.subr.bf16.mxu0 0
    %3821 = vmatpush1.bf16.msra.mxu0 %v2580
    %3822 = vmatprep.subr.bf16.mxu0 0
    %3823 = vmatpush1.bf16.msra.mxu0 %v2587
    %3824 = vmatprep.mubr.bf16.mxu0 %v943
    %3825 = vmatmul.mubr.bf16.gmra.mrb[0].mxu0 %v942
    %v3826 = vpop.f32.mrb[0].mxu0
    %v3827 = vadd.f32 %v3787, %v3826
    %v3828 = vpop.f32.mrb[0].mxu0
    %v3829 = vpop.f32.mrb[0].mxu0
    %v3830 = vpop.f32.mrb[0].mxu0
    %3831 = vdwg.mxu0
    %3832 = vmatprep.subr.bf16.mxu0 0
    %3833 = vmatpush1.bf16.msra.mxu0 %v2594
    %3834 = vmatprep.subr.bf16.mxu0 0
    %3835 = vmatpush1.bf16.msra.mxu0 %v2601
    %3836 = vmatprep.subr.bf16.mxu0 0
    %3837 = vmatpush1.bf16.msra.mxu0 %v2608
    %3838 = vmatprep.subr.bf16.mxu0 0
    %3839 = vmatpush1.bf16.msra.mxu0 %v2615
    %3840 = vmatprep.subr.bf16.mxu0 0
    %3841 = vmatpush1.bf16.msra.mxu0 %v2622
    %3842 = vmatprep.subr.bf16.mxu0 0
    %3843 = vmatpush1.bf16.msra.mxu0 %v2629
    %3844 = vmatprep.subr.bf16.mxu0 0
    %3845 = vmatpush1.bf16.msra.mxu0 %v2636
    %3846 = vmatprep.subr.bf16.mxu0 0
    %3847 = vmatpush1.bf16.msra.mxu0 %v2643
    %3848 = vmatprep.subr.bf16.mxu0 0
    %3849 = vmatpush1.bf16.msra.mxu0 %v2650
    %3850 = vmatprep.subr.bf16.mxu0 0
    %3851 = vmatpush1.bf16.msra.mxu0 %v2657
    %3852 = vmatprep.subr.bf16.mxu0 0
    %3853 = vmatpush1.bf16.msra.mxu0 %v2664
    %3854 = vmatprep.subr.bf16.mxu0 0
    %3855 = vmatpush1.bf16.msra.mxu0 %v2671
    %3856 = vmatprep.subr.bf16.mxu0 0
    %3857 = vmatpush1.bf16.msra.mxu0 %v2678
    %3858 = vmatprep.subr.bf16.mxu0 0
    %3859 = vmatpush1.bf16.msra.mxu0 %v2685
    %3860 = vmatprep.subr.bf16.mxu0 0
    %3861 = vmatpush1.bf16.msra.mxu0 %v2692
    %3862 = vmatprep.subr.bf16.mxu0 0
    %3863 = vmatpush1.bf16.msra.mxu0 %v2699
    %3864 = vmatprep.mubr.bf16.mxu0 %v945
    %3865 = vmatmul.mubr.bf16.gmra.mrb[0].mxu0 %v944
    %v3866 = vpop.f32.mrb[0].mxu0
    %v3867 = vadd.f32 %v3827, %v3866
    %v3868 = vpop.f32.mrb[0].mxu0
    %v3869 = vpop.f32.mrb[0].mxu0
    %v3870 = vpop.f32.mrb[0].mxu0
    %3871 = vdwg.mxu0
    %3872 = vmatprep.subr.bf16.mxu0 0
    %3873 = vmatpush1.bf16.msra.mxu0 %v2706
    %3874 = vmatprep.subr.bf16.mxu0 0
    %3875 = vmatpush1.bf16.msra.mxu0 %v2713
    %3876 = vmatprep.subr.bf16.mxu0 0
    %3877 = vmatpush1.bf16.msra.mxu0 %v2720
    %3878 = vmatprep.subr.bf16.mxu0 0
    %3879 = vmatpush1.bf16.msra.mxu0 %v2727
    %3880 = vmatprep.subr.bf16.mxu0 0
    %3881 = vmatpush1.bf16.msra.mxu0 %v2734
    %3882 = vmatprep.subr.bf16.mxu0 0
    %3883 = vmatpush1.bf16.msra.mxu0 %v2741
    %3884 = vmatprep.subr.bf16.mxu0 0
    %3885 = vmatpush1.bf16.msra.mxu0 %v2748
    %3886 = vmatprep.subr.bf16.mxu0 0
    %3887 = vmatpush1.bf16.msra.mxu0 %v2755
    %3888 = vmatprep.subr.bf16.mxu0 0
    %3889 = vmatpush1.bf16.msra.mxu0 %v2762
    %3890 = vmatprep.subr.bf16.mxu0 0
    %3891 = vmatpush1.bf16.msra.mxu0 %v2769
    %3892 = vmatprep.subr.bf16.mxu0 0
    %3893 = vmatpush1.bf16.msra.mxu0 %v2776
    %3894 = vmatprep.subr.bf16.mxu0 0
    %3895 = vmatpush1.bf16.msra.mxu0 %v2783
    %3896 = vmatprep.subr.bf16.mxu0 0
    %3897 = vmatpush1.bf16.msra.mxu0 %v2790
    %3898 = vmatprep.subr.bf16.mxu0 0
    %3899 = vmatpush1.bf16.msra.mxu0 %v2797
    %3900 = vmatprep.subr.bf16.mxu0 0
    %3901 = vmatpush1.bf16.msra.mxu0 %v2804
    %3902 = vmatprep.subr.bf16.mxu0 0
    %3903 = vmatpush1.bf16.msra.mxu0 %v2811
    %3904 = vmatprep.mubr.bf16.mxu0 %v947
    %3905 = vmatmul.mubr.bf16.gmra.mrb[0].mxu0 %v946
    %v3906 = vpop.f32.mrb[0].mxu0
    %v3907 = vadd.f32 %v3867, %v3906
    %v3908 = vpop.f32.mrb[0].mxu0
    %v3909 = vpop.f32.mrb[0].mxu0
    %v3910 = vpop.f32.mrb[0].mxu0
    %3911 = vdwg.mxu0
    %v3912 = vpack.c.bf16 %v3418, %v3418
    %v3913 = vpack.c.bf16 %v3420, %v3420
    %v3914 = vpack.c.bf16 %v3582, %v3582
    %v3915 = vpack.c.bf16 %v3584, %v3584
    %v3916 = vpack.c.bf16 %v3746, %v3746
    %v3917 = vpack.c.bf16 %v3748, %v3748
    %v3918 = vpack.c.bf16 %v3907, %v3907
    %v3919 = vmul.bf16 %v3912, 1056980736
    %v3920 = vmul.bf16 %v3913, 1056980736
    %v3921 = vmul.bf16 %v3914, 1056980736
    %v3922 = vmul.bf16 %v3915, 1056980736
    %v3923 = vmul.bf16 %v3916, 1056980736
    %v3924 = vmul.bf16 %v3917, 1056980736
    %v3925 = vmul.bf16 %v3918, 1056980736
    %v3926 = vtanh.bf16.pop %v3919
    %v3927 = vtanh.bf16.pop %v3920
    %v3928 = vtanh.bf16.pop %v3921
    %v3929 = vtanh.bf16.pop %v3922
    %v3930 = vtanh.bf16.pop %v3923
    %v3931 = vtanh.bf16.pop %v3924
    %v3932 = vtanh.bf16.pop %v3925
    %v3933 = vadd.bf16 %v3926, 1065369472
    %v3934 = vadd.bf16 %v3927, 1065369472
    %v3935 = vadd.bf16 %v3928, 1065369472
    %v3936 = vadd.bf16 %v3929, 1065369472
    %v3937 = vadd.bf16 %v3930, 1065369472
    %v3938 = vadd.bf16 %v3931, 1065369472
    %v3939 = vadd.bf16 %v3932, 1065369472
    %v3940 = vmul.bf16 %v3933, 1056980736
    %v3941 = vmul.bf16 %v3934, 1056980736
    %v3942 = vmul.bf16 %v3935, 1056980736
    %v3943 = vmul.bf16 %v3936, 1056980736
    %v3944 = vmul.bf16 %v3937, 1056980736
    %v3945 = vmul.bf16 %v3938, 1056980736
    %v3946 = vmul.bf16 %v3939, 1056980736
    %v3954 = vunpack.c.l.b16 %v3940
    %v3955 = vunpack.c.l.b16 %v3941
    %v3956 = vunpack.c.l.b16 %v3942
    %v3957 = vunpack.c.l.b16 %v3943
    %v3958 = vunpack.c.l.b16 %v3944
    %v3959 = vunpack.c.l.b16 %v3945
    %v3960 = vunpack.c.l.b16 %v3946
    %v3961 = vpack.c.b16 %v3955, %v3954
    %v3962 = vpack.c.b16 %v3957, %v3956
    %v3963 = vpack.c.b16 %v3959, %v3958
    %v3964 = vpack.c.b16 %v3960, %v3960
    %3969 = vst [vmem:[#allocation3] sm:$0xff] %v3961
    %3970 = vst [vmem:[#allocation3 + $0x8] sm:$0xff] %v3962
    %3971 = vst [vmem:[#allocation3 + $0x10] sm:$0xff] %v3963
    %vm3972 = vcmask 125952
    %3973 = vst.msk [vmem:[#allocation3 + $0x18] sm:$0xf] %vm3972, %v3964
    // Predicated region
    $region22: #{tpu_custom_call.1} parent=1 // pred_check
      _
    $region23: #{tpu_custom_call.1} parent=1 // pred_check_branch
      %3975 = sbr.rel (0) target = $region25
    $region24: #{tpu_custom_call.1} parent=1 // pred_region
      %s3977 = ssub.s32 448, 448
      %3978 = vsyncadd [#allocation4], %s3977
      %s3980 = sshll.u32 [#allocation3], 4
      %s3981 = int_to_ptr.vmem [resolvable:$true] %s3980
      %3983 = dma.vmem_to_hbm [thread:$0]  %s3981, 448, %s5, [#allocation4]
    $region25: #{tpu_custom_call.1} parent=1 // pred_fallthru
      _
    // Predicated region
    $region26: #{tpu_custom_call.1} parent=1 // pred_check
      _
    $region27: #{tpu_custom_call.1} parent=1 // pred_check_branch
      %3985 = sbr.rel (0) target = $region29
    $region28: #{tpu_custom_call.1} parent=1 // pred_region
      %3986 = dma.done [#allocation4], 448
    $region29: #{tpu_custom_call.1} parent=1 // pred_fallthru
      _
    %3987 = vsyncpa [#allocation4], 1

</llo_original>
